<compile_context>
chip_gen: v7x
topology: tpu7x:2x2x1
jax: 0.10.0
libtpu: 0.0.40
codegen_flags: <defaults>
</compile_context>

<pallas_src>
import functools

import jax
import jax.numpy as jnp
from jax import lax
from jax.experimental import pallas as pl
from jax.experimental.pallas import tpu as pltpu


# ----------------------------------------------------------------------------
# helpers (plain-JAX glue)
# ----------------------------------------------------------------------------
def _choose_tm(m, target=512):
    """Row tile: a multiple of 8 that divides m (no padding copy) when
    possible.  Prefer tiles >=128 (amortizes ~0.35us/grid-step overhead)
    that still leave >=2 grid steps (feeds both v7x TensorCores at real
    batch sizes).  Falls back to an 8-aligned tile that requires padding."""
    divs = [d for d in range(8, min(m, target) + 1, 8) if m % d == 0]
    good = [d for d in divs if d >= 128 and m // d >= 2]
    if good:
        return max(good)
    if divs:
        return max(divs)
    return min(target, -(-m // 8) * 8)          # padding path


def pooled_patches(x, ksize=5, pad=2):
    """x: (B, H, W, Cin) f32 -> (4, B*(H//2)*(W//2), ksize*ksize*Cin) bf16.

    Slab q = 2*dy + dx holds the im2col patches of the conv-output pixels at
    pooling offset (dy, dx) inside each 2x2 window; rows are ordered
    (b, h2, w2); columns are ordered (kh, kw, cin), matching a weight tensor
    stored as (kh, kw, cin, cout).reshape(-1, cout)."""
    b, h, w, cin = x.shape
    h2, w2 = h // 2, w // 2
    xp = jnp.pad(x, ((0, 0), (pad, pad), (pad, pad), (0, 0)))
    slabs = []
    for dy in range(2):
        for dx in range(2):
            cols = []
            for kh in range(ksize):
                for kw in range(ksize):
                    cols.append(
                        xp[:, dy + kh:dy + kh + 2 * h2:2,
                           dx + kw:dx + kw + 2 * w2:2, :])   # (B, h2, w2, cin)
            p = jnp.stack(cols, axis=3)                       # (B,h2,w2,25,cin)
            slabs.append(p.reshape(b * h2 * w2, ksize * ksize * cin))
    return jnp.stack(slabs, axis=0).astype(jnp.bfloat16)


# ----------------------------------------------------------------------------
# Pallas kernels
# ----------------------------------------------------------------------------
def _conv_block_kernel(p_ref, w_ref, b_ref, o_ref):
    """Fused conv (as matmul) + 2x2 max-pool + bias + ReLU.

    p_ref: (4, TM, K) bf16 patches (one slab per pooling offset)
    w_ref: (K, Cout)  bf16 weights (resident: constant index_map)
    b_ref: (1, Cout)  f32  bias
    o_ref: (TM, Cout) f32  pooled activation
    """
    w = w_ref[...]
    m = jnp.dot(p_ref[0], w, preferred_element_type=jnp.float32)
    for q in range(1, 4):
        m = jnp.maximum(m, jnp.dot(p_ref[q], w,
                                   preferred_element_type=jnp.float32))
    # bias-add and ReLU commute with the max, so apply them once afterwards.
    o_ref[...] = jnp.maximum(m + b_ref[...], 0.0)


def conv_bias_relu_pool(x, w, bias):
    """x: (B,H,W,Cin) f32, w: (K,Cout) bf16, bias: (Cout,) f32
    -> (B, H//2, W//2, Cout) f32."""
    b, h, wdim, _ = x.shape
    h2, w2 = h // 2, wdim // 2
    k, cout = w.shape

    patches = pooled_patches(x)                      # (4, m2, K) bf16
    m2 = patches.shape[1]
    tm = _choose_tm(m2)
    m2p = -(-m2 // tm) * tm
    if m2p != m2:
        patches = jnp.pad(patches, ((0, 0), (0, m2p - m2), (0, 0)))

    out = pl.pallas_call(
        _conv_block_kernel,
        out_shape=jax.ShapeDtypeStruct((m2p, cout), jnp.float32),
        grid_spec=pltpu.PrefetchScalarGridSpec(
            num_scalar_prefetch=0,
            grid=(m2p // tm,),
            in_specs=[
                pl.BlockSpec((4, tm, k), lambda i: (0, i, 0)),
                pl.BlockSpec((k, cout), lambda i: (0, 0)),   # resident
                pl.BlockSpec((1, cout), lambda i: (0, 0)),   # resident
            ],
            out_specs=pl.BlockSpec((tm, cout), lambda i: (i, 0)),
        ),
        compiler_params=pltpu.CompilerParams(
            dimension_semantics=("parallel",)),
    )(patches, w, bias.reshape(1, cout))
    return out[:m2].reshape(b, h2, w2, cout)


def _head_kernel(x_ref, w1_ref, b1_ref, w2_ref, b2_ref, o_ref):
    """Fused Linear(3136,128pad) -> Linear(128pad,128pad), no activation."""
    h = jnp.dot(x_ref[...], w1_ref[...],
                preferred_element_type=jnp.float32) + b1_ref[...]
    o = jnp.dot(h.astype(w2_ref.dtype), w2_ref[...],
                preferred_element_type=jnp.float32) + b2_ref[...]
    o_ref[...] = o


def mlp_head(flat, w1, b1, w2, b2):
    """flat: (B, F) f32 -> (B, 10) f32 (weights are zero-padded to 128 cols
    for lane-dense MXU / stores; the result is sliced back to 10)."""
    b, f = flat.shape
    n = w1.shape[1]                                   # 128 (padded)
    out = pl.pallas_call(
        _head_kernel,
        out_shape=jax.ShapeDtypeStruct((b, n), jnp.float32),
        grid=(1,),
        in_specs=[
            pl.BlockSpec((b, f), lambda i: (0, 0)),
            pl.BlockSpec((f, n), lambda i: (0, 0)),
            pl.BlockSpec((1, n), lambda i: (0, 0)),
            pl.BlockSpec((n, n), lambda i: (0, 0)),
            pl.BlockSpec((1, n), lambda i: (0, 0)),
        ],
        out_specs=pl.BlockSpec((b, n), lambda i: (0, 0)),
    )(flat.astype(jnp.bfloat16), w1, b1, w2, b2)
    return out[:, :10]


# ----------------------------------------------------------------------------
# parameter init (deterministic, PyTorch-default-style uniform, PyTorch layout)
# ----------------------------------------------------------------------------
def init_params(key):
    def uniform(k, shape, fan_in):
        bound = 1.0 / jnp.sqrt(float(fan_in))
        return jax.random.uniform(k, shape, jnp.float32, -bound, bound)

    ks = jax.random.split(key, 8)
    return {
        # conv weights stored as (kh, kw, cin, cout)
        "conv1_w": uniform(ks[0], (5, 5, 1, 16), 1 * 5 * 5),
        "conv1_b": uniform(ks[1], (16,), 1 * 5 * 5),
        "conv2_w": uniform(ks[2], (5, 5, 16, 64), 16 * 5 * 5),
        "conv2_b": uniform(ks[3], (64,), 16 * 5 * 5),
        # linear weights stored as (in, out); fc1 rows in PyTorch NCHW-flatten
        # (c, h, w) order -- that is what the reference uses.
        "fc1_w": uniform(ks[4], (64 * 7 * 7, 10), 64 * 7 * 7),
        "fc1_b": uniform(ks[5], (10,), 64 * 7 * 7),
        "fc2_w": uniform(ks[6], (10, 10), 10),
        "fc2_b": uniform(ks[7], (10,), 10),
    }


def prepare_params(params):
    """One-time transformation of PyTorch-layout params into kernel layout:
    bf16 matmul operands, flattened conv weights, fc1 rows permuted from
    (c,h,w) to NHWC (h,w,c) flatten order, fc columns zero-padded to 128."""
    bf = jnp.bfloat16
    npad = 128

    fc1_w = params["fc1_w"].reshape(64, 7, 7, 10)
    fc1_w = jnp.transpose(fc1_w, (1, 2, 0, 3)).reshape(7 * 7 * 64, 10)
    fc1_w = jnp.pad(fc1_w, ((0, 0), (0, npad - 10)))
    fc2_w = jnp.pad(params["fc2_w"], ((0, npad - 10), (0, npad - 10)))

    return {
        "conv1_w": params["conv1_w"].reshape(-1, 16).astype(bf),
        "conv1_b": params["conv1_b"],
        "conv2_w": params["conv2_w"].reshape(-1, 64).astype(bf),
        "conv2_b": params["conv2_b"],
        "fc1_w": fc1_w.astype(bf),
        "fc1_b": jnp.pad(params["fc1_b"], (0, npad - 10)).reshape(1, npad),
        "fc2_w": fc2_w.astype(bf),
        "fc2_b": jnp.pad(params["fc2_b"], (0, npad - 10)).reshape(1, npad),
    }


# ----------------------------------------------------------------------------
# forward pass (matches CNN.forward, inference mode)
# ----------------------------------------------------------------------------
def cnn_forward(x_nchw, kp):
    x = jnp.transpose(x_nchw, (0, 2, 3, 1)).astype(jnp.float32)   # NHWC
    b = x.shape[0]

    # conv1 block: Conv2d(1,16,5,1,2)+ReLU+MaxPool2d(2) (+Dropout = id), fused
    y = conv_bias_relu_pool(x, kp["conv1_w"], kp["conv1_b"])      # (B,14,14,16)
    # conv2 block: Conv2d(16,64,5,1,2)+ReLU+MaxPool2d(2) (+Dropout = id), fused
    y = conv_bias_relu_pool(y, kp["conv2_w"], kp["conv2_b"])      # (B,7,7,64)

    # NHWC flatten (no transpose: fc1 rows were permuted once at prep time)
    flat = y.reshape(b, -1)                                       # (B, 3136)
    return mlp_head(flat, kp["fc1_w"], kp["fc1_b"], kp["fc2_w"], kp["fc2_b"])


# ----------------------------------------------------------------------------
# pure-JAX reference (uses the original PyTorch-layout params)
# ----------------------------------------------------------------------------
def cnn_reference(x_nchw, params):
    x = jnp.transpose(x_nchw, (0, 2, 3, 1)).astype(jnp.float32)

    def conv_relu_pool(x, w, bias):
        y = lax.conv_general_dilated(
            x, w, window_strides=(1, 1), padding=[(2, 2), (2, 2)],
            dimension_numbers=("NHWC", "HWIO", "NHWC"),
            precision=lax.Precision.HIGHEST) + bias
        y = jnp.maximum(y, 0.0)
        return lax.reduce_window(y, -jnp.inf, lax.max,
                                 (1, 2, 2, 1), (1, 2, 2, 1), "VALID")

    y = conv_relu_pool(x, params["conv1_w"], params["conv1_b"])
    y = conv_relu_pool(y, params["conv2_w"], params["conv2_b"])
    # PyTorch x.view(B,-1) on NCHW -> (c,h,w) flatten order
    flat = jnp.transpose(y, (0, 3, 1, 2)).reshape(x.shape[0], -1)
    h = jnp.dot(flat, params["fc1_w"],
                precision=lax.Precision.HIGHEST) + params["fc1_b"]
    return jnp.dot(h, params["fc2_w"],
                   precision=lax.Precision.HIGHEST) + params["fc2_b"]


if __name__ == "__main__":
    key = jax.random.PRNGKey(0)
    k_x, k_p = jax.random.split(key)
    # 28x28 single-channel input is required by the 64*7*7 flatten in the head.
    x = jax.random.normal(k_x, (2, 1, 28, 28), dtype=jnp.float32)
    params = init_params(k_p)
    kparams = prepare_params(params)

    fwd = jax.jit(cnn_forward)
    out = jax.block_until_ready(fwd(x, kparams))
    assert out.shape == (2, 10), out.shape

    ref = jax.block_until_ready(cnn_reference(x, params))
    # tolerance covers bf16 matmul operands (f32 accumulation) vs f32 reference
    err = jnp.max(jnp.abs(out - ref))
    assert jnp.allclose(out, ref, atol=3e-2, rtol=3e-2), f"max abs diff {err}"

    print("KERNEL_OK")
</pallas_src>

<mosaic_0001>
module attributes {stable_mosaic.version = 11 : i64} {
  func.func @_conv_block_kernel(%arg0: i32, %arg1: memref<4x392x25xbf16, #tpu.memory_space<vmem>>, %arg2: memref<25x16xbf16, #tpu.memory_space<vmem>>, %arg3: memref<1x16xf32, #tpu.memory_space<vmem>>, %arg4: memref<392x16xf32, #tpu.memory_space<vmem>>) attributes {dimension_semantics = [#tpu.dimension_semantics<parallel>], iteration_bounds = array<i64: 1>, scalar_prefetch = 0 : i64, scratch_operands = 0 : i64, tpu.core_type = #tpu.core_type<tc>, window_params = [{transform_indices = @transform_0, window_bounds = array<i64: 4, 392, 25>}, {pipeline_mode = #tpu.pipeline_mode<synchronous>, transform_indices = @transform_1, window_bounds = array<i64: 25, 16>}, {pipeline_mode = #tpu.pipeline_mode<synchronous>, transform_indices = @transform_2, window_bounds = array<i64: 1, 16>}, {transform_indices = @transform_3, window_bounds = array<i64: 392, 16>}]} {
    %c0 = arith.constant 0 : index
    %c0_0 = arith.constant 0 : index
    %0 = vector.load %arg2[%c0, %c0_0] : memref<25x16xbf16, #tpu.memory_space<vmem>>, vector<25x16xbf16>
    %c0_1 = arith.constant 0 : index
    %c0_2 = arith.constant 0 : index
    %c0_3 = arith.constant 0 : index
    %1 = vector.load %arg1[%c0_1, %c0_2, %c0_3] : memref<4x392x25xbf16, #tpu.memory_space<vmem>>, vector<1x392x25xbf16>
    %2 = vector.shape_cast %1 : vector<1x392x25xbf16> to vector<392x25xbf16>
    %cst = arith.constant dense<0.000000e+00> : vector<392x16xf32>
    %3 = tpu.matmul %2, %0, %cst {dimension_numbers = #tpu.dot_dimension_numbers<[1], [0], [0], [1], [0, 0, 1, 1], [], []>} : vector<392x25xbf16>, vector<25x16xbf16>, vector<392x16xf32> -> vector<392x16xf32>
    %c1 = arith.constant 1 : index
    %c0_4 = arith.constant 0 : index
    %c0_5 = arith.constant 0 : index
    %4 = vector.load %arg1[%c1, %c0_4, %c0_5] : memref<4x392x25xbf16, #tpu.memory_space<vmem>>, vector<1x392x25xbf16>
    %5 = vector.shape_cast %4 : vector<1x392x25xbf16> to vector<392x25xbf16>
    %cst_6 = arith.constant dense<0.000000e+00> : vector<392x16xf32>
    %6 = tpu.matmul %5, %0, %cst_6 {dimension_numbers = #tpu.dot_dimension_numbers<[1], [0], [0], [1], [0, 0, 1, 1], [], []>} : vector<392x25xbf16>, vector<25x16xbf16>, vector<392x16xf32> -> vector<392x16xf32>
    %7 = arith.maximumf %3, %6 : vector<392x16xf32>
    %c2 = arith.constant 2 : index
    %c0_7 = arith.constant 0 : index
    %c0_8 = arith.constant 0 : index
    %8 = vector.load %arg1[%c2, %c0_7, %c0_8] : memref<4x392x25xbf16, #tpu.memory_space<vmem>>, vector<1x392x25xbf16>
    %9 = vector.shape_cast %8 : vector<1x392x25xbf16> to vector<392x25xbf16>
    %cst_9 = arith.constant dense<0.000000e+00> : vector<392x16xf32>
    %10 = tpu.matmul %9, %0, %cst_9 {dimension_numbers = #tpu.dot_dimension_numbers<[1], [0], [0], [1], [0, 0, 1, 1], [], []>} : vector<392x25xbf16>, vector<25x16xbf16>, vector<392x16xf32> -> vector<392x16xf32>
    %11 = arith.maximumf %7, %10 : vector<392x16xf32>
    %c3 = arith.constant 3 : index
    %c0_10 = arith.constant 0 : index
    %c0_11 = arith.constant 0 : index
    %12 = vector.load %arg1[%c3, %c0_10, %c0_11] : memref<4x392x25xbf16, #tpu.memory_space<vmem>>, vector<1x392x25xbf16>
    %13 = vector.shape_cast %12 : vector<1x392x25xbf16> to vector<392x25xbf16>
    %cst_12 = arith.constant dense<0.000000e+00> : vector<392x16xf32>
    %14 = tpu.matmul %13, %0, %cst_12 {dimension_numbers = #tpu.dot_dimension_numbers<[1], [0], [0], [1], [0, 0, 1, 1], [], []>} : vector<392x25xbf16>, vector<25x16xbf16>, vector<392x16xf32> -> vector<392x16xf32>
    %15 = arith.maximumf %11, %14 : vector<392x16xf32>
    %c0_13 = arith.constant 0 : index
    %c0_14 = arith.constant 0 : index
    %16 = vector.load %arg3[%c0_13, %c0_14] : memref<1x16xf32, #tpu.memory_space<vmem>>, vector<1x16xf32>
    %17 = vector.broadcast %16 : vector<1x16xf32> to vector<392x16xf32>
    %18 = arith.addf %15, %17 : vector<392x16xf32>
    %cst_15 = arith.constant 0.000000e+00 : f32
    %19 = vector.broadcast %cst_15 : f32 to vector<392x16xf32>
    %20 = arith.maximumf %18, %19 : vector<392x16xf32>
    %c0_16 = arith.constant 0 : index
    %c0_17 = arith.constant 0 : index
    %21 = vector.load %arg4[%c0_16, %c0_17] : memref<392x16xf32, #tpu.memory_space<vmem>>, vector<392x16xf32>
    tpu.vector_store %arg4[%c0_16, %c0_17], %20 {strides = array<i32>} : memref<392x16xf32, #tpu.memory_space<vmem>>, vector<392x16xf32>,
    return
  }
  func.func @transform_0(%arg0: i32) -> (i32, i32, i32) {
    %c0_i32 = arith.constant 0 : i32
    %c0_i32_0 = arith.constant 0 : i32
    %c0_i32_1 = arith.constant 0 : i32
    return %c0_i32, %arg0, %c0_i32_0 : i32, i32, i32
  }
  func.func @transform_1(%arg0: i32) -> (i32, i32) {
    %c0_i32 = arith.constant 0 : i32
    %c0_i32_0 = arith.constant 0 : i32
    %c0_i32_1 = arith.constant 0 : i32
    return %c0_i32, %c0_i32_0 : i32, i32
  }
  func.func @transform_2(%arg0: i32) -> (i32, i32) {
    %c0_i32 = arith.constant 0 : i32
    %c0_i32_0 = arith.constant 0 : i32
    %c0_i32_1 = arith.constant 0 : i32
    return %c0_i32, %c0_i32_0 : i32, i32
  }
  func.func @transform_3(%arg0: i32) -> (i32, i32) {
    %c0_i32 = arith.constant 0 : i32
    %c0_i32_0 = arith.constant 0 : i32
    return %arg0, %c0_i32 : i32, i32
  }
}

module attributes {stable_mosaic.version = 11 : i64} {
  func.func @_conv_block_kernel(%arg0: i32, %arg1: memref<4x104x400xbf16, #tpu.memory_space<vmem>>, %arg2: memref<400x64xbf16, #tpu.memory_space<vmem>>, %arg3: memref<1x64xf32, #tpu.memory_space<vmem>>, %arg4: memref<104x64xf32, #tpu.memory_space<vmem>>) attributes {dimension_semantics = [#tpu.dimension_semantics<parallel>], iteration_bounds = array<i64: 1>, scalar_prefetch = 0 : i64, scratch_operands = 0 : i64, tpu.core_type = #tpu.core_type<tc>, window_params = [{transform_indices = @transform_0, window_bounds = array<i64: 4, 104, 400>}, {pipeline_mode = #tpu.pipeline_mode<synchronous>, transform_indices = @transform_1, window_bounds = array<i64: 400, 64>}, {pipeline_mode = #tpu.pipeline_mode<synchronous>, transform_indices = @transform_2, window_bounds = array<i64: 1, 64>}, {transform_indices = @transform_3, window_bounds = array<i64: 104, 64>}]} {
    %c0 = arith.constant 0 : index
    %c0_0 = arith.constant 0 : index
    %0 = vector.load %arg2[%c0, %c0_0] : memref<400x64xbf16, #tpu.memory_space<vmem>>, vector<400x64xbf16>
    %c0_1 = arith.constant 0 : index
    %c0_2 = arith.constant 0 : index
    %c0_3 = arith.constant 0 : index
    %1 = vector.load %arg1[%c0_1, %c0_2, %c0_3] : memref<4x104x400xbf16, #tpu.memory_space<vmem>>, vector<1x104x400xbf16>
    %2 = vector.shape_cast %1 : vector<1x104x400xbf16> to vector<104x400xbf16>
    %cst = arith.constant dense<0.000000e+00> : vector<104x64xf32>
    %3 = tpu.matmul %2, %0, %cst {dimension_numbers = #tpu.dot_dimension_numbers<[1], [0], [0], [1], [0, 0, 1, 1], [], []>} : vector<104x400xbf16>, vector<400x64xbf16>, vector<104x64xf32> -> vector<104x64xf32>
    %c1 = arith.constant 1 : index
    %c0_4 = arith.constant 0 : index
    %c0_5 = arith.constant 0 : index
    %4 = vector.load %arg1[%c1, %c0_4, %c0_5] : memref<4x104x400xbf16, #tpu.memory_space<vmem>>, vector<1x104x400xbf16>
    %5 = vector.shape_cast %4 : vector<1x104x400xbf16> to vector<104x400xbf16>
    %cst_6 = arith.constant dense<0.000000e+00> : vector<104x64xf32>
    %6 = tpu.matmul %5, %0, %cst_6 {dimension_numbers = #tpu.dot_dimension_numbers<[1], [0], [0], [1], [0, 0, 1, 1], [], []>} : vector<104x400xbf16>, vector<400x64xbf16>, vector<104x64xf32> -> vector<104x64xf32>
    %7 = arith.maximumf %3, %6 : vector<104x64xf32>
    %c2 = arith.constant 2 : index
    %c0_7 = arith.constant 0 : index
    %c0_8 = arith.constant 0 : index
    %8 = vector.load %arg1[%c2, %c0_7, %c0_8] : memref<4x104x400xbf16, #tpu.memory_space<vmem>>, vector<1x104x400xbf16>
    %9 = vector.shape_cast %8 : vector<1x104x400xbf16> to vector<104x400xbf16>
    %cst_9 = arith.constant dense<0.000000e+00> : vector<104x64xf32>
    %10 = tpu.matmul %9, %0, %cst_9 {dimension_numbers = #tpu.dot_dimension_numbers<[1], [0], [0], [1], [0, 0, 1, 1], [], []>} : vector<104x400xbf16>, vector<400x64xbf16>, vector<104x64xf32> -> vector<104x64xf32>
    %11 = arith.maximumf %7, %10 : vector<104x64xf32>
    %c3 = arith.constant 3 : index
    %c0_10 = arith.constant 0 : index
    %c0_11 = arith.constant 0 : index
    %12 = vector.load %arg1[%c3, %c0_10, %c0_11] : memref<4x104x400xbf16, #tpu.memory_space<vmem>>, vector<1x104x400xbf16>
    %13 = vector.shape_cast %12 : vector<1x104x400xbf16> to vector<104x400xbf16>
    %cst_12 = arith.constant dense<0.000000e+00> : vector<104x64xf32>
    %14 = tpu.matmul %13, %0, %cst_12 {dimension_numbers = #tpu.dot_dimension_numbers<[1], [0], [0], [1], [0, 0, 1, 1], [], []>} : vector<104x400xbf16>, vector<400x64xbf16>, vector<104x64xf32> -> vector<104x64xf32>
    %15 = arith.maximumf %11, %14 : vector<104x64xf32>
    %c0_13 = arith.constant 0 : index
    %c0_14 = arith.constant 0 : index
    %16 = vector.load %arg3[%c0_13, %c0_14] : memref<1x64xf32, #tpu.memory_space<vmem>>, vector<1x64xf32>
    %17 = vector.broadcast %16 : vector<1x64xf32> to vector<104x64xf32>
    %18 = arith.addf %15, %17 : vector<104x64xf32>
    %cst_15 = arith.constant 0.000000e+00 : f32
    %19 = vector.broadcast %cst_15 : f32 to vector<104x64xf32>
    %20 = arith.maximumf %18, %19 : vector<104x64xf32>
    %c0_16 = arith.constant 0 : index
    %c0_17 = arith.constant 0 : index
    %21 = vector.load %arg4[%c0_16, %c0_17] : memref<104x64xf32, #tpu.memory_space<vmem>>, vector<104x64xf32>
    tpu.vector_store %arg4[%c0_16, %c0_17], %20 {strides = array<i32>} : memref<104x64xf32, #tpu.memory_space<vmem>>, vector<104x64xf32>,
    return
  }
  func.func @transform_0(%arg0: i32) -> (i32, i32, i32) {
    %c0_i32 = arith.constant 0 : i32
    %c0_i32_0 = arith.constant 0 : i32
    %c0_i32_1 = arith.constant 0 : i32
    return %c0_i32, %arg0, %c0_i32_0 : i32, i32, i32
  }
  func.func @transform_1(%arg0: i32) -> (i32, i32) {
    %c0_i32 = arith.constant 0 : i32
    %c0_i32_0 = arith.constant 0 : i32
    %c0_i32_1 = arith.constant 0 : i32
    return %c0_i32, %c0_i32_0 : i32, i32
  }
  func.func @transform_2(%arg0: i32) -> (i32, i32) {
    %c0_i32 = arith.constant 0 : i32
    %c0_i32_0 = arith.constant 0 : i32
    %c0_i32_1 = arith.constant 0 : i32
    return %c0_i32, %c0_i32_0 : i32, i32
  }
  func.func @transform_3(%arg0: i32) -> (i32, i32) {
    %c0_i32 = arith.constant 0 : i32
    %c0_i32_0 = arith.constant 0 : i32
    return %arg0, %c0_i32 : i32, i32
  }
}

module attributes {stable_mosaic.version = 11 : i64} {
  func.func @_head_kernel(%arg0: i32, %arg1: memref<2x3136xbf16, #tpu.memory_space<vmem>>, %arg2: memref<3136x128xbf16, #tpu.memory_space<vmem>>, %arg3: memref<1x128xf32, #tpu.memory_space<vmem>>, %arg4: memref<128x128xbf16, #tpu.memory_space<vmem>>, %arg5: memref<1x128xf32, #tpu.memory_space<vmem>>, %arg6: memref<2x128xf32, #tpu.memory_space<vmem>>) attributes {dimension_semantics = [#tpu.dimension_semantics<arbitrary>], iteration_bounds = array<i64: 1>, scalar_prefetch = 0 : i64, scratch_operands = 0 : i64, tpu.core_type = #tpu.core_type<tc>, window_params = [{pipeline_mode = #tpu.pipeline_mode<synchronous>, transform_indices = @transform_0, window_bounds = array<i64: 2, 3136>}, {pipeline_mode = #tpu.pipeline_mode<synchronous>, transform_indices = @transform_1, window_bounds = array<i64: 3136, 128>}, {pipeline_mode = #tpu.pipeline_mode<synchronous>, transform_indices = @transform_2, window_bounds = array<i64: 1, 128>}, {pipeline_mode = #tpu.pipeline_mode<synchronous>, transform_indices = @transform_3, window_bounds = array<i64: 128, 128>}, {pipeline_mode = #tpu.pipeline_mode<synchronous>, transform_indices = @transform_4, window_bounds = array<i64: 1, 128>}, {pipeline_mode = #tpu.pipeline_mode<synchronous>, transform_indices = @transform_5, window_bounds = array<i64: 2, 128>}]} {
    %c0 = arith.constant 0 : index
    %c0_0 = arith.constant 0 : index
    %0 = vector.load %arg1[%c0, %c0_0] : memref<2x3136xbf16, #tpu.memory_space<vmem>>, vector<2x3136xbf16>
    %c0_1 = arith.constant 0 : index
    %c0_2 = arith.constant 0 : index
    %1 = vector.load %arg2[%c0_1, %c0_2] : memref<3136x128xbf16, #tpu.memory_space<vmem>>, vector<3136x128xbf16>
    %cst = arith.constant dense<0.000000e+00> : vector<2x128xf32>
    %2 = tpu.matmul %0, %1, %cst {dimension_numbers = #tpu.dot_dimension_numbers<[1], [0], [0], [1], [0, 0, 1, 1], [], []>} : vector<2x3136xbf16>, vector<3136x128xbf16>, vector<2x128xf32> -> vector<2x128xf32>
    %c0_3 = arith.constant 0 : index
    %c0_4 = arith.constant 0 : index
    %3 = vector.load %arg3[%c0_3, %c0_4] : memref<1x128xf32, #tpu.memory_space<vmem>>, vector<1x128xf32>
    %4 = vector.broadcast %3 : vector<1x128xf32> to vector<2x128xf32>
    %5 = arith.addf %2, %4 : vector<2x128xf32>
    %6 = arith.truncf %5 : vector<2x128xf32> to vector<2x128xbf16>
    %c0_5 = arith.constant 0 : index
    %c0_6 = arith.constant 0 : index
    %7 = vector.load %arg4[%c0_5, %c0_6] : memref<128x128xbf16, #tpu.memory_space<vmem>>, vector<128x128xbf16>
    %cst_7 = arith.constant dense<0.000000e+00> : vector<2x128xf32>
    %8 = tpu.matmul %6, %7, %cst_7 {dimension_numbers = #tpu.dot_dimension_numbers<[1], [0], [0], [1], [0, 0, 1, 1], [], []>} : vector<2x128xbf16>, vector<128x128xbf16>, vector<2x128xf32> -> vector<2x128xf32>
    %c0_8 = arith.constant 0 : index
    %c0_9 = arith.constant 0 : index
    %9 = vector.load %arg5[%c0_8, %c0_9] : memref<1x128xf32, #tpu.memory_space<vmem>>, vector<1x128xf32>
    %10 = vector.broadcast %9 : vector<1x128xf32> to vector<2x128xf32>
    %11 = arith.addf %8, %10 : vector<2x128xf32>
    %c0_10 = arith.constant 0 : index
    %c0_11 = arith.constant 0 : index
    %12 = vector.load %arg6[%c0_10, %c0_11] : memref<2x128xf32, #tpu.memory_space<vmem>>, vector<2x128xf32>
    tpu.vector_store %arg6[%c0_10, %c0_11], %11 {strides = array<i32>} : memref<2x128xf32, #tpu.memory_space<vmem>>, vector<2x128xf32>,
    return
  }
  func.func @transform_0(%arg0: i32) -> (i32, i32) {
    %c0_i32 = arith.constant 0 : i32
    %c0_i32_0 = arith.constant 0 : i32
    %c0_i32_1 = arith.constant 0 : i32
    return %c0_i32, %c0_i32_0 : i32, i32
  }
  func.func @transform_1(%arg0: i32) -> (i32, i32) {
    %c0_i32 = arith.constant 0 : i32
    %c0_i32_0 = arith.constant 0 : i32
    %c0_i32_1 = arith.constant 0 : i32
    return %c0_i32, %c0_i32_0 : i32, i32
  }
  func.func @transform_2(%arg0: i32) -> (i32, i32) {
    %c0_i32 = arith.constant 0 : i32
    %c0_i32_0 = arith.constant 0 : i32
    %c0_i32_1 = arith.constant 0 : i32
    return %c0_i32, %c0_i32_0 : i32, i32
  }
  func.func @transform_3(%arg0: i32) -> (i32, i32) {
    %c0_i32 = arith.constant 0 : i32
    %c0_i32_0 = arith.constant 0 : i32
    %c0_i32_1 = arith.constant 0 : i32
    return %c0_i32, %c0_i32_0 : i32, i32
  }
  func.func @transform_4(%arg0: i32) -> (i32, i32) {
    %c0_i32 = arith.constant 0 : i32
    %c0_i32_0 = arith.constant 0 : i32
    %c0_i32_1 = arith.constant 0 : i32
    return %c0_i32, %c0_i32_0 : i32, i32
  }
  func.func @transform_5(%arg0: i32) -> (i32, i32) {
    %c0_i32 = arith.constant 0 : i32
    %c0_i32_0 = arith.constant 0 : i32
    %c0_i32_1 = arith.constant 0 : i32
    return %c0_i32, %c0_i32_0 : i32, i32
  }
}

</mosaic_0001>

<llo_original>
// kernel: cnn_forward.3
$region0: #{cnn_forward.3}
  #allocation0 [shape = 'u32[]', space=smem, size = 0x4, offset = 0x4, fixed_abs, tag = 'smem constant byte address 0x4 - core index']
  #allocation1 [shape = 'u32[144,128]{1,0:T(1,128)}', space=vmem, size = 0x12000, scoped, tag = 'internal scratch']
  %s0 = inlined_call_operand.vmem [shape: bf16[4,392,25], index: 0, kind: input, shape index: {}]
  %s1 = inlined_call_operand.vmem [shape: bf16[25,16], index: 1, kind: input, shape index: {}]
  %s2 = inlined_call_operand.vmem [shape: f32[1,16], index: 2, kind: input, shape index: {}]
  %s3 = inlined_call_operand.vmem [shape: f32[392,16], index: 3, kind: output, shape index: {}]
  %s4 = sld [smem:[#allocation0]]
  $region22: #{cnn_forward.3} parent=0
    _
  %s6 = ssub.s32 1, %s4
  %s7 = scalar_select 0, %s6, %s4
  // Predicated region
  $region2: #{cnn_forward.3} parent=0 // pred_check
    _
  $region3: #{cnn_forward.3} parent=0 // pred_check_branch
    %9 = sbr.rel (0) target = $region5
  $region4: #{cnn_forward.3} parent=0 // pred_region
    _
  $region5: #{cnn_forward.3} parent=0 // pred_fallthru
    _
  // Predicated region
  $region6: #{cnn_forward.3} parent=0 // pred_check
    _
  $region7: #{cnn_forward.3} parent=0 // pred_check_branch
    %11 = sbr.rel (0) target = $region9
  $region8: #{cnn_forward.3} parent=0 // pred_region
    _
  $region9: #{cnn_forward.3} parent=0 // pred_fallthru
    _
  // Predicated region
  $region10: #{cnn_forward.3} parent=0 // pred_check
    _
  $region11: #{cnn_forward.3} parent=0 // pred_check_branch
    %13 = sbr.rel (0) target = $region13
  $region12: #{cnn_forward.3} parent=0 // pred_region
    _
  $region13: #{cnn_forward.3} parent=0 // pred_fallthru
    _
  %v15 = vld [vmem:[%s1] sm:$0xf]
  %v16 = vld [vmem:[%s1 + $0x4] sm:$0xf]
  %v17 = vld [vmem:[%s1 + $0x8] sm:$0xf]
  %v18 = vld [vmem:[%s1 + $0xc] sm:$0x1]
  %v19 = vld [vmem:[%s0] sm:$0xf]
  %v20 = vld [vmem:[%s0 + $0x4] sm:$0xf]
  %v21 = vld [vmem:[%s0 + $0x8] sm:$0xf]
  %v22 = vld [vmem:[%s0 + $0xc] sm:$0xf]
  %v23 = vld [vmem:[%s0 + $0x10] sm:$0xf]
  %v24 = vld [vmem:[%s0 + $0x14] sm:$0xf]
  %v25 = vld [vmem:[%s0 + $0x18] sm:$0xf]
  %v26 = vld [vmem:[%s0 + $0x1c] sm:$0xf]
  %v27 = vld [vmem:[%s0 + $0x20] sm:$0xf]
  %v28 = vld [vmem:[%s0 + $0x24] sm:$0xf]
  %v29 = vld [vmem:[%s0 + $0x28] sm:$0xf]
  %v30 = vld [vmem:[%s0 + $0x2c] sm:$0xf]
  %v31 = vld [vmem:[%s0 + $0x30] sm:$0xf]
  %v32 = vld [vmem:[%s0 + $0x34] sm:$0xf]
  %v33 = vld [vmem:[%s0 + $0x38] sm:$0xf]
  %v34 = vld [vmem:[%s0 + $0x3c] sm:$0xf]
  %v35 = vld [vmem:[%s0 + $0x40] sm:$0xf]
  %v36 = vld [vmem:[%s0 + $0x44] sm:$0xf]
  %v37 = vld [vmem:[%s0 + $0x48] sm:$0xf]
  %v38 = vld [vmem:[%s0 + $0x4c] sm:$0xf]
  %v39 = vld [vmem:[%s0 + $0x50] sm:$0xf]
  %v40 = vld [vmem:[%s0 + $0x54] sm:$0xf]
  %v41 = vld [vmem:[%s0 + $0x58] sm:$0xf]
  %v42 = vld [vmem:[%s0 + $0x5c] sm:$0xf]
  %v43 = vld [vmem:[%s0 + $0x60] sm:$0xf]
  %v44 = vld [vmem:[%s0 + $0x64] sm:$0xf]
  %v45 = vld [vmem:[%s0 + $0x68] sm:$0xf]
  %v46 = vld [vmem:[%s0 + $0x6c] sm:$0xf]
  %v47 = vld [vmem:[%s0 + $0x70] sm:$0xf]
  %v48 = vld [vmem:[%s0 + $0x74] sm:$0xf]
  %v49 = vld [vmem:[%s0 + $0x78] sm:$0xf]
  %v50 = vld [vmem:[%s0 + $0x7c] sm:$0xf]
  %v51 = vld [vmem:[%s0 + $0x80] sm:$0xf]
  %v52 = vld [vmem:[%s0 + $0x84] sm:$0xf]
  %v53 = vld [vmem:[%s0 + $0x88] sm:$0xf]
  %v54 = vld [vmem:[%s0 + $0x8c] sm:$0xf]
  %v55 = vld [vmem:[%s0 + $0x90] sm:$0xf]
  %v56 = vld [vmem:[%s0 + $0x94] sm:$0xf]
  %v57 = vld [vmem:[%s0 + $0x98] sm:$0xf]
  %v58 = vld [vmem:[%s0 + $0x9c] sm:$0xf]
  %v59 = vld [vmem:[%s0 + $0xa0] sm:$0xf]
  %v60 = vld [vmem:[%s0 + $0xa4] sm:$0xf]
  %v61 = vld [vmem:[%s0 + $0xa8] sm:$0xf]
  %v62 = vld [vmem:[%s0 + $0xac] sm:$0xf]
  %v63 = vld [vmem:[%s0 + $0xb0] sm:$0xf]
  %v64 = vld [vmem:[%s0 + $0xb4] sm:$0xf]
  %v65 = vld [vmem:[%s0 + $0xb8] sm:$0xf]
  %v66 = vld [vmem:[%s0 + $0xbc] sm:$0xf]
  %v67 = vld [vmem:[%s0 + $0xc0] sm:$0xf]
  %v117 = vunpack.c.l.b16 %v19
  %v118 = vunpack.c.l.b16 %v20
  %v119 = vunpack.c.l.b16 %v21
  %v120 = vunpack.c.l.b16 %v22
  %v121 = vunpack.c.l.b16 %v23
  %v122 = vunpack.c.l.b16 %v24
  %v123 = vunpack.c.l.b16 %v25
  %v124 = vunpack.c.l.b16 %v26
  %v125 = vunpack.c.l.b16 %v27
  %v126 = vunpack.c.l.b16 %v28
  %v127 = vunpack.c.l.b16 %v29
  %v128 = vunpack.c.l.b16 %v30
  %v129 = vunpack.c.l.b16 %v31
  %v130 = vunpack.c.l.b16 %v32
  %v131 = vunpack.c.l.b16 %v33
  %v132 = vunpack.c.l.b16 %v34
  %v133 = vunpack.c.l.b16 %v35
  %v134 = vunpack.c.l.b16 %v36
  %v135 = vunpack.c.l.b16 %v37
  %v136 = vunpack.c.l.b16 %v38
  %v137 = vunpack.c.l.b16 %v39
  %v138 = vunpack.c.l.b16 %v40
  %v139 = vunpack.c.l.b16 %v41
  %v140 = vunpack.c.l.b16 %v42
  %v141 = vunpack.c.l.b16 %v43
  %v142 = vunpack.c.l.b16 %v44
  %v143 = vunpack.c.l.b16 %v45
  %v144 = vunpack.c.l.b16 %v46
  %v145 = vunpack.c.l.b16 %v47
  %v146 = vunpack.c.l.b16 %v48
  %v147 = vunpack.c.l.b16 %v49
  %v148 = vunpack.c.l.b16 %v50
  %v149 = vunpack.c.l.b16 %v51
  %v150 = vunpack.c.l.b16 %v52
  %v151 = vunpack.c.l.b16 %v53
  %v152 = vunpack.c.l.b16 %v54
  %v153 = vunpack.c.l.b16 %v55
  %v154 = vunpack.c.l.b16 %v56
  %v155 = vunpack.c.l.b16 %v57
  %v156 = vunpack.c.l.b16 %v58
  %v157 = vunpack.c.l.b16 %v59
  %v158 = vunpack.c.l.b16 %v60
  %v159 = vunpack.c.l.b16 %v61
  %v160 = vunpack.c.l.b16 %v62
  %v161 = vunpack.c.l.b16 %v63
  %v162 = vunpack.c.l.b16 %v64
  %v163 = vunpack.c.l.b16 %v65
  %v164 = vunpack.c.l.b16 %v66
  %v165 = vunpack.c.l.b16 %v67
  %v166 = vpack.c.b16 %v118, %v117
  %v167 = vpack.c.b16 %v120, %v119
  %v168 = vpack.c.b16 %v122, %v121
  %v169 = vpack.c.b16 %v124, %v123
  %v170 = vpack.c.b16 %v126, %v125
  %v171 = vpack.c.b16 %v128, %v127
  %v172 = vpack.c.b16 %v130, %v129
  %v173 = vpack.c.b16 %v132, %v131
  %v174 = vpack.c.b16 %v134, %v133
  %v175 = vpack.c.b16 %v136, %v135
  %v176 = vpack.c.b16 %v138, %v137
  %v177 = vpack.c.b16 %v140, %v139
  %v178 = vpack.c.b16 %v142, %v141
  %v179 = vpack.c.b16 %v144, %v143
  %v180 = vpack.c.b16 %v146, %v145
  %v181 = vpack.c.b16 %v148, %v147
  %v182 = vpack.c.b16 %v150, %v149
  %v183 = vpack.c.b16 %v152, %v151
  %v184 = vpack.c.b16 %v154, %v153
  %v185 = vpack.c.b16 %v156, %v155
  %v186 = vpack.c.b16 %v158, %v157
  %v187 = vpack.c.b16 %v160, %v159
  %v188 = vpack.c.b16 %v162, %v161
  %v189 = vpack.c.b16 %v164, %v163
  %v190 = vpack.c.b16 %v165, %v165
  %v195 = vunpack.c.l.b16 %v15
  %v196 = vunpack.c.l.b16 %v16
  %v197 = vunpack.c.l.b16 %v17
  %v198 = vunpack.c.l.b16 %v18
  %v199 = vpack.c.b16 %v196, %v195
  %v200 = vpack.c.b16 %v198, %v197
  %vm202 = vcmask 203776
  %v204 = vsel %vm202, %v166, 0
  %v207 = vsel %vm202, %v167, 0
  %v210 = vsel %vm202, %v168, 0
  %v213 = vsel %vm202, %v169, 0
  %v216 = vsel %vm202, %v170, 0
  %v219 = vsel %vm202, %v171, 0
  %v222 = vsel %vm202, %v172, 0
  %v225 = vsel %vm202, %v173, 0
  %v228 = vsel %vm202, %v174, 0
  %v231 = vsel %vm202, %v175, 0
  %v234 = vsel %vm202, %v176, 0
  %v237 = vsel %vm202, %v177, 0
  %v240 = vsel %vm202, %v178, 0
  %v243 = vsel %vm202, %v179, 0
  %v246 = vsel %vm202, %v180, 0
  %v249 = vsel %vm202, %v181, 0
  %v252 = vsel %vm202, %v182, 0
  %v255 = vsel %vm202, %v183, 0
  %v258 = vsel %vm202, %v184, 0
  %v261 = vsel %vm202, %v185, 0
  %v264 = vsel %vm202, %v186, 0
  %v267 = vsel %vm202, %v187, 0
  %v270 = vsel %vm202, %v188, 0
  %v273 = vsel %vm202, %v189, 0
  %v276 = vsel %vm202, %v190, 0
  %vm278 = vcmask 1043456
  %vm279 = vcmask 1044480
  %v280 = vsel %vm278, 4294967295, 65535
  %v281 = vsel %vm279, %v280, 0
  %v283 = vand.u32 %v200, %v281
  %285 = vmatprep.subr.bf16.mxu0 0
  %286 = vmatpush1.bf16.msra.mxu0 %v199
  %287 = vmatprep.subr.bf16.mxu0 0
  %288 = vmatpush1.bf16.msra.mxu0 %v283
  %289 = vmatprep.subr.bf16.mxu0 0
  %290 = vmatpush1.bf16.msra.mxu0 0
  %291 = vmatprep.subr.bf16.mxu0 0
  %292 = vmatpush1.bf16.msra.mxu0 0
  %293 = vmatprep.subr.bf16.mxu0 0
  %294 = vmatpush1.bf16.msra.mxu0 0
  %295 = vmatprep.subr.bf16.mxu0 0
  %296 = vmatpush1.bf16.msra.mxu0 0
  %297 = vmatprep.subr.bf16.mxu0 0
  %298 = vmatpush1.bf16.msra.mxu0 0
  %299 = vmatprep.subr.bf16.mxu0 0
  %300 = vmatpush1.bf16.msra.mxu0 0
  %301 = vmatprep.subr.bf16.mxu0 0
  %302 = vmatpush1.bf16.msra.mxu0 0
  %303 = vmatprep.subr.bf16.mxu0 0
  %304 = vmatpush1.bf16.msra.mxu0 0
  %305 = vmatprep.subr.bf16.mxu0 0
  %306 = vmatpush1.bf16.msra.mxu0 0
  %307 = vmatprep.subr.bf16.mxu0 0
  %308 = vmatpush1.bf16.msra.mxu0 0
  %309 = vmatprep.subr.bf16.mxu0 0
  %310 = vmatpush1.bf16.msra.mxu0 0
  %311 = vmatprep.subr.bf16.mxu0 0
  %312 = vmatpush1.bf16.msra.mxu0 0
  %313 = vmatprep.subr.bf16.mxu0 0
  %314 = vmatpush1.bf16.msra.mxu0 0
  %315 = vmatprep.subr.bf16.mxu0 0
  %316 = vmatpush1.bf16.msra.mxu0 0
  %317 = vmatprep.mubr.bf16.mxu0 0
  %318 = vmatmul.mubr.bf16.gmra.mrb[0].mxu0 %v204
  %v319 = vpop.f32.mrb[0].mxu0
  %v320 = vadd.f32 0.0, %v319
  %v321 = vpop.f32.mrb[0].mxu0
  %v322 = vpop.f32.mrb[0].mxu0
  %v323 = vadd.f32 0.0, %v322
  %v324 = vpop.f32.mrb[0].mxu0
  %325 = vmatprep.mubr.bf16.mxu0 0
  %326 = vmatmul.mubr.bf16.gmra.mrb[0].mxu0 %v207
  %v327 = vpop.f32.mrb[0].mxu0
  %v328 = vadd.f32 0.0, %v327
  %v329 = vpop.f32.mrb[0].mxu0
  %v330 = vpop.f32.mrb[0].mxu0
  %v331 = vadd.f32 0.0, %v330
  %v332 = vpop.f32.mrb[0].mxu0
  %333 = vmatprep.mubr.bf16.mxu0 0
  %334 = vmatmul.mubr.bf16.gmra.mrb[0].mxu0 %v210
  %v335 = vpop.f32.mrb[0].mxu0
  %v336 = vadd.f32 0.0, %v335
  %v337 = vpop.f32.mrb[0].mxu0
  %v338 = vpop.f32.mrb[0].mxu0
  %v339 = vadd.f32 0.0, %v338
  %v340 = vpop.f32.mrb[0].mxu0
  %341 = vmatprep.mubr.bf16.mxu0 0
  %342 = vmatmul.mubr.bf16.gmra.mrb[0].mxu0 %v213
  %v343 = vpop.f32.mrb[0].mxu0
  %v344 = vadd.f32 0.0, %v343
  %v345 = vpop.f32.mrb[0].mxu0
  %v346 = vpop.f32.mrb[0].mxu0
  %v347 = vadd.f32 0.0, %v346
  %v348 = vpop.f32.mrb[0].mxu0
  %349 = vmatprep.mubr.bf16.mxu0 0
  %350 = vmatmul.mubr.bf16.gmra.mrb[0].mxu0 %v216
  %v351 = vpop.f32.mrb[0].mxu0
  %v352 = vadd.f32 0.0, %v351
  %v353 = vpop.f32.mrb[0].mxu0
  %v354 = vpop.f32.mrb[0].mxu0
  %v355 = vadd.f32 0.0, %v354
  %v356 = vpop.f32.mrb[0].mxu0
  %357 = vmatprep.mubr.bf16.mxu0 0
  %358 = vmatmul.mubr.bf16.gmra.mrb[0].mxu0 %v219
  %v359 = vpop.f32.mrb[0].mxu0
  %v360 = vadd.f32 0.0, %v359
  %v361 = vpop.f32.mrb[0].mxu0
  %v362 = vpop.f32.mrb[0].mxu0
  %v363 = vadd.f32 0.0, %v362
  %v364 = vpop.f32.mrb[0].mxu0
  %365 = vmatprep.mubr.bf16.mxu0 0
  %366 = vmatmul.mubr.bf16.gmra.mrb[0].mxu0 %v222
  %v367 = vpop.f32.mrb[0].mxu0
  %v368 = vadd.f32 0.0, %v367
  %v369 = vpop.f32.mrb[0].mxu0
  %v370 = vpop.f32.mrb[0].mxu0
  %v371 = vadd.f32 0.0, %v370
  %v372 = vpop.f32.mrb[0].mxu0
  %373 = vmatprep.mubr.bf16.mxu0 0
  %374 = vmatmul.mubr.bf16.gmra.mrb[0].mxu0 %v225
  %v375 = vpop.f32.mrb[0].mxu0
  %v376 = vadd.f32 0.0, %v375
  %v377 = vpop.f32.mrb[0].mxu0
  %v378 = vpop.f32.mrb[0].mxu0
  %v379 = vadd.f32 0.0, %v378
  %v380 = vpop.f32.mrb[0].mxu0
  %381 = vmatprep.mubr.bf16.mxu0 0
  %382 = vmatmul.mubr.bf16.gmra.mrb[0].mxu0 %v228
  %v383 = vpop.f32.mrb[0].mxu0
  %v384 = vadd.f32 0.0, %v383
  %v385 = vpop.f32.mrb[0].mxu0
  %v386 = vpop.f32.mrb[0].mxu0
  %v387 = vadd.f32 0.0, %v386
  %v388 = vpop.f32.mrb[0].mxu0
  %389 = vmatprep.mubr.bf16.mxu0 0
  %390 = vmatmul.mubr.bf16.gmra.mrb[0].mxu0 %v231
  %v391 = vpop.f32.mrb[0].mxu0
  %v392 = vadd.f32 0.0, %v391
  %v393 = vpop.f32.mrb[0].mxu0
  %v394 = vpop.f32.mrb[0].mxu0
  %v395 = vadd.f32 0.0, %v394
  %v396 = vpop.f32.mrb[0].mxu0
  %397 = vmatprep.mubr.bf16.mxu0 0
  %398 = vmatmul.mubr.bf16.gmra.mrb[0].mxu0 %v234
  %v399 = vpop.f32.mrb[0].mxu0
  %v400 = vadd.f32 0.0, %v399
  %v401 = vpop.f32.mrb[0].mxu0
  %v402 = vpop.f32.mrb[0].mxu0
  %v403 = vadd.f32 0.0, %v402
  %v404 = vpop.f32.mrb[0].mxu0
  %405 = vmatprep.mubr.bf16.mxu0 0
  %406 = vmatmul.mubr.bf16.gmra.mrb[0].mxu0 %v237
  %v407 = vpop.f32.mrb[0].mxu0
  %v408 = vadd.f32 0.0, %v407
  %v409 = vpop.f32.mrb[0].mxu0
  %v410 = vpop.f32.mrb[0].mxu0
  %v411 = vadd.f32 0.0, %v410
  %v412 = vpop.f32.mrb[0].mxu0
  %413 = vmatprep.mubr.bf16.mxu0 0
  %414 = vmatmul.mubr.bf16.gmra.mrb[0].mxu0 %v240
  %v415 = vpop.f32.mrb[0].mxu0
  %v416 = vadd.f32 0.0, %v415
  %v417 = vpop.f32.mrb[0].mxu0
  %v418 = vpop.f32.mrb[0].mxu0
  %v419 = vadd.f32 0.0, %v418
  %v420 = vpop.f32.mrb[0].mxu0
  %421 = vmatprep.mubr.bf16.mxu0 0
  %422 = vmatmul.mubr.bf16.gmra.mrb[0].mxu0 %v243
  %v423 = vpop.f32.mrb[0].mxu0
  %v424 = vadd.f32 0.0, %v423
  %v425 = vpop.f32.mrb[0].mxu0
  %v426 = vpop.f32.mrb[0].mxu0
  %v427 = vadd.f32 0.0, %v426
  %v428 = vpop.f32.mrb[0].mxu0
  %429 = vmatprep.mubr.bf16.mxu0 0
  %430 = vmatmul.mubr.bf16.gmra.mrb[0].mxu0 %v246
  %v431 = vpop.f32.mrb[0].mxu0
  %v432 = vadd.f32 0.0, %v431
  %v433 = vpop.f32.mrb[0].mxu0
  %v434 = vpop.f32.mrb[0].mxu0
  %v435 = vadd.f32 0.0, %v434
  %v436 = vpop.f32.mrb[0].mxu0
  %437 = vmatprep.mubr.bf16.mxu0 0
  %438 = vmatmul.mubr.bf16.gmra.mrb[0].mxu0 %v249
  %v439 = vpop.f32.mrb[0].mxu0
  %v440 = vadd.f32 0.0, %v439
  %v441 = vpop.f32.mrb[0].mxu0
  %v442 = vpop.f32.mrb[0].mxu0
  %v443 = vadd.f32 0.0, %v442
  %v444 = vpop.f32.mrb[0].mxu0
  %445 = vmatprep.mubr.bf16.mxu0 0
  %446 = vmatmul.mubr.bf16.gmra.mrb[0].mxu0 %v252
  %v447 = vpop.f32.mrb[0].mxu0
  %v448 = vadd.f32 0.0, %v447
  %v449 = vpop.f32.mrb[0].mxu0
  %v450 = vpop.f32.mrb[0].mxu0
  %v451 = vadd.f32 0.0, %v450
  %v452 = vpop.f32.mrb[0].mxu0
  %453 = vmatprep.mubr.bf16.mxu0 0
  %454 = vmatmul.mubr.bf16.gmra.mrb[0].mxu0 %v255
  %v455 = vpop.f32.mrb[0].mxu0
  %v456 = vadd.f32 0.0, %v455
  %v457 = vpop.f32.mrb[0].mxu0
  %v458 = vpop.f32.mrb[0].mxu0
  %v459 = vadd.f32 0.0, %v458
  %v460 = vpop.f32.mrb[0].mxu0
  %461 = vmatprep.mubr.bf16.mxu0 0
  %462 = vmatmul.mubr.bf16.gmra.mrb[0].mxu0 %v258
  %v463 = vpop.f32.mrb[0].mxu0
  %v464 = vadd.f32 0.0, %v463
  %v465 = vpop.f32.mrb[0].mxu0
  %v466 = vpop.f32.mrb[0].mxu0
  %v467 = vadd.f32 0.0, %v466
  %v468 = vpop.f32.mrb[0].mxu0
  %469 = vmatprep.mubr.bf16.mxu0 0
  %470 = vmatmul.mubr.bf16.gmra.mrb[0].mxu0 %v261
  %v471 = vpop.f32.mrb[0].mxu0
  %v472 = vadd.f32 0.0, %v471
  %v473 = vpop.f32.mrb[0].mxu0
  %v474 = vpop.f32.mrb[0].mxu0
  %v475 = vadd.f32 0.0, %v474
  %v476 = vpop.f32.mrb[0].mxu0
  %477 = vmatprep.mubr.bf16.mxu0 0
  %478 = vmatmul.mubr.bf16.gmra.mrb[0].mxu0 %v264
  %v479 = vpop.f32.mrb[0].mxu0
  %v480 = vadd.f32 0.0, %v479
  %v481 = vpop.f32.mrb[0].mxu0
  %v482 = vpop.f32.mrb[0].mxu0
  %v483 = vadd.f32 0.0, %v482
  %v484 = vpop.f32.mrb[0].mxu0
  %485 = vmatprep.mubr.bf16.mxu0 0
  %486 = vmatmul.mubr.bf16.gmra.mrb[0].mxu0 %v267
  %v487 = vpop.f32.mrb[0].mxu0
  %v488 = vadd.f32 0.0, %v487
  %v489 = vpop.f32.mrb[0].mxu0
  %v490 = vpop.f32.mrb[0].mxu0
  %v491 = vadd.f32 0.0, %v490
  %v492 = vpop.f32.mrb[0].mxu0
  %493 = vmatprep.mubr.bf16.mxu0 0
  %494 = vmatmul.mubr.bf16.gmra.mrb[0].mxu0 %v270
  %v495 = vpop.f32.mrb[0].mxu0
  %v496 = vadd.f32 0.0, %v495
  %v497 = vpop.f32.mrb[0].mxu0
  %v498 = vpop.f32.mrb[0].mxu0
  %v499 = vadd.f32 0.0, %v498
  %v500 = vpop.f32.mrb[0].mxu0
  %501 = vmatprep.mubr.bf16.mxu0 0
  %502 = vmatmul.mubr.bf16.gmra.mrb[0].mxu0 %v273
  %v503 = vpop.f32.mrb[0].mxu0
  %v504 = vadd.f32 0.0, %v503
  %v505 = vpop.f32.mrb[0].mxu0
  %v506 = vpop.f32.mrb[0].mxu0
  %v507 = vadd.f32 0.0, %v506
  %v508 = vpop.f32.mrb[0].mxu0
  %509 = vmatprep.mubr.bf16.mxu0 0
  %510 = vmatmul.mubr.bf16.gmra.mrb[0].mxu0 %v276
  %v511 = vpop.f32.mrb[0].mxu0
  %v512 = vadd.f32 0.0, %v511
  %v513 = vpop.f32.mrb[0].mxu0
  %v514 = vpop.f32.mrb[0].mxu0
  %v515 = vpop.f32.mrb[0].mxu0
  %516 = vdwg.mxu0
  %s517 = scalar_lea.vmem %s0, 196
  %v518 = vld [vmem:[%s517] sm:$0xf]
  %v519 = vld [vmem:[%s517 + $0x4] sm:$0xf]
  %v520 = vld [vmem:[%s517 + $0x8] sm:$0xf]
  %v521 = vld [vmem:[%s517 + $0xc] sm:$0xf]
  %v522 = vld [vmem:[%s517 + $0x10] sm:$0xf]
  %v523 = vld [vmem:[%s517 + $0x14] sm:$0xf]
  %v524 = vld [vmem:[%s517 + $0x18] sm:$0xf]
  %v525 = vld [vmem:[%s517 + $0x1c] sm:$0xf]
  %v526 = vld [vmem:[%s517 + $0x20] sm:$0xf]
  %v527 = vld [vmem:[%s517 + $0x24] sm:$0xf]
  %v528 = vld [vmem:[%s517 + $0x28] sm:$0xf]
  %v529 = vld [vmem:[%s517 + $0x2c] sm:$0xf]
  %v530 = vld [vmem:[%s517 + $0x30] sm:$0xf]
  %v531 = vld [vmem:[%s517 + $0x34] sm:$0xf]
  %v532 = vld [vmem:[%s517 + $0x38] sm:$0xf]
  %v533 = vld [vmem:[%s517 + $0x3c] sm:$0xf]
  %v534 = vld [vmem:[%s517 + $0x40] sm:$0xf]
  %v535 = vld [vmem:[%s517 + $0x44] sm:$0xf]
  %v536 = vld [vmem:[%s517 + $0x48] sm:$0xf]
  %v537 = vld [vmem:[%s517 + $0x4c] sm:$0xf]
  %v538 = vld [vmem:[%s517 + $0x50] sm:$0xf]
  %v539 = vld [vmem:[%s517 + $0x54] sm:$0xf]
  %v540 = vld [vmem:[%s517 + $0x58] sm:$0xf]
  %v541 = vld [vmem:[%s517 + $0x5c] sm:$0xf]
  %v542 = vld [vmem:[%s517 + $0x60] sm:$0xf]
  %v543 = vld [vmem:[%s517 + $0x64] sm:$0xf]
  %v544 = vld [vmem:[%s517 + $0x68] sm:$0xf]
  %v545 = vld [vmem:[%s517 + $0x6c] sm:$0xf]
  %v546 = vld [vmem:[%s517 + $0x70] sm:$0xf]
  %v547 = vld [vmem:[%s517 + $0x74] sm:$0xf]
  %v548 = vld [vmem:[%s517 + $0x78] sm:$0xf]
  %v549 = vld [vmem:[%s517 + $0x7c] sm:$0xf]
  %v550 = vld [vmem:[%s517 + $0x80] sm:$0xf]
  %v551 = vld [vmem:[%s517 + $0x84] sm:$0xf]
  %v552 = vld [vmem:[%s517 + $0x88] sm:$0xf]
  %v553 = vld [vmem:[%s517 + $0x8c] sm:$0xf]
  %v554 = vld [vmem:[%s517 + $0x90] sm:$0xf]
  %v555 = vld [vmem:[%s517 + $0x94] sm:$0xf]
  %v556 = vld [vmem:[%s517 + $0x98] sm:$0xf]
  %v557 = vld [vmem:[%s517 + $0x9c] sm:$0xf]
  %v558 = vld [vmem:[%s517 + $0xa0] sm:$0xf]
  %v559 = vld [vmem:[%s517 + $0xa4] sm:$0xf]
  %v560 = vld [vmem:[%s517 + $0xa8] sm:$0xf]
  %v561 = vld [vmem:[%s517 + $0xac] sm:$0xf]
  %v562 = vld [vmem:[%s517 + $0xb0] sm:$0xf]
  %v563 = vld [vmem:[%s517 + $0xb4] sm:$0xf]
  %v564 = vld [vmem:[%s517 + $0xb8] sm:$0xf]
  %v565 = vld [vmem:[%s517 + $0xbc] sm:$0xf]
  %v566 = vld [vmem:[%s517 + $0xc0] sm:$0xf]
  %v616 = vunpack.c.l.b16 %v518
  %v617 = vunpack.c.l.b16 %v519
  %v618 = vunpack.c.l.b16 %v520
  %v619 = vunpack.c.l.b16 %v521
  %v620 = vunpack.c.l.b16 %v522
  %v621 = vunpack.c.l.b16 %v523
  %v622 = vunpack.c.l.b16 %v524
  %v623 = vunpack.c.l.b16 %v525
  %v624 = vunpack.c.l.b16 %v526
  %v625 = vunpack.c.l.b16 %v527
  %v626 = vunpack.c.l.b16 %v528
  %v627 = vunpack.c.l.b16 %v529
  %v628 = vunpack.c.l.b16 %v530
  %v629 = vunpack.c.l.b16 %v531
  %v630 = vunpack.c.l.b16 %v532
  %v631 = vunpack.c.l.b16 %v533
  %v632 = vunpack.c.l.b16 %v534
  %v633 = vunpack.c.l.b16 %v535
  %v634 = vunpack.c.l.b16 %v536
  %v635 = vunpack.c.l.b16 %v537
  %v636 = vunpack.c.l.b16 %v538
  %v637 = vunpack.c.l.b16 %v539
  %v638 = vunpack.c.l.b16 %v540
  %v639 = vunpack.c.l.b16 %v541
  %v640 = vunpack.c.l.b16 %v542
  %v641 = vunpack.c.l.b16 %v543
  %v642 = vunpack.c.l.b16 %v544
  %v643 = vunpack.c.l.b16 %v545
  %v644 = vunpack.c.l.b16 %v546
  %v645 = vunpack.c.l.b16 %v547
  %v646 = vunpack.c.l.b16 %v548
  %v647 = vunpack.c.l.b16 %v549
  %v648 = vunpack.c.l.b16 %v550
  %v649 = vunpack.c.l.b16 %v551
  %v650 = vunpack.c.l.b16 %v552
  %v651 = vunpack.c.l.b16 %v553
  %v652 = vunpack.c.l.b16 %v554
  %v653 = vunpack.c.l.b16 %v555
  %v654 = vunpack.c.l.b16 %v556
  %v655 = vunpack.c.l.b16 %v557
  %v656 = vunpack.c.l.b16 %v558
  %v657 = vunpack.c.l.b16 %v559
  %v658 = vunpack.c.l.b16 %v560
  %v659 = vunpack.c.l.b16 %v561
  %v660 = vunpack.c.l.b16 %v562
  %v661 = vunpack.c.l.b16 %v563
  %v662 = vunpack.c.l.b16 %v564
  %v663 = vunpack.c.l.b16 %v565
  %v664 = vunpack.c.l.b16 %v566
  %v665 = vpack.c.b16 %v617, %v616
  %v666 = vpack.c.b16 %v619, %v618
  %v667 = vpack.c.b16 %v621, %v620
  %v668 = vpack.c.b16 %v623, %v622
  %v669 = vpack.c.b16 %v625, %v624
  %v670 = vpack.c.b16 %v627, %v626
  %v671 = vpack.c.b16 %v629, %v628
  %v672 = vpack.c.b16 %v631, %v630
  %v673 = vpack.c.b16 %v633, %v632
  %v674 = vpack.c.b16 %v635, %v634
  %v675 = vpack.c.b16 %v637, %v636
  %v676 = vpack.c.b16 %v639, %v638
  %v677 = vpack.c.b16 %v641, %v640
  %v678 = vpack.c.b16 %v643, %v642
  %v679 = vpack.c.b16 %v645, %v644
  %v680 = vpack.c.b16 %v647, %v646
  %v681 = vpack.c.b16 %v649, %v648
  %v682 = vpack.c.b16 %v651, %v650
  %v683 = vpack.c.b16 %v653, %v652
  %v684 = vpack.c.b16 %v655, %v654
  %v685 = vpack.c.b16 %v657, %v656
  %v686 = vpack.c.b16 %v659, %v658
  %v687 = vpack.c.b16 %v661, %v660
  %v688 = vpack.c.b16 %v663, %v662
  %v689 = vpack.c.b16 %v664, %v664
  %v691 = vsel %vm202, %v665, 0
  %v694 = vsel %vm202, %v666, 0
  %v697 = vsel %vm202, %v667, 0
  %v700 = vsel %vm202, %v668, 0
  %v703 = vsel %vm202, %v669, 0
  %v706 = vsel %vm202, %v670, 0
  %v709 = vsel %vm202, %v671, 0
  %v712 = vsel %vm202, %v672, 0
  %v715 = vsel %vm202, %v673, 0
  %v718 = vsel %vm202, %v674, 0
  %v721 = vsel %vm202, %v675, 0
  %v724 = vsel %vm202, %v676, 0
  %v727 = vsel %vm202, %v677, 0
  %v730 = vsel %vm202, %v678, 0
  %v733 = vsel %vm202, %v679, 0
  %v736 = vsel %vm202, %v680, 0
  %v739 = vsel %vm202, %v681, 0
  %v742 = vsel %vm202, %v682, 0
  %v745 = vsel %vm202, %v683, 0
  %v748 = vsel %vm202, %v684, 0
  %v751 = vsel %vm202, %v685, 0
  %v754 = vsel %vm202, %v686, 0
  %v757 = vsel %vm202, %v687, 0
  %v760 = vsel %vm202, %v688, 0
  %v763 = vsel %vm202, %v689, 0
  %765 = vmatprep.subr.bf16.mxu0 0
  %766 = vmatpush1.bf16.msra.mxu0 %v199
  %767 = vmatprep.subr.bf16.mxu0 0
  %768 = vmatpush1.bf16.msra.mxu0 %v283
  %769 = vmatprep.subr.bf16.mxu0 0
  %770 = vmatpush1.bf16.msra.mxu0 0
  %771 = vmatprep.subr.bf16.mxu0 0
  %772 = vmatpush1.bf16.msra.mxu0 0
  %773 = vmatprep.subr.bf16.mxu0 0
  %774 = vmatpush1.bf16.msra.mxu0 0
  %775 = vmatprep.subr.bf16.mxu0 0
  %776 = vmatpush1.bf16.msra.mxu0 0
  %777 = vmatprep.subr.bf16.mxu0 0
  %778 = vmatpush1.bf16.msra.mxu0 0
  %779 = vmatprep.subr.bf16.mxu0 0
  %780 = vmatpush1.bf16.msra.mxu0 0
  %781 = vmatprep.subr.bf16.mxu0 0
  %782 = vmatpush1.bf16.msra.mxu0 0
  %783 = vmatprep.subr.bf16.mxu0 0
  %784 = vmatpush1.bf16.msra.mxu0 0
  %785 = vmatprep.subr.bf16.mxu0 0
  %786 = vmatpush1.bf16.msra.mxu0 0
  %787 = vmatprep.subr.bf16.mxu0 0
  %788 = vmatpush1.bf16.msra.mxu0 0
  %789 = vmatprep.subr.bf16.mxu0 0
  %790 = vmatpush1.bf16.msra.mxu0 0
  %791 = vmatprep.subr.bf16.mxu0 0
  %792 = vmatpush1.bf16.msra.mxu0 0
  %793 = vmatprep.subr.bf16.mxu0 0
  %794 = vmatpush1.bf16.msra.mxu0 0
  %795 = vmatprep.subr.bf16.mxu0 0
  %796 = vmatpush1.bf16.msra.mxu0 0
  %797 = vmatprep.mubr.bf16.mxu0 0
  %798 = vmatmul.mubr.bf16.gmra.mrb[0].mxu0 %v691
  %v799 = vpop.f32.mrb[0].mxu0
  %v800 = vadd.f32 0.0, %v799
  %v801 = vpop.f32.mrb[0].mxu0
  %v802 = vpop.f32.mrb[0].mxu0
  %v803 = vadd.f32 0.0, %v802
  %v804 = vpop.f32.mrb[0].mxu0
  %805 = vmatprep.mubr.bf16.mxu0 0
  %806 = vmatmul.mubr.bf16.gmra.mrb[0].mxu0 %v694
  %v807 = vpop.f32.mrb[0].mxu0
  %v808 = vadd.f32 0.0, %v807
  %v809 = vpop.f32.mrb[0].mxu0
  %v810 = vpop.f32.mrb[0].mxu0
  %v811 = vadd.f32 0.0, %v810
  %v812 = vpop.f32.mrb[0].mxu0
  %813 = vmatprep.mubr.bf16.mxu0 0
  %814 = vmatmul.mubr.bf16.gmra.mrb[0].mxu0 %v697
  %v815 = vpop.f32.mrb[0].mxu0
  %v816 = vadd.f32 0.0, %v815
  %v817 = vpop.f32.mrb[0].mxu0
  %v818 = vpop.f32.mrb[0].mxu0
  %v819 = vadd.f32 0.0, %v818
  %v820 = vpop.f32.mrb[0].mxu0
  %821 = vmatprep.mubr.bf16.mxu0 0
  %822 = vmatmul.mubr.bf16.gmra.mrb[0].mxu0 %v700
  %v823 = vpop.f32.mrb[0].mxu0
  %v824 = vadd.f32 0.0, %v823
  %v825 = vpop.f32.mrb[0].mxu0
  %v826 = vpop.f32.mrb[0].mxu0
  %v827 = vadd.f32 0.0, %v826
  %v828 = vpop.f32.mrb[0].mxu0
  %829 = vmatprep.mubr.bf16.mxu0 0
  %830 = vmatmul.mubr.bf16.gmra.mrb[0].mxu0 %v703
  %v831 = vpop.f32.mrb[0].mxu0
  %v832 = vadd.f32 0.0, %v831
  %v833 = vpop.f32.mrb[0].mxu0
  %v834 = vpop.f32.mrb[0].mxu0
  %v835 = vadd.f32 0.0, %v834
  %v836 = vpop.f32.mrb[0].mxu0
  %837 = vmatprep.mubr.bf16.mxu0 0
  %838 = vmatmul.mubr.bf16.gmra.mrb[0].mxu0 %v706
  %v839 = vpop.f32.mrb[0].mxu0
  %v840 = vadd.f32 0.0, %v839
  %v841 = vpop.f32.mrb[0].mxu0
  %v842 = vpop.f32.mrb[0].mxu0
  %v843 = vadd.f32 0.0, %v842
  %v844 = vpop.f32.mrb[0].mxu0
  %845 = vmatprep.mubr.bf16.mxu0 0
  %846 = vmatmul.mubr.bf16.gmra.mrb[0].mxu0 %v709
  %v847 = vpop.f32.mrb[0].mxu0
  %v848 = vadd.f32 0.0, %v847
  %v849 = vpop.f32.mrb[0].mxu0
  %v850 = vpop.f32.mrb[0].mxu0
  %v851 = vadd.f32 0.0, %v850
  %v852 = vpop.f32.mrb[0].mxu0
  %853 = vmatprep.mubr.bf16.mxu0 0
  %854 = vmatmul.mubr.bf16.gmra.mrb[0].mxu0 %v712
  %v855 = vpop.f32.mrb[0].mxu0
  %v856 = vadd.f32 0.0, %v855
  %v857 = vpop.f32.mrb[0].mxu0
  %v858 = vpop.f32.mrb[0].mxu0
  %v859 = vadd.f32 0.0, %v858
  %v860 = vpop.f32.mrb[0].mxu0
  %861 = vmatprep.mubr.bf16.mxu0 0
  %862 = vmatmul.mubr.bf16.gmra.mrb[0].mxu0 %v715
  %v863 = vpop.f32.mrb[0].mxu0
  %v864 = vadd.f32 0.0, %v863
  %v865 = vpop.f32.mrb[0].mxu0
  %v866 = vpop.f32.mrb[0].mxu0
  %v867 = vadd.f32 0.0, %v866
  %v868 = vpop.f32.mrb[0].mxu0
  %869 = vmatprep.mubr.bf16.mxu0 0
  %870 = vmatmul.mubr.bf16.gmra.mrb[0].mxu0 %v718
  %v871 = vpop.f32.mrb[0].mxu0
  %v872 = vadd.f32 0.0, %v871
  %v873 = vpop.f32.mrb[0].mxu0
  %v874 = vpop.f32.mrb[0].mxu0
  %v875 = vadd.f32 0.0, %v874
  %v876 = vpop.f32.mrb[0].mxu0
  %877 = vmatprep.mubr.bf16.mxu0 0
  %878 = vmatmul.mubr.bf16.gmra.mrb[0].mxu0 %v721
  %v879 = vpop.f32.mrb[0].mxu0
  %v880 = vadd.f32 0.0, %v879
  %v881 = vpop.f32.mrb[0].mxu0
  %v882 = vpop.f32.mrb[0].mxu0
  %v883 = vadd.f32 0.0, %v882
  %v884 = vpop.f32.mrb[0].mxu0
  %885 = vmatprep.mubr.bf16.mxu0 0
  %886 = vmatmul.mubr.bf16.gmra.mrb[0].mxu0 %v724
  %v887 = vpop.f32.mrb[0].mxu0
  %v888 = vadd.f32 0.0, %v887
  %v889 = vpop.f32.mrb[0].mxu0
  %v890 = vpop.f32.mrb[0].mxu0
  %v891 = vadd.f32 0.0, %v890
  %v892 = vpop.f32.mrb[0].mxu0
  %893 = vmatprep.mubr.bf16.mxu0 0
  %894 = vmatmul.mubr.bf16.gmra.mrb[0].mxu0 %v727
  %v895 = vpop.f32.mrb[0].mxu0
  %v896 = vadd.f32 0.0, %v895
  %v897 = vpop.f32.mrb[0].mxu0
  %v898 = vpop.f32.mrb[0].mxu0
  %v899 = vadd.f32 0.0, %v898
  %v900 = vpop.f32.mrb[0].mxu0
  %901 = vmatprep.mubr.bf16.mxu0 0
  %902 = vmatmul.mubr.bf16.gmra.mrb[0].mxu0 %v730
  %v903 = vpop.f32.mrb[0].mxu0
  %v904 = vadd.f32 0.0, %v903
  %v905 = vpop.f32.mrb[0].mxu0
  %v906 = vpop.f32.mrb[0].mxu0
  %v907 = vadd.f32 0.0, %v906
  %v908 = vpop.f32.mrb[0].mxu0
  %909 = vmatprep.mubr.bf16.mxu0 0
  %910 = vmatmul.mubr.bf16.gmra.mrb[0].mxu0 %v733
  %v911 = vpop.f32.mrb[0].mxu0
  %v912 = vadd.f32 0.0, %v911
  %v913 = vpop.f32.mrb[0].mxu0
  %v914 = vpop.f32.mrb[0].mxu0
  %v915 = vadd.f32 0.0, %v914
  %v916 = vpop.f32.mrb[0].mxu0
  %917 = vmatprep.mubr.bf16.mxu0 0
  %918 = vmatmul.mubr.bf16.gmra.mrb[0].mxu0 %v736
  %v919 = vpop.f32.mrb[0].mxu0
  %v920 = vadd.f32 0.0, %v919
  %v921 = vpop.f32.mrb[0].mxu0
  %v922 = vpop.f32.mrb[0].mxu0
  %v923 = vadd.f32 0.0, %v922
  %v924 = vpop.f32.mrb[0].mxu0
  %925 = vmatprep.mubr.bf16.mxu0 0
  %926 = vmatmul.mubr.bf16.gmra.mrb[0].mxu0 %v739
  %v927 = vpop.f32.mrb[0].mxu0
  %v928 = vadd.f32 0.0, %v927
  %v929 = vpop.f32.mrb[0].mxu0
  %v930 = vpop.f32.mrb[0].mxu0
  %v931 = vadd.f32 0.0, %v930
  %v932 = vpop.f32.mrb[0].mxu0
  %933 = vmatprep.mubr.bf16.mxu0 0
  %934 = vmatmul.mubr.bf16.gmra.mrb[0].mxu0 %v742
  %v935 = vpop.f32.mrb[0].mxu0
  %v936 = vadd.f32 0.0, %v935
  %v937 = vpop.f32.mrb[0].mxu0
  %v938 = vpop.f32.mrb[0].mxu0
  %v939 = vadd.f32 0.0, %v938
  %v940 = vpop.f32.mrb[0].mxu0
  %941 = vmatprep.mubr.bf16.mxu0 0
  %942 = vmatmul.mubr.bf16.gmra.mrb[0].mxu0 %v745
  %v943 = vpop.f32.mrb[0].mxu0
  %v944 = vadd.f32 0.0, %v943
  %v945 = vpop.f32.mrb[0].mxu0
  %v946 = vpop.f32.mrb[0].mxu0
  %v947 = vadd.f32 0.0, %v946
  %v948 = vpop.f32.mrb[0].mxu0
  %949 = vmatprep.mubr.bf16.mxu0 0
  %950 = vmatmul.mubr.bf16.gmra.mrb[0].mxu0 %v748
  %v951 = vpop.f32.mrb[0].mxu0
  %v952 = vadd.f32 0.0, %v951
  %v953 = vpop.f32.mrb[0].mxu0
  %v954 = vpop.f32.mrb[0].mxu0
  %v955 = vadd.f32 0.0, %v954
  %v956 = vpop.f32.mrb[0].mxu0
  %957 = vmatprep.mubr.bf16.mxu0 0
  %958 = vmatmul.mubr.bf16.gmra.mrb[0].mxu0 %v751
  %v959 = vpop.f32.mrb[0].mxu0
  %v960 = vadd.f32 0.0, %v959
  %v961 = vpop.f32.mrb[0].mxu0
  %v962 = vpop.f32.mrb[0].mxu0
  %v963 = vadd.f32 0.0, %v962
  %v964 = vpop.f32.mrb[0].mxu0
  %965 = vmatprep.mubr.bf16.mxu0 0
  %966 = vmatmul.mubr.bf16.gmra.mrb[0].mxu0 %v754
  %v967 = vpop.f32.mrb[0].mxu0
  %v968 = vadd.f32 0.0, %v967
  %v969 = vpop.f32.mrb[0].mxu0
  %v970 = vpop.f32.mrb[0].mxu0
  %v971 = vadd.f32 0.0, %v970
  %v972 = vpop.f32.mrb[0].mxu0
  %973 = vmatprep.mubr.bf16.mxu0 0
  %974 = vmatmul.mubr.bf16.gmra.mrb[0].mxu0 %v757
  %v975 = vpop.f32.mrb[0].mxu0
  %v976 = vadd.f32 0.0, %v975
  %v977 = vpop.f32.mrb[0].mxu0
  %v978 = vpop.f32.mrb[0].mxu0
  %v979 = vadd.f32 0.0, %v978
  %v980 = vpop.f32.mrb[0].mxu0
  %981 = vmatprep.mubr.bf16.mxu0 0
  %982 = vmatmul.mubr.bf16.gmra.mrb[0].mxu0 %v760
  %v983 = vpop.f32.mrb[0].mxu0
  %v984 = vadd.f32 0.0, %v983
  %v985 = vpop.f32.mrb[0].mxu0
  %v986 = vpop.f32.mrb[0].mxu0
  %v987 = vadd.f32 0.0, %v986
  %v988 = vpop.f32.mrb[0].mxu0
  %989 = vmatprep.mubr.bf16.mxu0 0
  %990 = vmatmul.mubr.bf16.gmra.mrb[0].mxu0 %v763
  %v991 = vpop.f32.mrb[0].mxu0
  %v992 = vadd.f32 0.0, %v991
  %v993 = vpop.f32.mrb[0].mxu0
  %v994 = vpop.f32.mrb[0].mxu0
  %v995 = vpop.f32.mrb[0].mxu0
  %996 = vdwg.mxu0
  %v997 = vmax.f32 %v320, %v800
  %v998 = vmax.f32 %v323, %v803
  %v999 = vmax.f32 %v328, %v808
  %v1000 = vmax.f32 %v331, %v811
  %v1001 = vmax.f32 %v336, %v816
  %v1002 = vmax.f32 %v339, %v819
  %v1003 = vmax.f32 %v344, %v824
  %v1004 = vmax.f32 %v347, %v827
  %v1005 = vmax.f32 %v352, %v832
  %v1006 = vmax.f32 %v355, %v835
  %v1007 = vmax.f32 %v360, %v840
  %v1008 = vmax.f32 %v363, %v843
  %v1009 = vmax.f32 %v368, %v848
  %v1010 = vmax.f32 %v371, %v851
  %v1011 = vmax.f32 %v376, %v856
  %v1012 = vmax.f32 %v379, %v859
  %v1013 = vmax.f32 %v384, %v864
  %v1014 = vmax.f32 %v387, %v867
  %v1015 = vmax.f32 %v392, %v872
  %v1016 = vmax.f32 %v395, %v875
  %v1017 = vmax.f32 %v400, %v880
  %v1018 = vmax.f32 %v403, %v883
  %v1019 = vmax.f32 %v408, %v888
  %v1020 = vmax.f32 %v411, %v891
  %v1021 = vmax.f32 %v416, %v896
  %v1022 = vmax.f32 %v419, %v899
  %v1023 = vmax.f32 %v424, %v904
  %v1024 = vmax.f32 %v427, %v907
  %v1025 = vmax.f32 %v432, %v912
  %v1026 = vmax.f32 %v435, %v915
  %v1027 = vmax.f32 %v440, %v920
  %v1028 = vmax.f32 %v443, %v923
  %v1029 = vmax.f32 %v448, %v928
  %v1030 = vmax.f32 %v451, %v931
  %v1031 = vmax.f32 %v456, %v936
  %v1032 = vmax.f32 %v459, %v939
  %v1033 = vmax.f32 %v464, %v944
  %v1034 = vmax.f32 %v467, %v947
  %v1035 = vmax.f32 %v472, %v952
  %v1036 = vmax.f32 %v475, %v955
  %v1037 = vmax.f32 %v480, %v960
  %v1038 = vmax.f32 %v483, %v963
  %v1039 = vmax.f32 %v488, %v968
  %v1040 = vmax.f32 %v491, %v971
  %v1041 = vmax.f32 %v496, %v976
  %v1042 = vmax.f32 %v499, %v979
  %v1043 = vmax.f32 %v504, %v984
  %v1044 = vmax.f32 %v507, %v987
  %v1045 = vmax.f32 %v512, %v992
  %s1046 = scalar_lea.vmem %s0, 392
  %v1047 = vld [vmem:[%s1046] sm:$0xf]
  %v1048 = vld [vmem:[%s1046 + $0x4] sm:$0xf]
  %v1049 = vld [vmem:[%s1046 + $0x8] sm:$0xf]
  %v1050 = vld [vmem:[%s1046 + $0xc] sm:$0xf]
  %v1051 = vld [vmem:[%s1046 + $0x10] sm:$0xf]
  %v1052 = vld [vmem:[%s1046 + $0x14] sm:$0xf]
  %v1053 = vld [vmem:[%s1046 + $0x18] sm:$0xf]
  %v1054 = vld [vmem:[%s1046 + $0x1c] sm:$0xf]
  %v1055 = vld [vmem:[%s1046 + $0x20] sm:$0xf]
  %v1056 = vld [vmem:[%s1046 + $0x24] sm:$0xf]
  %v1057 = vld [vmem:[%s1046 + $0x28] sm:$0xf]
  %v1058 = vld [vmem:[%s1046 + $0x2c] sm:$0xf]
  %v1059 = vld [vmem:[%s1046 + $0x30] sm:$0xf]
  %v1060 = vld [vmem:[%s1046 + $0x34] sm:$0xf]
  %v1061 = vld [vmem:[%s1046 + $0x38] sm:$0xf]
  %v1062 = vld [vmem:[%s1046 + $0x3c] sm:$0xf]
  %v1063 = vld [vmem:[%s1046 + $0x40] sm:$0xf]
  %v1064 = vld [vmem:[%s1046 + $0x44] sm:$0xf]
  %v1065 = vld [vmem:[%s1046 + $0x48] sm:$0xf]
  %v1066 = vld [vmem:[%s1046 + $0x4c] sm:$0xf]
  %v1067 = vld [vmem:[%s1046 + $0x50] sm:$0xf]
  %v1068 = vld [vmem:[%s1046 + $0x54] sm:$0xf]
  %v1069 = vld [vmem:[%s1046 + $0x58] sm:$0xf]
  %v1070 = vld [vmem:[%s1046 + $0x5c] sm:$0xf]
  %v1071 = vld [vmem:[%s1046 + $0x60] sm:$0xf]
  %v1072 = vld [vmem:[%s1046 + $0x64] sm:$0xf]
  %v1073 = vld [vmem:[%s1046 + $0x68] sm:$0xf]
  %v1074 = vld [vmem:[%s1046 + $0x6c] sm:$0xf]
  %v1075 = vld [vmem:[%s1046 + $0x70] sm:$0xf]
  %v1076 = vld [vmem:[%s1046 + $0x74] sm:$0xf]
  %v1077 = vld [vmem:[%s1046 + $0x78] sm:$0xf]
  %v1078 = vld [vmem:[%s1046 + $0x7c] sm:$0xf]
  %v1079 = vld [vmem:[%s1046 + $0x80] sm:$0xf]
  %v1080 = vld [vmem:[%s1046 + $0x84] sm:$0xf]
  %v1081 = vld [vmem:[%s1046 + $0x88] sm:$0xf]
  %v1082 = vld [vmem:[%s1046 + $0x8c] sm:$0xf]
  %v1083 = vld [vmem:[%s1046 + $0x90] sm:$0xf]
  %v1084 = vld [vmem:[%s1046 + $0x94] sm:$0xf]
  %v1085 = vld [vmem:[%s1046 + $0x98] sm:$0xf]
  %v1086 = vld [vmem:[%s1046 + $0x9c] sm:$0xf]
  %v1087 = vld [vmem:[%s1046 + $0xa0] sm:$0xf]
  %v1088 = vld [vmem:[%s1046 + $0xa4] sm:$0xf]
  %v1089 = vld [vmem:[%s1046 + $0xa8] sm:$0xf]
  %v1090 = vld [vmem:[%s1046 + $0xac] sm:$0xf]
  %v1091 = vld [vmem:[%s1046 + $0xb0] sm:$0xf]
  %v1092 = vld [vmem:[%s1046 + $0xb4] sm:$0xf]
  %v1093 = vld [vmem:[%s1046 + $0xb8] sm:$0xf]
  %v1094 = vld [vmem:[%s1046 + $0xbc] sm:$0xf]
  %v1095 = vld [vmem:[%s1046 + $0xc0] sm:$0xf]
  %v1145 = vunpack.c.l.b16 %v1047
  %v1146 = vunpack.c.l.b16 %v1048
  %v1147 = vunpack.c.l.b16 %v1049
  %v1148 = vunpack.c.l.b16 %v1050
  %v1149 = vunpack.c.l.b16 %v1051
  %v1150 = vunpack.c.l.b16 %v1052
  %v1151 = vunpack.c.l.b16 %v1053
  %v1152 = vunpack.c.l.b16 %v1054
  %v1153 = vunpack.c.l.b16 %v1055
  %v1154 = vunpack.c.l.b16 %v1056
  %v1155 = vunpack.c.l.b16 %v1057
  %v1156 = vunpack.c.l.b16 %v1058
  %v1157 = vunpack.c.l.b16 %v1059
  %v1158 = vunpack.c.l.b16 %v1060
  %v1159 = vunpack.c.l.b16 %v1061
  %v1160 = vunpack.c.l.b16 %v1062
  %v1161 = vunpack.c.l.b16 %v1063
  %v1162 = vunpack.c.l.b16 %v1064
  %v1163 = vunpack.c.l.b16 %v1065
  %v1164 = vunpack.c.l.b16 %v1066
  %v1165 = vunpack.c.l.b16 %v1067
  %v1166 = vunpack.c.l.b16 %v1068
  %v1167 = vunpack.c.l.b16 %v1069
  %v1168 = vunpack.c.l.b16 %v1070
  %v1169 = vunpack.c.l.b16 %v1071
  %v1170 = vunpack.c.l.b16 %v1072
  %v1171 = vunpack.c.l.b16 %v1073
  %v1172 = vunpack.c.l.b16 %v1074
  %v1173 = vunpack.c.l.b16 %v1075
  %v1174 = vunpack.c.l.b16 %v1076
  %v1175 = vunpack.c.l.b16 %v1077
  %v1176 = vunpack.c.l.b16 %v1078
  %v1177 = vunpack.c.l.b16 %v1079
  %v1178 = vunpack.c.l.b16 %v1080
  %v1179 = vunpack.c.l.b16 %v1081
  %v1180 = vunpack.c.l.b16 %v1082
  %v1181 = vunpack.c.l.b16 %v1083
  %v1182 = vunpack.c.l.b16 %v1084
  %v1183 = vunpack.c.l.b16 %v1085
  %v1184 = vunpack.c.l.b16 %v1086
  %v1185 = vunpack.c.l.b16 %v1087
  %v1186 = vunpack.c.l.b16 %v1088
  %v1187 = vunpack.c.l.b16 %v1089
  %v1188 = vunpack.c.l.b16 %v1090
  %v1189 = vunpack.c.l.b16 %v1091
  %v1190 = vunpack.c.l.b16 %v1092
  %v1191 = vunpack.c.l.b16 %v1093
  %v1192 = vunpack.c.l.b16 %v1094
  %v1193 = vunpack.c.l.b16 %v1095
  %v1194 = vpack.c.b16 %v1146, %v1145
  %v1195 = vpack.c.b16 %v1148, %v1147
  %v1196 = vpack.c.b16 %v1150, %v1149
  %v1197 = vpack.c.b16 %v1152, %v1151
  %v1198 = vpack.c.b16 %v1154, %v1153
  %v1199 = vpack.c.b16 %v1156, %v1155
  %v1200 = vpack.c.b16 %v1158, %v1157
  %v1201 = vpack.c.b16 %v1160, %v1159
  %v1202 = vpack.c.b16 %v1162, %v1161
  %v1203 = vpack.c.b16 %v1164, %v1163
  %v1204 = vpack.c.b16 %v1166, %v1165
  %v1205 = vpack.c.b16 %v1168, %v1167
  %v1206 = vpack.c.b16 %v1170, %v1169
  %v1207 = vpack.c.b16 %v1172, %v1171
  %v1208 = vpack.c.b16 %v1174, %v1173
  %v1209 = vpack.c.b16 %v1176, %v1175
  %v1210 = vpack.c.b16 %v1178, %v1177
  %v1211 = vpack.c.b16 %v1180, %v1179
  %v1212 = vpack.c.b16 %v1182, %v1181
  %v1213 = vpack.c.b16 %v1184, %v1183
  %v1214 = vpack.c.b16 %v1186, %v1185
  %v1215 = vpack.c.b16 %v1188, %v1187
  %v1216 = vpack.c.b16 %v1190, %v1189
  %v1217 = vpack.c.b16 %v1192, %v1191
  %v1218 = vpack.c.b16 %v1193, %v1193
  %v1220 = vsel %vm202, %v1194, 0
  %v1223 = vsel %vm202, %v1195, 0
  %v1226 = vsel %vm202, %v1196, 0
  %v1229 = vsel %vm202, %v1197, 0
  %v1232 = vsel %vm202, %v1198, 0
  %v1235 = vsel %vm202, %v1199, 0
  %v1238 = vsel %vm202, %v1200, 0
  %v1241 = vsel %vm202, %v1201, 0
  %v1244 = vsel %vm202, %v1202, 0
  %v1247 = vsel %vm202, %v1203, 0
  %v1250 = vsel %vm202, %v1204, 0
  %v1253 = vsel %vm202, %v1205, 0
  %v1256 = vsel %vm202, %v1206, 0
  %v1259 = vsel %vm202, %v1207, 0
  %v1262 = vsel %vm202, %v1208, 0
  %v1265 = vsel %vm202, %v1209, 0
  %v1268 = vsel %vm202, %v1210, 0
  %v1271 = vsel %vm202, %v1211, 0
  %v1274 = vsel %vm202, %v1212, 0
  %v1277 = vsel %vm202, %v1213, 0
  %v1280 = vsel %vm202, %v1214, 0
  %v1283 = vsel %vm202, %v1215, 0
  %v1286 = vsel %vm202, %v1216, 0
  %v1289 = vsel %vm202, %v1217, 0
  %v1292 = vsel %vm202, %v1218, 0
  %1294 = vmatprep.subr.bf16.mxu0 0
  %1295 = vmatpush1.bf16.msra.mxu0 %v199
  %1296 = vmatprep.subr.bf16.mxu0 0
  %1297 = vmatpush1.bf16.msra.mxu0 %v283
  %1298 = vmatprep.subr.bf16.mxu0 0
  %1299 = vmatpush1.bf16.msra.mxu0 0
  %1300 = vmatprep.subr.bf16.mxu0 0
  %1301 = vmatpush1.bf16.msra.mxu0 0
  %1302 = vmatprep.subr.bf16.mxu0 0
  %1303 = vmatpush1.bf16.msra.mxu0 0
  %1304 = vmatprep.subr.bf16.mxu0 0
  %1305 = vmatpush1.bf16.msra.mxu0 0
  %1306 = vmatprep.subr.bf16.mxu0 0
  %1307 = vmatpush1.bf16.msra.mxu0 0
  %1308 = vmatprep.subr.bf16.mxu0 0
  %1309 = vmatpush1.bf16.msra.mxu0 0
  %1310 = vmatprep.subr.bf16.mxu0 0
  %1311 = vmatpush1.bf16.msra.mxu0 0
  %1312 = vmatprep.subr.bf16.mxu0 0
  %1313 = vmatpush1.bf16.msra.mxu0 0
  %1314 = vmatprep.subr.bf16.mxu0 0
  %1315 = vmatpush1.bf16.msra.mxu0 0
  %1316 = vmatprep.subr.bf16.mxu0 0
  %1317 = vmatpush1.bf16.msra.mxu0 0
  %1318 = vmatprep.subr.bf16.mxu0 0
  %1319 = vmatpush1.bf16.msra.mxu0 0
  %1320 = vmatprep.subr.bf16.mxu0 0
  %1321 = vmatpush1.bf16.msra.mxu0 0
  %1322 = vmatprep.subr.bf16.mxu0 0
  %1323 = vmatpush1.bf16.msra.mxu0 0
  %1324 = vmatprep.subr.bf16.mxu0 0
  %1325 = vmatpush1.bf16.msra.mxu0 0
  %1326 = vmatprep.mubr.bf16.mxu0 0
  %1327 = vmatmul.mubr.bf16.gmra.mrb[0].mxu0 %v1220
  %v1328 = vpop.f32.mrb[0].mxu0
  %v1329 = vadd.f32 0.0, %v1328
  %v1330 = vpop.f32.mrb[0].mxu0
  %v1331 = vpop.f32.mrb[0].mxu0
  %v1332 = vadd.f32 0.0, %v1331
  %v1333 = vpop.f32.mrb[0].mxu0
  %1334 = vmatprep.mubr.bf16.mxu0 0
  %1335 = vmatmul.mubr.bf16.gmra.mrb[0].mxu0 %v1223
  %v1336 = vpop.f32.mrb[0].mxu0
  %v1337 = vadd.f32 0.0, %v1336
  %v1338 = vpop.f32.mrb[0].mxu0
  %v1339 = vpop.f32.mrb[0].mxu0
  %v1340 = vadd.f32 0.0, %v1339
  %v1341 = vpop.f32.mrb[0].mxu0
  %1342 = vmatprep.mubr.bf16.mxu0 0
  %1343 = vmatmul.mubr.bf16.gmra.mrb[0].mxu0 %v1226
  %v1344 = vpop.f32.mrb[0].mxu0
  %v1345 = vadd.f32 0.0, %v1344
  %v1346 = vpop.f32.mrb[0].mxu0
  %v1347 = vpop.f32.mrb[0].mxu0
  %v1348 = vadd.f32 0.0, %v1347
  %v1349 = vpop.f32.mrb[0].mxu0
  %1350 = vmatprep.mubr.bf16.mxu0 0
  %1351 = vmatmul.mubr.bf16.gmra.mrb[0].mxu0 %v1229
  %v1352 = vpop.f32.mrb[0].mxu0
  %v1353 = vadd.f32 0.0, %v1352
  %v1354 = vpop.f32.mrb[0].mxu0
  %v1355 = vpop.f32.mrb[0].mxu0
  %v1356 = vadd.f32 0.0, %v1355
  %v1357 = vpop.f32.mrb[0].mxu0
  %1358 = vmatprep.mubr.bf16.mxu0 0
  %1359 = vmatmul.mubr.bf16.gmra.mrb[0].mxu0 %v1232
  %v1360 = vpop.f32.mrb[0].mxu0
  %v1361 = vadd.f32 0.0, %v1360
  %v1362 = vpop.f32.mrb[0].mxu0
  %v1363 = vpop.f32.mrb[0].mxu0
  %v1364 = vadd.f32 0.0, %v1363
  %v1365 = vpop.f32.mrb[0].mxu0
  %1366 = vmatprep.mubr.bf16.mxu0 0
  %1367 = vmatmul.mubr.bf16.gmra.mrb[0].mxu0 %v1235
  %v1368 = vpop.f32.mrb[0].mxu0
  %v1369 = vadd.f32 0.0, %v1368
  %v1370 = vpop.f32.mrb[0].mxu0
  %v1371 = vpop.f32.mrb[0].mxu0
  %v1372 = vadd.f32 0.0, %v1371
  %v1373 = vpop.f32.mrb[0].mxu0
  %1374 = vmatprep.mubr.bf16.mxu0 0
  %1375 = vmatmul.mubr.bf16.gmra.mrb[0].mxu0 %v1238
  %v1376 = vpop.f32.mrb[0].mxu0
  %v1377 = vadd.f32 0.0, %v1376
  %v1378 = vpop.f32.mrb[0].mxu0
  %v1379 = vpop.f32.mrb[0].mxu0
  %v1380 = vadd.f32 0.0, %v1379
  %v1381 = vpop.f32.mrb[0].mxu0
  %1382 = vmatprep.mubr.bf16.mxu0 0
  %1383 = vmatmul.mubr.bf16.gmra.mrb[0].mxu0 %v1241
  %v1384 = vpop.f32.mrb[0].mxu0
  %v1385 = vadd.f32 0.0, %v1384
  %v1386 = vpop.f32.mrb[0].mxu0
  %v1387 = vpop.f32.mrb[0].mxu0
  %v1388 = vadd.f32 0.0, %v1387
  %v1389 = vpop.f32.mrb[0].mxu0
  %1390 = vmatprep.mubr.bf16.mxu0 0
  %1391 = vmatmul.mubr.bf16.gmra.mrb[0].mxu0 %v1244
  %v1392 = vpop.f32.mrb[0].mxu0
  %v1393 = vadd.f32 0.0, %v1392
  %v1394 = vpop.f32.mrb[0].mxu0
  %v1395 = vpop.f32.mrb[0].mxu0
  %v1396 = vadd.f32 0.0, %v1395
  %v1397 = vpop.f32.mrb[0].mxu0
  %1398 = vmatprep.mubr.bf16.mxu0 0
  %1399 = vmatmul.mubr.bf16.gmra.mrb[0].mxu0 %v1247
  %v1400 = vpop.f32.mrb[0].mxu0
  %v1401 = vadd.f32 0.0, %v1400
  %v1402 = vpop.f32.mrb[0].mxu0
  %v1403 = vpop.f32.mrb[0].mxu0
  %v1404 = vadd.f32 0.0, %v1403
  %v1405 = vpop.f32.mrb[0].mxu0
  %1406 = vmatprep.mubr.bf16.mxu0 0
  %1407 = vmatmul.mubr.bf16.gmra.mrb[0].mxu0 %v1250
  %v1408 = vpop.f32.mrb[0].mxu0
  %v1409 = vadd.f32 0.0, %v1408
  %v1410 = vpop.f32.mrb[0].mxu0
  %v1411 = vpop.f32.mrb[0].mxu0
  %v1412 = vadd.f32 0.0, %v1411
  %v1413 = vpop.f32.mrb[0].mxu0
  %1414 = vmatprep.mubr.bf16.mxu0 0
  %1415 = vmatmul.mubr.bf16.gmra.mrb[0].mxu0 %v1253
  %v1416 = vpop.f32.mrb[0].mxu0
  %v1417 = vadd.f32 0.0, %v1416
  %v1418 = vpop.f32.mrb[0].mxu0
  %v1419 = vpop.f32.mrb[0].mxu0
  %v1420 = vadd.f32 0.0, %v1419
  %v1421 = vpop.f32.mrb[0].mxu0
  %1422 = vmatprep.mubr.bf16.mxu0 0
  %1423 = vmatmul.mubr.bf16.gmra.mrb[0].mxu0 %v1256
  %v1424 = vpop.f32.mrb[0].mxu0
  %v1425 = vadd.f32 0.0, %v1424
  %v1426 = vpop.f32.mrb[0].mxu0
  %v1427 = vpop.f32.mrb[0].mxu0
  %v1428 = vadd.f32 0.0, %v1427
  %v1429 = vpop.f32.mrb[0].mxu0
  %1430 = vmatprep.mubr.bf16.mxu0 0
  %1431 = vmatmul.mubr.bf16.gmra.mrb[0].mxu0 %v1259
  %v1432 = vpop.f32.mrb[0].mxu0
  %v1433 = vadd.f32 0.0, %v1432
  %v1434 = vpop.f32.mrb[0].mxu0
  %v1435 = vpop.f32.mrb[0].mxu0
  %v1436 = vadd.f32 0.0, %v1435
  %v1437 = vpop.f32.mrb[0].mxu0
  %1438 = vmatprep.mubr.bf16.mxu0 0
  %1439 = vmatmul.mubr.bf16.gmra.mrb[0].mxu0 %v1262
  %v1440 = vpop.f32.mrb[0].mxu0
  %v1441 = vadd.f32 0.0, %v1440
  %v1442 = vpop.f32.mrb[0].mxu0
  %v1443 = vpop.f32.mrb[0].mxu0
  %v1444 = vadd.f32 0.0, %v1443
  %v1445 = vpop.f32.mrb[0].mxu0
  %1446 = vmatprep.mubr.bf16.mxu0 0
  %1447 = vmatmul.mubr.bf16.gmra.mrb[0].mxu0 %v1265
  %v1448 = vpop.f32.mrb[0].mxu0
  %v1449 = vadd.f32 0.0, %v1448
  %v1450 = vpop.f32.mrb[0].mxu0
  %v1451 = vpop.f32.mrb[0].mxu0
  %v1452 = vadd.f32 0.0, %v1451
  %v1453 = vpop.f32.mrb[0].mxu0
  %1454 = vmatprep.mubr.bf16.mxu0 0
  %1455 = vmatmul.mubr.bf16.gmra.mrb[0].mxu0 %v1268
  %v1456 = vpop.f32.mrb[0].mxu0
  %v1457 = vadd.f32 0.0, %v1456
  %v1458 = vpop.f32.mrb[0].mxu0
  %v1459 = vpop.f32.mrb[0].mxu0
  %v1460 = vadd.f32 0.0, %v1459
  %v1461 = vpop.f32.mrb[0].mxu0
  %1462 = vmatprep.mubr.bf16.mxu0 0
  %1463 = vmatmul.mubr.bf16.gmra.mrb[0].mxu0 %v1271
  %v1464 = vpop.f32.mrb[0].mxu0
  %v1465 = vadd.f32 0.0, %v1464
  %v1466 = vpop.f32.mrb[0].mxu0
  %v1467 = vpop.f32.mrb[0].mxu0
  %v1468 = vadd.f32 0.0, %v1467
  %v1469 = vpop.f32.mrb[0].mxu0
  %1470 = vmatprep.mubr.bf16.mxu0 0
  %1471 = vmatmul.mubr.bf16.gmra.mrb[0].mxu0 %v1274
  %v1472 = vpop.f32.mrb[0].mxu0
  %v1473 = vadd.f32 0.0, %v1472
  %v1474 = vpop.f32.mrb[0].mxu0
  %v1475 = vpop.f32.mrb[0].mxu0
  %v1476 = vadd.f32 0.0, %v1475
  %v1477 = vpop.f32.mrb[0].mxu0
  %1478 = vmatprep.mubr.bf16.mxu0 0
  %1479 = vmatmul.mubr.bf16.gmra.mrb[0].mxu0 %v1277
  %v1480 = vpop.f32.mrb[0].mxu0
  %v1481 = vadd.f32 0.0, %v1480
  %v1482 = vpop.f32.mrb[0].mxu0
  %v1483 = vpop.f32.mrb[0].mxu0
  %v1484 = vadd.f32 0.0, %v1483
  %v1485 = vpop.f32.mrb[0].mxu0
  %1486 = vmatprep.mubr.bf16.mxu0 0
  %1487 = vmatmul.mubr.bf16.gmra.mrb[0].mxu0 %v1280
  %v1488 = vpop.f32.mrb[0].mxu0
  %v1489 = vadd.f32 0.0, %v1488
  %v1490 = vpop.f32.mrb[0].mxu0
  %v1491 = vpop.f32.mrb[0].mxu0
  %v1492 = vadd.f32 0.0, %v1491
  %v1493 = vpop.f32.mrb[0].mxu0
  %1494 = vmatprep.mubr.bf16.mxu0 0
  %1495 = vmatmul.mubr.bf16.gmra.mrb[0].mxu0 %v1283
  %v1496 = vpop.f32.mrb[0].mxu0
  %v1497 = vadd.f32 0.0, %v1496
  %v1498 = vpop.f32.mrb[0].mxu0
  %v1499 = vpop.f32.mrb[0].mxu0
  %v1500 = vadd.f32 0.0, %v1499
  %v1501 = vpop.f32.mrb[0].mxu0
  %1502 = vmatprep.mubr.bf16.mxu0 0
  %1503 = vmatmul.mubr.bf16.gmra.mrb[0].mxu0 %v1286
  %v1504 = vpop.f32.mrb[0].mxu0
  %v1505 = vadd.f32 0.0, %v1504
  %v1506 = vpop.f32.mrb[0].mxu0
  %v1507 = vpop.f32.mrb[0].mxu0
  %v1508 = vadd.f32 0.0, %v1507
  %v1509 = vpop.f32.mrb[0].mxu0
  %1510 = vmatprep.mubr.bf16.mxu0 0
  %1511 = vmatmul.mubr.bf16.gmra.mrb[0].mxu0 %v1289
  %v1512 = vpop.f32.mrb[0].mxu0
  %v1513 = vadd.f32 0.0, %v1512
  %v1514 = vpop.f32.mrb[0].mxu0
  %v1515 = vpop.f32.mrb[0].mxu0
  %v1516 = vadd.f32 0.0, %v1515
  %v1517 = vpop.f32.mrb[0].mxu0
  %1518 = vmatprep.mubr.bf16.mxu0 0
  %1519 = vmatmul.mubr.bf16.gmra.mrb[0].mxu0 %v1292
  %v1520 = vpop.f32.mrb[0].mxu0
  %v1521 = vadd.f32 0.0, %v1520
  %v1522 = vpop.f32.mrb[0].mxu0
  %v1523 = vpop.f32.mrb[0].mxu0
  %v1524 = vpop.f32.mrb[0].mxu0
  %1525 = vdwg.mxu0
  %v1526 = vmax.f32 %v997, %v1329
  %v1527 = vmax.f32 %v998, %v1332
  %v1528 = vmax.f32 %v999, %v1337
  %v1529 = vmax.f32 %v1000, %v1340
  %v1530 = vmax.f32 %v1001, %v1345
  %v1531 = vmax.f32 %v1002, %v1348
  %v1532 = vmax.f32 %v1003, %v1353
  %v1533 = vmax.f32 %v1004, %v1356
  %v1534 = vmax.f32 %v1005, %v1361
  %v1535 = vmax.f32 %v1006, %v1364
  %v1536 = vmax.f32 %v1007, %v1369
  %v1537 = vmax.f32 %v1008, %v1372
  %v1538 = vmax.f32 %v1009, %v1377
  %v1539 = vmax.f32 %v1010, %v1380
  %v1540 = vmax.f32 %v1011, %v1385
  %v1541 = vmax.f32 %v1012, %v1388
  %v1542 = vmax.f32 %v1013, %v1393
  %v1543 = vmax.f32 %v1014, %v1396
  %v1544 = vmax.f32 %v1015, %v1401
  %v1545 = vmax.f32 %v1016, %v1404
  %v1546 = vmax.f32 %v1017, %v1409
  %v1547 = vmax.f32 %v1018, %v1412
  %v1548 = vmax.f32 %v1019, %v1417
  %v1549 = vmax.f32 %v1020, %v1420
  %v1550 = vmax.f32 %v1021, %v1425
  %v1551 = vmax.f32 %v1022, %v1428
  %v1552 = vmax.f32 %v1023, %v1433
  %v1553 = vmax.f32 %v1024, %v1436
  %v1554 = vmax.f32 %v1025, %v1441
  %v1555 = vmax.f32 %v1026, %v1444
  %v1556 = vmax.f32 %v1027, %v1449
  %v1557 = vmax.f32 %v1028, %v1452
  %v1558 = vmax.f32 %v1029, %v1457
  %v1559 = vmax.f32 %v1030, %v1460
  %v1560 = vmax.f32 %v1031, %v1465
  %v1561 = vmax.f32 %v1032, %v1468
  %v1562 = vmax.f32 %v1033, %v1473
  %v1563 = vmax.f32 %v1034, %v1476
  %v1564 = vmax.f32 %v1035, %v1481
  %v1565 = vmax.f32 %v1036, %v1484
  %v1566 = vmax.f32 %v1037, %v1489
  %v1567 = vmax.f32 %v1038, %v1492
  %v1568 = vmax.f32 %v1039, %v1497
  %v1569 = vmax.f32 %v1040, %v1500
  %v1570 = vmax.f32 %v1041, %v1505
  %v1571 = vmax.f32 %v1042, %v1508
  %v1572 = vmax.f32 %v1043, %v1513
  %v1573 = vmax.f32 %v1044, %v1516
  %v1574 = vmax.f32 %v1045, %v1521
  %s1575 = scalar_lea.vmem %s0, 588
  %v1576 = vld [vmem:[%s1575] sm:$0xf]
  %v1577 = vld [vmem:[%s1575 + $0x4] sm:$0xf]
  %v1578 = vld [vmem:[%s1575 + $0x8] sm:$0xf]
  %v1579 = vld [vmem:[%s1575 + $0xc] sm:$0xf]
  %v1580 = vld [vmem:[%s1575 + $0x10] sm:$0xf]
  %v1581 = vld [vmem:[%s1575 + $0x14] sm:$0xf]
  %v1582 = vld [vmem:[%s1575 + $0x18] sm:$0xf]
  %v1583 = vld [vmem:[%s1575 + $0x1c] sm:$0xf]
  %v1584 = vld [vmem:[%s1575 + $0x20] sm:$0xf]
  %v1585 = vld [vmem:[%s1575 + $0x24] sm:$0xf]
  %v1586 = vld [vmem:[%s1575 + $0x28] sm:$0xf]
  %v1587 = vld [vmem:[%s1575 + $0x2c] sm:$0xf]
  %v1588 = vld [vmem:[%s1575 + $0x30] sm:$0xf]
  %v1589 = vld [vmem:[%s1575 + $0x34] sm:$0xf]
  %v1590 = vld [vmem:[%s1575 + $0x38] sm:$0xf]
  %v1591 = vld [vmem:[%s1575 + $0x3c] sm:$0xf]
  %v1592 = vld [vmem:[%s1575 + $0x40] sm:$0xf]
  %v1593 = vld [vmem:[%s1575 + $0x44] sm:$0xf]
  %v1594 = vld [vmem:[%s1575 + $0x48] sm:$0xf]
  %v1595 = vld [vmem:[%s1575 + $0x4c] sm:$0xf]
  %v1596 = vld [vmem:[%s1575 + $0x50] sm:$0xf]
  %v1597 = vld [vmem:[%s1575 + $0x54] sm:$0xf]
  %v1598 = vld [vmem:[%s1575 + $0x58] sm:$0xf]
  %v1599 = vld [vmem:[%s1575 + $0x5c] sm:$0xf]
  %v1600 = vld [vmem:[%s1575 + $0x60] sm:$0xf]
  %v1601 = vld [vmem:[%s1575 + $0x64] sm:$0xf]
  %v1602 = vld [vmem:[%s1575 + $0x68] sm:$0xf]
  %v1603 = vld [vmem:[%s1575 + $0x6c] sm:$0xf]
  %v1604 = vld [vmem:[%s1575 + $0x70] sm:$0xf]
  %v1605 = vld [vmem:[%s1575 + $0x74] sm:$0xf]
  %v1606 = vld [vmem:[%s1575 + $0x78] sm:$0xf]
  %v1607 = vld [vmem:[%s1575 + $0x7c] sm:$0xf]
  %v1608 = vld [vmem:[%s1575 + $0x80] sm:$0xf]
  %v1609 = vld [vmem:[%s1575 + $0x84] sm:$0xf]
  %v1610 = vld [vmem:[%s1575 + $0x88] sm:$0xf]
  %v1611 = vld [vmem:[%s1575 + $0x8c] sm:$0xf]
  %v1612 = vld [vmem:[%s1575 + $0x90] sm:$0xf]
  %v1613 = vld [vmem:[%s1575 + $0x94] sm:$0xf]
  %v1614 = vld [vmem:[%s1575 + $0x98] sm:$0xf]
  %v1615 = vld [vmem:[%s1575 + $0x9c] sm:$0xf]
  %v1616 = vld [vmem:[%s1575 + $0xa0] sm:$0xf]
  %v1617 = vld [vmem:[%s1575 + $0xa4] sm:$0xf]
  %v1618 = vld [vmem:[%s1575 + $0xa8] sm:$0xf]
  %v1619 = vld [vmem:[%s1575 + $0xac] sm:$0xf]
  %v1620 = vld [vmem:[%s1575 + $0xb0] sm:$0xf]
  %v1621 = vld [vmem:[%s1575 + $0xb4] sm:$0xf]
  %v1622 = vld [vmem:[%s1575 + $0xb8] sm:$0xf]
  %v1623 = vld [vmem:[%s1575 + $0xbc] sm:$0xf]
  %v1624 = vld [vmem:[%s1575 + $0xc0] sm:$0xf]
  %v1674 = vunpack.c.l.b16 %v1576
  %v1675 = vunpack.c.l.b16 %v1577
  %v1676 = vunpack.c.l.b16 %v1578
  %v1677 = vunpack.c.l.b16 %v1579
  %v1678 = vunpack.c.l.b16 %v1580
  %v1679 = vunpack.c.l.b16 %v1581
  %v1680 = vunpack.c.l.b16 %v1582
  %v1681 = vunpack.c.l.b16 %v1583
  %v1682 = vunpack.c.l.b16 %v1584
  %v1683 = vunpack.c.l.b16 %v1585
  %v1684 = vunpack.c.l.b16 %v1586
  %v1685 = vunpack.c.l.b16 %v1587
  %v1686 = vunpack.c.l.b16 %v1588
  %v1687 = vunpack.c.l.b16 %v1589
  %v1688 = vunpack.c.l.b16 %v1590
  %v1689 = vunpack.c.l.b16 %v1591
  %v1690 = vunpack.c.l.b16 %v1592
  %v1691 = vunpack.c.l.b16 %v1593
  %v1692 = vunpack.c.l.b16 %v1594
  %v1693 = vunpack.c.l.b16 %v1595
  %v1694 = vunpack.c.l.b16 %v1596
  %v1695 = vunpack.c.l.b16 %v1597
  %v1696 = vunpack.c.l.b16 %v1598
  %v1697 = vunpack.c.l.b16 %v1599
  %v1698 = vunpack.c.l.b16 %v1600
  %v1699 = vunpack.c.l.b16 %v1601
  %v1700 = vunpack.c.l.b16 %v1602
  %v1701 = vunpack.c.l.b16 %v1603
  %v1702 = vunpack.c.l.b16 %v1604
  %v1703 = vunpack.c.l.b16 %v1605
  %v1704 = vunpack.c.l.b16 %v1606
  %v1705 = vunpack.c.l.b16 %v1607
  %v1706 = vunpack.c.l.b16 %v1608
  %v1707 = vunpack.c.l.b16 %v1609
  %v1708 = vunpack.c.l.b16 %v1610
  %v1709 = vunpack.c.l.b16 %v1611
  %v1710 = vunpack.c.l.b16 %v1612
  %v1711 = vunpack.c.l.b16 %v1613
  %v1712 = vunpack.c.l.b16 %v1614
  %v1713 = vunpack.c.l.b16 %v1615
  %v1714 = vunpack.c.l.b16 %v1616
  %v1715 = vunpack.c.l.b16 %v1617
  %v1716 = vunpack.c.l.b16 %v1618
  %v1717 = vunpack.c.l.b16 %v1619
  %v1718 = vunpack.c.l.b16 %v1620
  %v1719 = vunpack.c.l.b16 %v1621
  %v1720 = vunpack.c.l.b16 %v1622
  %v1721 = vunpack.c.l.b16 %v1623
  %v1722 = vunpack.c.l.b16 %v1624
  %v1723 = vpack.c.b16 %v1675, %v1674
  %v1724 = vpack.c.b16 %v1677, %v1676
  %v1725 = vpack.c.b16 %v1679, %v1678
  %v1726 = vpack.c.b16 %v1681, %v1680
  %v1727 = vpack.c.b16 %v1683, %v1682
  %v1728 = vpack.c.b16 %v1685, %v1684
  %v1729 = vpack.c.b16 %v1687, %v1686
  %v1730 = vpack.c.b16 %v1689, %v1688
  %v1731 = vpack.c.b16 %v1691, %v1690
  %v1732 = vpack.c.b16 %v1693, %v1692
  %v1733 = vpack.c.b16 %v1695, %v1694
  %v1734 = vpack.c.b16 %v1697, %v1696
  %v1735 = vpack.c.b16 %v1699, %v1698
  %v1736 = vpack.c.b16 %v1701, %v1700
  %v1737 = vpack.c.b16 %v1703, %v1702
  %v1738 = vpack.c.b16 %v1705, %v1704
  %v1739 = vpack.c.b16 %v1707, %v1706
  %v1740 = vpack.c.b16 %v1709, %v1708
  %v1741 = vpack.c.b16 %v1711, %v1710
  %v1742 = vpack.c.b16 %v1713, %v1712
  %v1743 = vpack.c.b16 %v1715, %v1714
  %v1744 = vpack.c.b16 %v1717, %v1716
  %v1745 = vpack.c.b16 %v1719, %v1718
  %v1746 = vpack.c.b16 %v1721, %v1720
  %v1747 = vpack.c.b16 %v1722, %v1722
  %v1749 = vsel %vm202, %v1723, 0
  %v1752 = vsel %vm202, %v1724, 0
  %v1755 = vsel %vm202, %v1725, 0
  %v1758 = vsel %vm202, %v1726, 0
  %v1761 = vsel %vm202, %v1727, 0
  %v1764 = vsel %vm202, %v1728, 0
  %v1767 = vsel %vm202, %v1729, 0
  %v1770 = vsel %vm202, %v1730, 0
  %v1773 = vsel %vm202, %v1731, 0
  %v1776 = vsel %vm202, %v1732, 0
  %v1779 = vsel %vm202, %v1733, 0
  %v1782 = vsel %vm202, %v1734, 0
  %v1785 = vsel %vm202, %v1735, 0
  %v1788 = vsel %vm202, %v1736, 0
  %v1791 = vsel %vm202, %v1737, 0
  %v1794 = vsel %vm202, %v1738, 0
  %v1797 = vsel %vm202, %v1739, 0
  %v1800 = vsel %vm202, %v1740, 0
  %v1803 = vsel %vm202, %v1741, 0
  %v1806 = vsel %vm202, %v1742, 0
  %v1809 = vsel %vm202, %v1743, 0
  %v1812 = vsel %vm202, %v1744, 0
  %v1815 = vsel %vm202, %v1745, 0
  %v1818 = vsel %vm202, %v1746, 0
  %v1821 = vsel %vm202, %v1747, 0
  %1823 = vmatprep.subr.bf16.mxu0 0
  %1824 = vmatpush1.bf16.msra.mxu0 %v199
  %1825 = vmatprep.subr.bf16.mxu0 0
  %1826 = vmatpush1.bf16.msra.mxu0 %v283
  %1827 = vmatprep.subr.bf16.mxu0 0
  %1828 = vmatpush1.bf16.msra.mxu0 0
  %1829 = vmatprep.subr.bf16.mxu0 0
  %1830 = vmatpush1.bf16.msra.mxu0 0
  %1831 = vmatprep.subr.bf16.mxu0 0
  %1832 = vmatpush1.bf16.msra.mxu0 0
  %1833 = vmatprep.subr.bf16.mxu0 0
  %1834 = vmatpush1.bf16.msra.mxu0 0
  %1835 = vmatprep.subr.bf16.mxu0 0
  %1836 = vmatpush1.bf16.msra.mxu0 0
  %1837 = vmatprep.subr.bf16.mxu0 0
  %1838 = vmatpush1.bf16.msra.mxu0 0
  %1839 = vmatprep.subr.bf16.mxu0 0
  %1840 = vmatpush1.bf16.msra.mxu0 0
  %1841 = vmatprep.subr.bf16.mxu0 0
  %1842 = vmatpush1.bf16.msra.mxu0 0
  %1843 = vmatprep.subr.bf16.mxu0 0
  %1844 = vmatpush1.bf16.msra.mxu0 0
  %1845 = vmatprep.subr.bf16.mxu0 0
  %1846 = vmatpush1.bf16.msra.mxu0 0
  %1847 = vmatprep.subr.bf16.mxu0 0
  %1848 = vmatpush1.bf16.msra.mxu0 0
  %1849 = vmatprep.subr.bf16.mxu0 0
  %1850 = vmatpush1.bf16.msra.mxu0 0
  %1851 = vmatprep.subr.bf16.mxu0 0
  %1852 = vmatpush1.bf16.msra.mxu0 0
  %1853 = vmatprep.subr.bf16.mxu0 0
  %1854 = vmatpush1.bf16.msra.mxu0 0
  %1855 = vmatprep.mubr.bf16.mxu0 0
  %1856 = vmatmul.mubr.bf16.gmra.mrb[0].mxu0 %v1749
  %v1857 = vpop.f32.mrb[0].mxu0
  %v1858 = vadd.f32 0.0, %v1857
  %v1859 = vpop.f32.mrb[0].mxu0
  %v1860 = vpop.f32.mrb[0].mxu0
  %v1861 = vadd.f32 0.0, %v1860
  %v1862 = vpop.f32.mrb[0].mxu0
  %1863 = vmatprep.mubr.bf16.mxu0 0
  %1864 = vmatmul.mubr.bf16.gmra.mrb[0].mxu0 %v1752
  %v1865 = vpop.f32.mrb[0].mxu0
  %v1866 = vadd.f32 0.0, %v1865
  %v1867 = vpop.f32.mrb[0].mxu0
  %v1868 = vpop.f32.mrb[0].mxu0
  %v1869 = vadd.f32 0.0, %v1868
  %v1870 = vpop.f32.mrb[0].mxu0
  %1871 = vmatprep.mubr.bf16.mxu0 0
  %1872 = vmatmul.mubr.bf16.gmra.mrb[0].mxu0 %v1755
  %v1873 = vpop.f32.mrb[0].mxu0
  %v1874 = vadd.f32 0.0, %v1873
  %v1875 = vpop.f32.mrb[0].mxu0
  %v1876 = vpop.f32.mrb[0].mxu0
  %v1877 = vadd.f32 0.0, %v1876
  %v1878 = vpop.f32.mrb[0].mxu0
  %1879 = vmatprep.mubr.bf16.mxu0 0
  %1880 = vmatmul.mubr.bf16.gmra.mrb[0].mxu0 %v1758
  %v1881 = vpop.f32.mrb[0].mxu0
  %v1882 = vadd.f32 0.0, %v1881
  %v1883 = vpop.f32.mrb[0].mxu0
  %v1884 = vpop.f32.mrb[0].mxu0
  %v1885 = vadd.f32 0.0, %v1884
  %v1886 = vpop.f32.mrb[0].mxu0
  %1887 = vmatprep.mubr.bf16.mxu0 0
  %1888 = vmatmul.mubr.bf16.gmra.mrb[0].mxu0 %v1761
  %v1889 = vpop.f32.mrb[0].mxu0
  %v1890 = vadd.f32 0.0, %v1889
  %v1891 = vpop.f32.mrb[0].mxu0
  %v1892 = vpop.f32.mrb[0].mxu0
  %v1893 = vadd.f32 0.0, %v1892
  %v1894 = vpop.f32.mrb[0].mxu0
  %1895 = vmatprep.mubr.bf16.mxu0 0
  %1896 = vmatmul.mubr.bf16.gmra.mrb[0].mxu0 %v1764
  %v1897 = vpop.f32.mrb[0].mxu0
  %v1898 = vadd.f32 0.0, %v1897
  %v1899 = vpop.f32.mrb[0].mxu0
  %v1900 = vpop.f32.mrb[0].mxu0
  %v1901 = vadd.f32 0.0, %v1900
  %v1902 = vpop.f32.mrb[0].mxu0
  %1903 = vmatprep.mubr.bf16.mxu0 0
  %1904 = vmatmul.mubr.bf16.gmra.mrb[0].mxu0 %v1767
  %v1905 = vpop.f32.mrb[0].mxu0
  %v1906 = vadd.f32 0.0, %v1905
  %v1907 = vpop.f32.mrb[0].mxu0
  %v1908 = vpop.f32.mrb[0].mxu0
  %v1909 = vadd.f32 0.0, %v1908
  %v1910 = vpop.f32.mrb[0].mxu0
  %1911 = vmatprep.mubr.bf16.mxu0 0
  %1912 = vmatmul.mubr.bf16.gmra.mrb[0].mxu0 %v1770
  %v1913 = vpop.f32.mrb[0].mxu0
  %v1914 = vadd.f32 0.0, %v1913
  %v1915 = vpop.f32.mrb[0].mxu0
  %v1916 = vpop.f32.mrb[0].mxu0
  %v1917 = vadd.f32 0.0, %v1916
  %v1918 = vpop.f32.mrb[0].mxu0
  %1919 = vmatprep.mubr.bf16.mxu0 0
  %1920 = vmatmul.mubr.bf16.gmra.mrb[0].mxu0 %v1773
  %v1921 = vpop.f32.mrb[0].mxu0
  %v1922 = vadd.f32 0.0, %v1921
  %v1923 = vpop.f32.mrb[0].mxu0
  %v1924 = vpop.f32.mrb[0].mxu0
  %v1925 = vadd.f32 0.0, %v1924
  %v1926 = vpop.f32.mrb[0].mxu0
  %1927 = vmatprep.mubr.bf16.mxu0 0
  %1928 = vmatmul.mubr.bf16.gmra.mrb[0].mxu0 %v1776
  %v1929 = vpop.f32.mrb[0].mxu0
  %v1930 = vadd.f32 0.0, %v1929
  %v1931 = vpop.f32.mrb[0].mxu0
  %v1932 = vpop.f32.mrb[0].mxu0
  %v1933 = vadd.f32 0.0, %v1932
  %v1934 = vpop.f32.mrb[0].mxu0
  %1935 = vmatprep.mubr.bf16.mxu0 0
  %1936 = vmatmul.mubr.bf16.gmra.mrb[0].mxu0 %v1779
  %v1937 = vpop.f32.mrb[0].mxu0
  %v1938 = vadd.f32 0.0, %v1937
  %v1939 = vpop.f32.mrb[0].mxu0
  %v1940 = vpop.f32.mrb[0].mxu0
  %v1941 = vadd.f32 0.0, %v1940
  %v1942 = vpop.f32.mrb[0].mxu0
  %1943 = vmatprep.mubr.bf16.mxu0 0
  %1944 = vmatmul.mubr.bf16.gmra.mrb[0].mxu0 %v1782
  %v1945 = vpop.f32.mrb[0].mxu0
  %v1946 = vadd.f32 0.0, %v1945
  %v1947 = vpop.f32.mrb[0].mxu0
  %v1948 = vpop.f32.mrb[0].mxu0
  %v1949 = vadd.f32 0.0, %v1948
  %v1950 = vpop.f32.mrb[0].mxu0
  %1951 = vmatprep.mubr.bf16.mxu0 0
  %1952 = vmatmul.mubr.bf16.gmra.mrb[0].mxu0 %v1785
  %v1953 = vpop.f32.mrb[0].mxu0
  %v1954 = vadd.f32 0.0, %v1953
  %v1955 = vpop.f32.mrb[0].mxu0
  %v1956 = vpop.f32.mrb[0].mxu0
  %v1957 = vadd.f32 0.0, %v1956
  %v1958 = vpop.f32.mrb[0].mxu0
  %1959 = vmatprep.mubr.bf16.mxu0 0
  %1960 = vmatmul.mubr.bf16.gmra.mrb[0].mxu0 %v1788
  %v1961 = vpop.f32.mrb[0].mxu0
  %v1962 = vadd.f32 0.0, %v1961
  %v1963 = vpop.f32.mrb[0].mxu0
  %v1964 = vpop.f32.mrb[0].mxu0
  %v1965 = vadd.f32 0.0, %v1964
  %v1966 = vpop.f32.mrb[0].mxu0
  %1967 = vmatprep.mubr.bf16.mxu0 0
  %1968 = vmatmul.mubr.bf16.gmra.mrb[0].mxu0 %v1791
  %v1969 = vpop.f32.mrb[0].mxu0
  %v1970 = vadd.f32 0.0, %v1969
  %v1971 = vpop.f32.mrb[0].mxu0
  %v1972 = vpop.f32.mrb[0].mxu0
  %v1973 = vadd.f32 0.0, %v1972
  %v1974 = vpop.f32.mrb[0].mxu0
  %1975 = vmatprep.mubr.bf16.mxu0 0
  %1976 = vmatmul.mubr.bf16.gmra.mrb[0].mxu0 %v1794
  %v1977 = vpop.f32.mrb[0].mxu0
  %v1978 = vadd.f32 0.0, %v1977
  %v1979 = vpop.f32.mrb[0].mxu0
  %v1980 = vpop.f32.mrb[0].mxu0
  %v1981 = vadd.f32 0.0, %v1980
  %v1982 = vpop.f32.mrb[0].mxu0
  %1983 = vmatprep.mubr.bf16.mxu0 0
  %1984 = vmatmul.mubr.bf16.gmra.mrb[0].mxu0 %v1797
  %v1985 = vpop.f32.mrb[0].mxu0
  %v1986 = vadd.f32 0.0, %v1985
  %v1987 = vpop.f32.mrb[0].mxu0
  %v1988 = vpop.f32.mrb[0].mxu0
  %v1989 = vadd.f32 0.0, %v1988
  %v1990 = vpop.f32.mrb[0].mxu0
  %1991 = vmatprep.mubr.bf16.mxu0 0
  %1992 = vmatmul.mubr.bf16.gmra.mrb[0].mxu0 %v1800
  %v1993 = vpop.f32.mrb[0].mxu0
  %v1994 = vadd.f32 0.0, %v1993
  %v1995 = vpop.f32.mrb[0].mxu0
  %v1996 = vpop.f32.mrb[0].mxu0
  %v1997 = vadd.f32 0.0, %v1996
  %v1998 = vpop.f32.mrb[0].mxu0
  %1999 = vmatprep.mubr.bf16.mxu0 0
  %2000 = vmatmul.mubr.bf16.gmra.mrb[0].mxu0 %v1803
  %v2001 = vpop.f32.mrb[0].mxu0
  %v2002 = vadd.f32 0.0, %v2001
  %v2003 = vpop.f32.mrb[0].mxu0
  %v2004 = vpop.f32.mrb[0].mxu0
  %v2005 = vadd.f32 0.0, %v2004
  %v2006 = vpop.f32.mrb[0].mxu0
  %2007 = vmatprep.mubr.bf16.mxu0 0
  %2008 = vmatmul.mubr.bf16.gmra.mrb[0].mxu0 %v1806
  %v2009 = vpop.f32.mrb[0].mxu0
  %v2010 = vadd.f32 0.0, %v2009
  %v2011 = vpop.f32.mrb[0].mxu0
  %v2012 = vpop.f32.mrb[0].mxu0
  %v2013 = vadd.f32 0.0, %v2012
  %v2014 = vpop.f32.mrb[0].mxu0
  %2015 = vmatprep.mubr.bf16.mxu0 0
  %2016 = vmatmul.mubr.bf16.gmra.mrb[0].mxu0 %v1809
  %v2017 = vpop.f32.mrb[0].mxu0
  %v2018 = vadd.f32 0.0, %v2017
  %v2019 = vpop.f32.mrb[0].mxu0
  %v2020 = vpop.f32.mrb[0].mxu0
  %v2021 = vadd.f32 0.0, %v2020
  %v2022 = vpop.f32.mrb[0].mxu0
  %2023 = vmatprep.mubr.bf16.mxu0 0
  %2024 = vmatmul.mubr.bf16.gmra.mrb[0].mxu0 %v1812
  %v2025 = vpop.f32.mrb[0].mxu0
  %v2026 = vadd.f32 0.0, %v2025
  %v2027 = vpop.f32.mrb[0].mxu0
  %v2028 = vpop.f32.mrb[0].mxu0
  %v2029 = vadd.f32 0.0, %v2028
  %v2030 = vpop.f32.mrb[0].mxu0
  %2031 = vmatprep.mubr.bf16.mxu0 0
  %2032 = vmatmul.mubr.bf16.gmra.mrb[0].mxu0 %v1815
  %v2033 = vpop.f32.mrb[0].mxu0
  %v2034 = vadd.f32 0.0, %v2033
  %v2035 = vpop.f32.mrb[0].mxu0
  %v2036 = vpop.f32.mrb[0].mxu0
  %v2037 = vadd.f32 0.0, %v2036
  %v2038 = vpop.f32.mrb[0].mxu0
  %2039 = vmatprep.mubr.bf16.mxu0 0
  %2040 = vmatmul.mubr.bf16.gmra.mrb[0].mxu0 %v1818
  %v2041 = vpop.f32.mrb[0].mxu0
  %v2042 = vadd.f32 0.0, %v2041
  %v2043 = vpop.f32.mrb[0].mxu0
  %v2044 = vpop.f32.mrb[0].mxu0
  %v2045 = vadd.f32 0.0, %v2044
  %v2046 = vpop.f32.mrb[0].mxu0
  %2047 = vmatprep.mubr.bf16.mxu0 0
  %2048 = vmatmul.mubr.bf16.gmra.mrb[0].mxu0 %v1821
  %v2049 = vpop.f32.mrb[0].mxu0
  %v2050 = vadd.f32 0.0, %v2049
  %v2051 = vpop.f32.mrb[0].mxu0
  %v2052 = vpop.f32.mrb[0].mxu0
  %v2053 = vpop.f32.mrb[0].mxu0
  %2054 = vdwg.mxu0
  %v2055 = vmax.f32 %v1526, %v1858
  %v2056 = vmax.f32 %v1527, %v1861
  %v2057 = vmax.f32 %v1528, %v1866
  %v2058 = vmax.f32 %v1529, %v1869
  %v2059 = vmax.f32 %v1530, %v1874
  %v2060 = vmax.f32 %v1531, %v1877
  %v2061 = vmax.f32 %v1532, %v1882
  %v2062 = vmax.f32 %v1533, %v1885
  %v2063 = vmax.f32 %v1534, %v1890
  %v2064 = vmax.f32 %v1535, %v1893
  %v2065 = vmax.f32 %v1536, %v1898
  %v2066 = vmax.f32 %v1537, %v1901
  %v2067 = vmax.f32 %v1538, %v1906
  %v2068 = vmax.f32 %v1539, %v1909
  %v2069 = vmax.f32 %v1540, %v1914
  %v2070 = vmax.f32 %v1541, %v1917
  %v2071 = vmax.f32 %v1542, %v1922
  %v2072 = vmax.f32 %v1543, %v1925
  %v2073 = vmax.f32 %v1544, %v1930
  %v2074 = vmax.f32 %v1545, %v1933
  %v2075 = vmax.f32 %v1546, %v1938
  %v2076 = vmax.f32 %v1547, %v1941
  %v2077 = vmax.f32 %v1548, %v1946
  %v2078 = vmax.f32 %v1549, %v1949
  %v2079 = vmax.f32 %v1550, %v1954
  %v2080 = vmax.f32 %v1551, %v1957
  %v2081 = vmax.f32 %v1552, %v1962
  %v2082 = vmax.f32 %v1553, %v1965
  %v2083 = vmax.f32 %v1554, %v1970
  %v2084 = vmax.f32 %v1555, %v1973
  %v2085 = vmax.f32 %v1556, %v1978
  %v2086 = vmax.f32 %v1557, %v1981
  %v2087 = vmax.f32 %v1558, %v1986
  %v2088 = vmax.f32 %v1559, %v1989
  %v2089 = vmax.f32 %v1560, %v1994
  %v2090 = vmax.f32 %v1561, %v1997
  %v2091 = vmax.f32 %v1562, %v2002
  %v2092 = vmax.f32 %v1563, %v2005
  %v2093 = vmax.f32 %v1564, %v2010
  %v2094 = vmax.f32 %v1565, %v2013
  %v2095 = vmax.f32 %v1566, %v2018
  %v2096 = vmax.f32 %v1567, %v2021
  %v2097 = vmax.f32 %v1568, %v2026
  %v2098 = vmax.f32 %v1569, %v2029
  %v2099 = vmax.f32 %v1570, %v2034
  %v2100 = vmax.f32 %v1571, %v2037
  %v2101 = vmax.f32 %v1572, %v2042
  %v2102 = vmax.f32 %v1573, %v2045
  %v2103 = vmax.f32 %v1574, %v2050
  %v2104 = vld [vmem:[%s2] sm:$0x1]
  %v2106 = vlaneseq
  %v2107 = vshrl.u32 %v2106, 7
  %v2108 = vsub.s32 0, %v2107
  %v2109 = vrot.slane %v2104, %v2108
  %v2111 = vadd.f32 %v2055, %v2109
  %v2112 = vadd.f32 %v2056, %v2109
  %v2113 = vadd.f32 %v2057, %v2109
  %v2114 = vadd.f32 %v2058, %v2109
  %v2115 = vadd.f32 %v2059, %v2109
  %v2116 = vadd.f32 %v2060, %v2109
  %v2117 = vadd.f32 %v2061, %v2109
  %v2118 = vadd.f32 %v2062, %v2109
  %v2119 = vadd.f32 %v2063, %v2109
  %v2120 = vadd.f32 %v2064, %v2109
  %v2121 = vadd.f32 %v2065, %v2109
  %v2122 = vadd.f32 %v2066, %v2109
  %v2123 = vadd.f32 %v2067, %v2109
  %v2124 = vadd.f32 %v2068, %v2109
  %v2125 = vadd.f32 %v2069, %v2109
  %v2126 = vadd.f32 %v2070, %v2109
  %v2127 = vadd.f32 %v2071, %v2109
  %v2128 = vadd.f32 %v2072, %v2109
  %v2129 = vadd.f32 %v2073, %v2109
  %v2130 = vadd.f32 %v2074, %v2109
  %v2131 = vadd.f32 %v2075, %v2109
  %v2132 = vadd.f32 %v2076, %v2109
  %v2133 = vadd.f32 %v2077, %v2109
  %v2134 = vadd.f32 %v2078, %v2109
  %v2135 = vadd.f32 %v2079, %v2109
  %v2136 = vadd.f32 %v2080, %v2109
  %v2137 = vadd.f32 %v2081, %v2109
  %v2138 = vadd.f32 %v2082, %v2109
  %v2139 = vadd.f32 %v2083, %v2109
  %v2140 = vadd.f32 %v2084, %v2109
  %v2141 = vadd.f32 %v2085, %v2109
  %v2142 = vadd.f32 %v2086, %v2109
  %v2143 = vadd.f32 %v2087, %v2109
  %v2144 = vadd.f32 %v2088, %v2109
  %v2145 = vadd.f32 %v2089, %v2109
  %v2146 = vadd.f32 %v2090, %v2109
  %v2147 = vadd.f32 %v2091, %v2109
  %v2148 = vadd.f32 %v2092, %v2109
  %v2149 = vadd.f32 %v2093, %v2109
  %v2150 = vadd.f32 %v2094, %v2109
  %v2151 = vadd.f32 %v2095, %v2109
  %v2152 = vadd.f32 %v2096, %v2109
  %v2153 = vadd.f32 %v2097, %v2109
  %v2154 = vadd.f32 %v2098, %v2109
  %v2155 = vadd.f32 %v2099, %v2109
  %v2156 = vadd.f32 %v2100, %v2109
  %v2157 = vadd.f32 %v2101, %v2109
  %v2158 = vadd.f32 %v2102, %v2109
  %v2159 = vadd.f32 %v2103, %v2109
  %v2160 = vmax.f32 %v2111, 0.0
  %v2161 = vmax.f32 %v2112, 0.0
  %v2162 = vmax.f32 %v2113, 0.0
  %v2163 = vmax.f32 %v2114, 0.0
  %v2164 = vmax.f32 %v2115, 0.0
  %v2165 = vmax.f32 %v2116, 0.0
  %v2166 = vmax.f32 %v2117, 0.0
  %v2167 = vmax.f32 %v2118, 0.0
  %v2168 = vmax.f32 %v2119, 0.0
  %v2169 = vmax.f32 %v2120, 0.0
  %v2170 = vmax.f32 %v2121, 0.0
  %v2171 = vmax.f32 %v2122, 0.0
  %v2172 = vmax.f32 %v2123, 0.0
  %v2173 = vmax.f32 %v2124, 0.0
  %v2174 = vmax.f32 %v2125, 0.0
  %v2175 = vmax.f32 %v2126, 0.0
  %v2176 = vmax.f32 %v2127, 0.0
  %v2177 = vmax.f32 %v2128, 0.0
  %v2178 = vmax.f32 %v2129, 0.0
  %v2179 = vmax.f32 %v2130, 0.0
  %v2180 = vmax.f32 %v2131, 0.0
  %v2181 = vmax.f32 %v2132, 0.0
  %v2182 = vmax.f32 %v2133, 0.0
  %v2183 = vmax.f32 %v2134, 0.0
  %v2184 = vmax.f32 %v2135, 0.0
  %v2185 = vmax.f32 %v2136, 0.0
  %v2186 = vmax.f32 %v2137, 0.0
  %v2187 = vmax.f32 %v2138, 0.0
  %v2188 = vmax.f32 %v2139, 0.0
  %v2189 = vmax.f32 %v2140, 0.0
  %v2190 = vmax.f32 %v2141, 0.0
  %v2191 = vmax.f32 %v2142, 0.0
  %v2192 = vmax.f32 %v2143, 0.0
  %v2193 = vmax.f32 %v2144, 0.0
  %v2194 = vmax.f32 %v2145, 0.0
  %v2195 = vmax.f32 %v2146, 0.0
  %v2196 = vmax.f32 %v2147, 0.0
  %v2197 = vmax.f32 %v2148, 0.0
  %v2198 = vmax.f32 %v2149, 0.0
  %v2199 = vmax.f32 %v2150, 0.0
  %v2200 = vmax.f32 %v2151, 0.0
  %v2201 = vmax.f32 %v2152, 0.0
  %v2202 = vmax.f32 %v2153, 0.0
  %v2203 = vmax.f32 %v2154, 0.0
  %v2204 = vmax.f32 %v2155, 0.0
  %v2205 = vmax.f32 %v2156, 0.0
  %v2206 = vmax.f32 %v2157, 0.0
  %v2207 = vmax.f32 %v2158, 0.0
  %v2208 = vmax.f32 %v2159, 0.0
  %vm2209 = vcmask 130048
  %2210 = vst.msk [vmem:[%s3] sm:$0xff] %vm2209, %v2160
  %2211 = vst.msk [vmem:[%s3 + $0x8] sm:$0xff] %vm2209, %v2161
  %2212 = vst.msk [vmem:[%s3 + $0x10] sm:$0xff] %vm2209, %v2162
  %2213 = vst.msk [vmem:[%s3 + $0x18] sm:$0xff] %vm2209, %v2163
  %2214 = vst.msk [vmem:[%s3 + $0x20] sm:$0xff] %vm2209, %v2164
  %2215 = vst.msk [vmem:[%s3 + $0x28] sm:$0xff] %vm2209, %v2165
  %2216 = vst.msk [vmem:[%s3 + $0x30] sm:$0xff] %vm2209, %v2166
  %2217 = vst.msk [vmem:[%s3 + $0x38] sm:$0xff] %vm2209, %v2167
  %2218 = vst.msk [vmem:[%s3 + $0x40] sm:$0xff] %vm2209, %v2168
  %2219 = vst.msk [vmem:[%s3 + $0x48] sm:$0xff] %vm2209, %v2169
  %2220 = vst.msk [vmem:[%s3 + $0x50] sm:$0xff] %vm2209, %v2170
  %2221 = vst.msk [vmem:[%s3 + $0x58] sm:$0xff] %vm2209, %v2171
  %2222 = vst.msk [vmem:[%s3 + $0x60] sm:$0xff] %vm2209, %v2172
  %2223 = vst.msk [vmem:[%s3 + $0x68] sm:$0xff] %vm2209, %v2173
  %2224 = vst.msk [vmem:[%s3 + $0x70] sm:$0xff] %vm2209, %v2174
  %2225 = vst.msk [vmem:[%s3 + $0x78] sm:$0xff] %vm2209, %v2175
  %2226 = vst.msk [vmem:[%s3 + $0x80] sm:$0xff] %vm2209, %v2176
  %2227 = vst.msk [vmem:[%s3 + $0x88] sm:$0xff] %vm2209, %v2177
  %2228 = vst.msk [vmem:[%s3 + $0x90] sm:$0xff] %vm2209, %v2178
  %2229 = vst.msk [vmem:[%s3 + $0x98] sm:$0xff] %vm2209, %v2179
  %2230 = vst.msk [vmem:[%s3 + $0xa0] sm:$0xff] %vm2209, %v2180
  %2231 = vst.msk [vmem:[%s3 + $0xa8] sm:$0xff] %vm2209, %v2181
  %2232 = vst.msk [vmem:[%s3 + $0xb0] sm:$0xff] %vm2209, %v2182
  %2233 = vst.msk [vmem:[%s3 + $0xb8] sm:$0xff] %vm2209, %v2183
  %2234 = vst.msk [vmem:[%s3 + $0xc0] sm:$0xff] %vm2209, %v2184
  %2235 = vst.msk [vmem:[%s3 + $0xc8] sm:$0xff] %vm2209, %v2185
  %2236 = vst.msk [vmem:[%s3 + $0xd0] sm:$0xff] %vm2209, %v2186
  %2237 = vst.msk [vmem:[%s3 + $0xd8] sm:$0xff] %vm2209, %v2187
  %2238 = vst.msk [vmem:[%s3 + $0xe0] sm:$0xff] %vm2209, %v2188
  %2239 = vst.msk [vmem:[%s3 + $0xe8] sm:$0xff] %vm2209, %v2189
  %2240 = vst.msk [vmem:[%s3 + $0xf0] sm:$0xff] %vm2209, %v2190
  %2241 = vst.msk [vmem:[%s3 + $0xf8] sm:$0xff] %vm2209, %v2191
  %2242 = vst.msk [vmem:[%s3 + $0x100] sm:$0xff] %vm2209, %v2192
  %2243 = vst.msk [vmem:[%s3 + $0x108] sm:$0xff] %vm2209, %v2193
  %2244 = vst.msk [vmem:[%s3 + $0x110] sm:$0xff] %vm2209, %v2194
  %2245 = vst.msk [vmem:[%s3 + $0x118] sm:$0xff] %vm2209, %v2195
  %2246 = vst.msk [vmem:[%s3 + $0x120] sm:$0xff] %vm2209, %v2196
  %2247 = vst.msk [vmem:[%s3 + $0x128] sm:$0xff] %vm2209, %v2197
  %2248 = vst.msk [vmem:[%s3 + $0x130] sm:$0xff] %vm2209, %v2198
  %2249 = vst.msk [vmem:[%s3 + $0x138] sm:$0xff] %vm2209, %v2199
  %2250 = vst.msk [vmem:[%s3 + $0x140] sm:$0xff] %vm2209, %v2200
  %2251 = vst.msk [vmem:[%s3 + $0x148] sm:$0xff] %vm2209, %v2201
  %2252 = vst.msk [vmem:[%s3 + $0x150] sm:$0xff] %vm2209, %v2202
  %2253 = vst.msk [vmem:[%s3 + $0x158] sm:$0xff] %vm2209, %v2203
  %2254 = vst.msk [vmem:[%s3 + $0x160] sm:$0xff] %vm2209, %v2204
  %2255 = vst.msk [vmem:[%s3 + $0x168] sm:$0xff] %vm2209, %v2205
  %2256 = vst.msk [vmem:[%s3 + $0x170] sm:$0xff] %vm2209, %v2206
  %2257 = vst.msk [vmem:[%s3 + $0x178] sm:$0xff] %vm2209, %v2207
  %2258 = vst.msk [vmem:[%s3 + $0x180] sm:$0xff] %vm2209, %v2208
  // Predicated region
  $region14: #{cnn_forward.3} parent=0 // pred_check
    _
  $region15: #{cnn_forward.3} parent=0 // pred_check_branch
    %2260 = sbr.rel (0) target = $region17
  $region16: #{cnn_forward.3} parent=0 // pred_region
    _
  $region17: #{cnn_forward.3} parent=0 // pred_fallthru
    _
  // Predicated region
  $region18: #{cnn_forward.3} parent=0 // pred_check
    _
  $region19: #{cnn_forward.3} parent=0 // pred_check_branch
    %2262 = sbr.rel (0) target = $region21
  $region20: #{cnn_forward.3} parent=0 // pred_region
    _
  $region21: #{cnn_forward.3} parent=0 // pred_fallthru
    _

// kernel: cnn_forward.4
$region0: #{cnn_forward.4}
  #allocation0 [shape = 'u32[]', space=smem, size = 0x4, offset = 0x4, fixed_abs, tag = 'smem constant byte address 0x4 - core index']
  #allocation1 [shape = 'u32[144,128]{1,0:T(1,128)}', space=vmem, size = 0x12000, scoped, tag = 'internal scratch']
  %s0 = inlined_call_operand.vmem [shape: bf16[4,104,400], index: 0, kind: input, shape index: {}]
  %s1 = inlined_call_operand.vmem [shape: bf16[400,64], index: 1, kind: input, shape index: {}]
  %s2 = inlined_call_operand.vmem [shape: f32[1,64], index: 2, kind: input, shape index: {}]
  %s3 = inlined_call_operand.vmem [shape: f32[104,64], index: 3, kind: output, shape index: {}]
  %s4 = sld [smem:[#allocation0]]
  $region22: #{cnn_forward.4} parent=0
    _
  %s6 = ssub.s32 1, %s4
  %s7 = scalar_select 0, %s6, %s4
  // Predicated region
  $region2: #{cnn_forward.4} parent=0 // pred_check
    _
  $region3: #{cnn_forward.4} parent=0 // pred_check_branch
    %9 = sbr.rel (0) target = $region5
  $region4: #{cnn_forward.4} parent=0 // pred_region
    _
  $region5: #{cnn_forward.4} parent=0 // pred_fallthru
    _
  // Predicated region
  $region6: #{cnn_forward.4} parent=0 // pred_check
    _
  $region7: #{cnn_forward.4} parent=0 // pred_check_branch
    %11 = sbr.rel (0) target = $region9
  $region8: #{cnn_forward.4} parent=0 // pred_region
    _
  $region9: #{cnn_forward.4} parent=0 // pred_fallthru
    _
  // Predicated region
  $region10: #{cnn_forward.4} parent=0 // pred_check
    _
  $region11: #{cnn_forward.4} parent=0 // pred_check_branch
    %13 = sbr.rel (0) target = $region13
  $region12: #{cnn_forward.4} parent=0 // pred_region
    _
  $region13: #{cnn_forward.4} parent=0 // pred_fallthru
    _
  %v15 = vld [vmem:[%s1] sm:$0xf]
  %v16 = vld [vmem:[%s1 + $0x4] sm:$0xf]
  %v17 = vld [vmem:[%s1 + $0x8] sm:$0xf]
  %v18 = vld [vmem:[%s1 + $0xc] sm:$0xf]
  %v19 = vld [vmem:[%s1 + $0x10] sm:$0xf]
  %v20 = vld [vmem:[%s1 + $0x14] sm:$0xf]
  %v21 = vld [vmem:[%s1 + $0x18] sm:$0xf]
  %v22 = vld [vmem:[%s1 + $0x1c] sm:$0xf]
  %v23 = vld [vmem:[%s1 + $0x20] sm:$0xf]
  %v24 = vld [vmem:[%s1 + $0x24] sm:$0xf]
  %v25 = vld [vmem:[%s1 + $0x28] sm:$0xf]
  %v26 = vld [vmem:[%s1 + $0x2c] sm:$0xf]
  %v27 = vld [vmem:[%s1 + $0x30] sm:$0xf]
  %v28 = vld [vmem:[%s1 + $0x34] sm:$0xf]
  %v29 = vld [vmem:[%s1 + $0x38] sm:$0xf]
  %v30 = vld [vmem:[%s1 + $0x3c] sm:$0xf]
  %v31 = vld [vmem:[%s1 + $0x40] sm:$0xf]
  %v32 = vld [vmem:[%s1 + $0x44] sm:$0xf]
  %v33 = vld [vmem:[%s1 + $0x48] sm:$0xf]
  %v34 = vld [vmem:[%s1 + $0x4c] sm:$0xf]
  %v35 = vld [vmem:[%s1 + $0x50] sm:$0xf]
  %v36 = vld [vmem:[%s1 + $0x54] sm:$0xf]
  %v37 = vld [vmem:[%s1 + $0x58] sm:$0xf]
  %v38 = vld [vmem:[%s1 + $0x5c] sm:$0xf]
  %v39 = vld [vmem:[%s1 + $0x60] sm:$0xf]
  %v40 = vld [vmem:[%s1 + $0x64] sm:$0xf]
  %v41 = vld [vmem:[%s1 + $0x68] sm:$0xf]
  %v42 = vld [vmem:[%s1 + $0x6c] sm:$0xf]
  %v43 = vld [vmem:[%s1 + $0x70] sm:$0xf]
  %v44 = vld [vmem:[%s1 + $0x74] sm:$0xf]
  %v45 = vld [vmem:[%s1 + $0x78] sm:$0xf]
  %v46 = vld [vmem:[%s1 + $0x7c] sm:$0xf]
  %v47 = vld [vmem:[%s1 + $0x80] sm:$0xf]
  %v48 = vld [vmem:[%s1 + $0x84] sm:$0xf]
  %v49 = vld [vmem:[%s1 + $0x88] sm:$0xf]
  %v50 = vld [vmem:[%s1 + $0x8c] sm:$0xf]
  %v51 = vld [vmem:[%s1 + $0x90] sm:$0xf]
  %v52 = vld [vmem:[%s1 + $0x94] sm:$0xf]
  %v53 = vld [vmem:[%s1 + $0x98] sm:$0xf]
  %v54 = vld [vmem:[%s1 + $0x9c] sm:$0xf]
  %v55 = vld [vmem:[%s1 + $0xa0] sm:$0xf]
  %v56 = vld [vmem:[%s1 + $0xa4] sm:$0xf]
  %v57 = vld [vmem:[%s1 + $0xa8] sm:$0xf]
  %v58 = vld [vmem:[%s1 + $0xac] sm:$0xf]
  %v59 = vld [vmem:[%s1 + $0xb0] sm:$0xf]
  %v60 = vld [vmem:[%s1 + $0xb4] sm:$0xf]
  %v61 = vld [vmem:[%s1 + $0xb8] sm:$0xf]
  %v62 = vld [vmem:[%s1 + $0xbc] sm:$0xf]
  %v63 = vld [vmem:[%s1 + $0xc0] sm:$0xf]
  %v64 = vld [vmem:[%s1 + $0xc4] sm:$0xf]
  %v65 = vld [vmem:[%s0] sm:$0xff]
  %v66 = vld [vmem:[%s0 + $0x8] sm:$0xff]
  %v67 = vld [vmem:[%s0 + $0x10] sm:$0xff]
  %v68 = vld [vmem:[%s0 + $0x18] sm:$0xff]
  %v69 = vld [vmem:[%s0 + $0x20] sm:$0xff]
  %v70 = vld [vmem:[%s0 + $0x28] sm:$0xff]
  %v71 = vld [vmem:[%s0 + $0x30] sm:$0xff]
  %v72 = vld [vmem:[%s0 + $0x38] sm:$0xff]
  %v73 = vld [vmem:[%s0 + $0x40] sm:$0xff]
  %v74 = vld [vmem:[%s0 + $0x48] sm:$0xff]
  %v75 = vld [vmem:[%s0 + $0x50] sm:$0xff]
  %v76 = vld [vmem:[%s0 + $0x58] sm:$0xff]
  %v77 = vld [vmem:[%s0 + $0x60] sm:$0xff]
  %v78 = vld [vmem:[%s0 + $0x68] sm:$0xff]
  %v79 = vld [vmem:[%s0 + $0x70] sm:$0xff]
  %v80 = vld [vmem:[%s0 + $0x78] sm:$0xff]
  %v81 = vld [vmem:[%s0 + $0x80] sm:$0xff]
  %v82 = vld [vmem:[%s0 + $0x88] sm:$0xff]
  %v83 = vld [vmem:[%s0 + $0x90] sm:$0xff]
  %v84 = vld [vmem:[%s0 + $0x98] sm:$0xff]
  %v85 = vld [vmem:[%s0 + $0xa0] sm:$0xff]
  %v86 = vld [vmem:[%s0 + $0xa8] sm:$0xff]
  %v87 = vld [vmem:[%s0 + $0xb0] sm:$0xff]
  %v88 = vld [vmem:[%s0 + $0xb8] sm:$0xff]
  %v89 = vld [vmem:[%s0 + $0xc0] sm:$0xff]
  %v90 = vld [vmem:[%s0 + $0xc8] sm:$0xff]
  %v117 = vunpack.c.l.b16 %v65
  %v118 = vunpack.c.h.b16 %v65
  %v119 = vunpack.c.l.b16 %v66
  %v120 = vunpack.c.h.b16 %v66
  %v121 = vunpack.c.l.b16 %v67
  %v122 = vunpack.c.h.b16 %v67
  %v123 = vunpack.c.l.b16 %v68
  %v124 = vunpack.c.h.b16 %v68
  %v125 = vunpack.c.l.b16 %v69
  %v126 = vunpack.c.h.b16 %v69
  %v127 = vunpack.c.l.b16 %v70
  %v128 = vunpack.c.h.b16 %v70
  %v129 = vunpack.c.l.b16 %v71
  %v130 = vunpack.c.h.b16 %v71
  %v131 = vunpack.c.l.b16 %v72
  %v132 = vunpack.c.h.b16 %v72
  %v133 = vunpack.c.l.b16 %v73
  %v134 = vunpack.c.h.b16 %v73
  %v135 = vunpack.c.l.b16 %v74
  %v136 = vunpack.c.h.b16 %v74
  %v137 = vunpack.c.l.b16 %v75
  %v138 = vunpack.c.h.b16 %v75
  %v139 = vunpack.c.l.b16 %v76
  %v140 = vunpack.c.h.b16 %v76
  %v141 = vunpack.c.l.b16 %v77
  %v142 = vunpack.c.h.b16 %v77
  %v143 = vunpack.c.l.b16 %v78
  %v144 = vunpack.c.h.b16 %v78
  %v145 = vunpack.c.l.b16 %v79
  %v146 = vunpack.c.h.b16 %v79
  %v147 = vunpack.c.l.b16 %v80
  %v148 = vunpack.c.h.b16 %v80
  %v149 = vunpack.c.l.b16 %v81
  %v150 = vunpack.c.h.b16 %v81
  %v151 = vunpack.c.l.b16 %v82
  %v152 = vunpack.c.h.b16 %v82
  %v153 = vunpack.c.l.b16 %v83
  %v154 = vunpack.c.h.b16 %v83
  %v155 = vunpack.c.l.b16 %v84
  %v156 = vunpack.c.h.b16 %v84
  %v157 = vunpack.c.l.b16 %v85
  %v158 = vunpack.c.h.b16 %v85
  %v159 = vunpack.c.l.b16 %v86
  %v160 = vunpack.c.h.b16 %v86
  %v161 = vunpack.c.l.b16 %v87
  %v162 = vunpack.c.h.b16 %v87
  %v163 = vunpack.c.l.b16 %v88
  %v164 = vunpack.c.h.b16 %v88
  %v165 = vunpack.c.l.b16 %v89
  %v166 = vunpack.c.h.b16 %v89
  %v167 = vunpack.c.l.b16 %v90
  %v168 = vunpack.c.h.b16 %v90
  %v169 = vpack.c.b16 %v121, %v117
  %v170 = vpack.c.b16 %v122, %v118
  %v171 = vpack.c.b16 %v123, %v119
  %v172 = vpack.c.b16 %v124, %v120
  %v173 = vpack.c.b16 %v129, %v125
  %v174 = vpack.c.b16 %v130, %v126
  %v175 = vpack.c.b16 %v131, %v127
  %v176 = vpack.c.b16 %v132, %v128
  %v177 = vpack.c.b16 %v137, %v133
  %v178 = vpack.c.b16 %v138, %v134
  %v179 = vpack.c.b16 %v139, %v135
  %v180 = vpack.c.b16 %v140, %v136
  %v181 = vpack.c.b16 %v145, %v141
  %v182 = vpack.c.b16 %v146, %v142
  %v183 = vpack.c.b16 %v147, %v143
  %v184 = vpack.c.b16 %v148, %v144
  %v185 = vpack.c.b16 %v153, %v149
  %v186 = vpack.c.b16 %v154, %v150
  %v187 = vpack.c.b16 %v155, %v151
  %v188 = vpack.c.b16 %v156, %v152
  %v189 = vpack.c.b16 %v161, %v157
  %v190 = vpack.c.b16 %v162, %v158
  %v191 = vpack.c.b16 %v163, %v159
  %v192 = vpack.c.b16 %v164, %v160
  %v193 = vpack.c.b16 %v165, %v165
  %v194 = vpack.c.b16 %v166, %v166
  %v195 = vpack.c.b16 %v167, %v167
  %v196 = vpack.c.b16 %v168, %v168
  %v268 = vunpack.c.l.b16 %v15
  %v269 = vunpack.c.l.b16 %v16
  %v270 = vunpack.c.l.b16 %v17
  %v271 = vunpack.c.l.b16 %v18
  %v272 = vunpack.c.l.b16 %v19
  %v273 = vunpack.c.l.b16 %v20
  %v274 = vunpack.c.l.b16 %v21
  %v275 = vunpack.c.l.b16 %v22
  %v276 = vunpack.c.l.b16 %v23
  %v277 = vunpack.c.l.b16 %v24
  %v278 = vunpack.c.l.b16 %v25
  %v279 = vunpack.c.l.b16 %v26
  %v280 = vunpack.c.l.b16 %v27
  %v281 = vunpack.c.l.b16 %v28
  %v282 = vunpack.c.l.b16 %v29
  %v283 = vunpack.c.l.b16 %v30
  %v284 = vunpack.c.l.b16 %v31
  %v285 = vunpack.c.l.b16 %v32
  %v286 = vunpack.c.l.b16 %v33
  %v287 = vunpack.c.l.b16 %v34
  %v288 = vunpack.c.l.b16 %v35
  %v289 = vunpack.c.l.b16 %v36
  %v290 = vunpack.c.l.b16 %v37
  %v291 = vunpack.c.l.b16 %v38
  %v292 = vunpack.c.l.b16 %v39
  %v293 = vunpack.c.l.b16 %v40
  %v294 = vunpack.c.l.b16 %v41
  %v295 = vunpack.c.l.b16 %v42
  %v296 = vunpack.c.l.b16 %v43
  %v297 = vunpack.c.l.b16 %v44
  %v298 = vunpack.c.l.b16 %v45
  %v299 = vunpack.c.l.b16 %v46
  %v300 = vunpack.c.l.b16 %v47
  %v301 = vunpack.c.l.b16 %v48
  %v302 = vunpack.c.l.b16 %v49
  %v303 = vunpack.c.l.b16 %v50
  %v304 = vunpack.c.l.b16 %v51
  %v305 = vunpack.c.l.b16 %v52
  %v306 = vunpack.c.l.b16 %v53
  %v307 = vunpack.c.l.b16 %v54
  %v308 = vunpack.c.l.b16 %v55
  %v309 = vunpack.c.l.b16 %v56
  %v310 = vunpack.c.l.b16 %v57
  %v311 = vunpack.c.l.b16 %v58
  %v312 = vunpack.c.l.b16 %v59
  %v313 = vunpack.c.l.b16 %v60
  %v314 = vunpack.c.l.b16 %v61
  %v315 = vunpack.c.l.b16 %v62
  %v316 = vunpack.c.l.b16 %v63
  %v317 = vunpack.c.l.b16 %v64
  %v318 = vpack.c.b16 %v269, %v268
  %v319 = vpack.c.b16 %v271, %v270
  %v320 = vpack.c.b16 %v273, %v272
  %v321 = vpack.c.b16 %v275, %v274
  %v322 = vpack.c.b16 %v277, %v276
  %v323 = vpack.c.b16 %v279, %v278
  %v324 = vpack.c.b16 %v281, %v280
  %v325 = vpack.c.b16 %v283, %v282
  %v326 = vpack.c.b16 %v285, %v284
  %v327 = vpack.c.b16 %v287, %v286
  %v328 = vpack.c.b16 %v289, %v288
  %v329 = vpack.c.b16 %v291, %v290
  %v330 = vpack.c.b16 %v293, %v292
  %v331 = vpack.c.b16 %v295, %v294
  %v332 = vpack.c.b16 %v297, %v296
  %v333 = vpack.c.b16 %v299, %v298
  %v334 = vpack.c.b16 %v301, %v300
  %v335 = vpack.c.b16 %v303, %v302
  %v336 = vpack.c.b16 %v305, %v304
  %v337 = vpack.c.b16 %v307, %v306
  %v338 = vpack.c.b16 %v309, %v308
  %v339 = vpack.c.b16 %v311, %v310
  %v340 = vpack.c.b16 %v313, %v312
  %v341 = vpack.c.b16 %v315, %v314
  %v342 = vpack.c.b16 %v317, %v316
  %vm368 = vcmask 130048
  %v370 = vsel %vm368, %v172, 0
  %v373 = vsel %vm368, %v176, 0
  %v376 = vsel %vm368, %v180, 0
  %v379 = vsel %vm368, %v184, 0
  %v382 = vsel %vm368, %v188, 0
  %v385 = vsel %vm368, %v192, 0
  %v388 = vsel %vm368, %v196, 0
  %390 = vmatprep.subr.bf16.mxu0 0
  %391 = vmatpush1.bf16.msra.mxu0 %v318
  %392 = vmatprep.subr.bf16.mxu0 0
  %393 = vmatpush1.bf16.msra.mxu0 %v319
  %394 = vmatprep.subr.bf16.mxu0 0
  %395 = vmatpush1.bf16.msra.mxu0 %v320
  %396 = vmatprep.subr.bf16.mxu0 0
  %397 = vmatpush1.bf16.msra.mxu0 %v321
  %398 = vmatprep.subr.bf16.mxu0 0
  %399 = vmatpush1.bf16.msra.mxu0 %v322
  %400 = vmatprep.subr.bf16.mxu0 0
  %401 = vmatpush1.bf16.msra.mxu0 %v323
  %402 = vmatprep.subr.bf16.mxu0 0
  %403 = vmatpush1.bf16.msra.mxu0 %v324
  %404 = vmatprep.subr.bf16.mxu0 0
  %405 = vmatpush1.bf16.msra.mxu0 %v325
  %406 = vmatprep.subr.bf16.mxu0 0
  %407 = vmatpush1.bf16.msra.mxu0 %v326
  %408 = vmatprep.subr.bf16.mxu0 0
  %409 = vmatpush1.bf16.msra.mxu0 %v327
  %410 = vmatprep.subr.bf16.mxu0 0
  %411 = vmatpush1.bf16.msra.mxu0 %v328
  %412 = vmatprep.subr.bf16.mxu0 0
  %413 = vmatpush1.bf16.msra.mxu0 %v329
  %414 = vmatprep.subr.bf16.mxu0 0
  %415 = vmatpush1.bf16.msra.mxu0 %v330
  %416 = vmatprep.subr.bf16.mxu0 0
  %417 = vmatpush1.bf16.msra.mxu0 %v331
  %418 = vmatprep.subr.bf16.mxu0 0
  %419 = vmatpush1.bf16.msra.mxu0 %v332
  %420 = vmatprep.subr.bf16.mxu0 0
  %421 = vmatpush1.bf16.msra.mxu0 %v333
  %422 = vmatprep.mubr.bf16.mxu0 %v170
  %423 = vmatmul.mubr.bf16.gmra.mrb[0].mxu0 %v169
  %v424 = vpop.f32.mrb[0].mxu0
  %v425 = vadd.f32 0.0, %v424
  %v426 = vpop.f32.mrb[0].mxu0
  %v427 = vpop.f32.mrb[0].mxu0
  %v428 = vadd.f32 0.0, %v427
  %v429 = vpop.f32.mrb[0].mxu0
  %430 = vmatprep.mubr.bf16.mxu0 %v174
  %431 = vmatmul.mubr.bf16.gmra.mrb[0].mxu0 %v173
  %v432 = vpop.f32.mrb[0].mxu0
  %v433 = vadd.f32 0.0, %v432
  %v434 = vpop.f32.mrb[0].mxu0
  %v435 = vpop.f32.mrb[0].mxu0
  %v436 = vadd.f32 0.0, %v435
  %v437 = vpop.f32.mrb[0].mxu0
  %438 = vmatprep.mubr.bf16.mxu0 %v178
  %439 = vmatmul.mubr.bf16.gmra.mrb[0].mxu0 %v177
  %v440 = vpop.f32.mrb[0].mxu0
  %v441 = vadd.f32 0.0, %v440
  %v442 = vpop.f32.mrb[0].mxu0
  %v443 = vpop.f32.mrb[0].mxu0
  %v444 = vadd.f32 0.0, %v443
  %v445 = vpop.f32.mrb[0].mxu0
  %446 = vmatprep.mubr.bf16.mxu0 %v182
  %447 = vmatmul.mubr.bf16.gmra.mrb[0].mxu0 %v181
  %v448 = vpop.f32.mrb[0].mxu0
  %v449 = vadd.f32 0.0, %v448
  %v450 = vpop.f32.mrb[0].mxu0
  %v451 = vpop.f32.mrb[0].mxu0
  %v452 = vadd.f32 0.0, %v451
  %v453 = vpop.f32.mrb[0].mxu0
  %454 = vmatprep.mubr.bf16.mxu0 %v186
  %455 = vmatmul.mubr.bf16.gmra.mrb[0].mxu0 %v185
  %v456 = vpop.f32.mrb[0].mxu0
  %v457 = vadd.f32 0.0, %v456
  %v458 = vpop.f32.mrb[0].mxu0
  %v459 = vpop.f32.mrb[0].mxu0
  %v460 = vadd.f32 0.0, %v459
  %v461 = vpop.f32.mrb[0].mxu0
  %462 = vmatprep.mubr.bf16.mxu0 %v190
  %463 = vmatmul.mubr.bf16.gmra.mrb[0].mxu0 %v189
  %v464 = vpop.f32.mrb[0].mxu0
  %v465 = vadd.f32 0.0, %v464
  %v466 = vpop.f32.mrb[0].mxu0
  %v467 = vpop.f32.mrb[0].mxu0
  %v468 = vadd.f32 0.0, %v467
  %v469 = vpop.f32.mrb[0].mxu0
  %470 = vmatprep.mubr.bf16.mxu0 %v194
  %471 = vmatmul.mubr.bf16.gmra.mrb[0].mxu0 %v193
  %v472 = vpop.f32.mrb[0].mxu0
  %v473 = vadd.f32 0.0, %v472
  %v474 = vpop.f32.mrb[0].mxu0
  %v475 = vpop.f32.mrb[0].mxu0
  %v476 = vpop.f32.mrb[0].mxu0
  %477 = vdwg.mxu0
  %478 = vmatprep.subr.bf16.mxu0 0
  %479 = vmatpush1.bf16.msra.mxu0 %v334
  %480 = vmatprep.subr.bf16.mxu0 0
  %481 = vmatpush1.bf16.msra.mxu0 %v335
  %482 = vmatprep.subr.bf16.mxu0 0
  %483 = vmatpush1.bf16.msra.mxu0 %v336
  %484 = vmatprep.subr.bf16.mxu0 0
  %485 = vmatpush1.bf16.msra.mxu0 %v337
  %486 = vmatprep.subr.bf16.mxu0 0
  %487 = vmatpush1.bf16.msra.mxu0 %v338
  %488 = vmatprep.subr.bf16.mxu0 0
  %489 = vmatpush1.bf16.msra.mxu0 %v339
  %490 = vmatprep.subr.bf16.mxu0 0
  %491 = vmatpush1.bf16.msra.mxu0 %v340
  %492 = vmatprep.subr.bf16.mxu0 0
  %493 = vmatpush1.bf16.msra.mxu0 %v341
  %494 = vmatprep.subr.bf16.mxu0 0
  %495 = vmatpush1.bf16.msra.mxu0 %v342
  %496 = vmatprep.subr.bf16.mxu0 0
  %497 = vmatpush1.bf16.msra.mxu0 0
  %498 = vmatprep.subr.bf16.mxu0 0
  %499 = vmatpush1.bf16.msra.mxu0 0
  %500 = vmatprep.subr.bf16.mxu0 0
  %501 = vmatpush1.bf16.msra.mxu0 0
  %502 = vmatprep.subr.bf16.mxu0 0
  %503 = vmatpush1.bf16.msra.mxu0 0
  %504 = vmatprep.subr.bf16.mxu0 0
  %505 = vmatpush1.bf16.msra.mxu0 0
  %506 = vmatprep.subr.bf16.mxu0 0
  %507 = vmatpush1.bf16.msra.mxu0 0
  %508 = vmatprep.subr.bf16.mxu0 0
  %509 = vmatpush1.bf16.msra.mxu0 0
  %510 = vmatprep.mubr.bf16.mxu0 %v370
  %511 = vmatmul.mubr.bf16.gmra.mrb[0].mxu0 %v171
  %v512 = vpop.f32.mrb[0].mxu0
  %v513 = vadd.f32 %v425, %v512
  %v514 = vpop.f32.mrb[0].mxu0
  %v515 = vpop.f32.mrb[0].mxu0
  %v516 = vadd.f32 %v428, %v515
  %v517 = vpop.f32.mrb[0].mxu0
  %518 = vmatprep.mubr.bf16.mxu0 %v373
  %519 = vmatmul.mubr.bf16.gmra.mrb[0].mxu0 %v175
  %v520 = vpop.f32.mrb[0].mxu0
  %v521 = vadd.f32 %v433, %v520
  %v522 = vpop.f32.mrb[0].mxu0
  %v523 = vpop.f32.mrb[0].mxu0
  %v524 = vadd.f32 %v436, %v523
  %v525 = vpop.f32.mrb[0].mxu0
  %526 = vmatprep.mubr.bf16.mxu0 %v376
  %527 = vmatmul.mubr.bf16.gmra.mrb[0].mxu0 %v179
  %v528 = vpop.f32.mrb[0].mxu0
  %v529 = vadd.f32 %v441, %v528
  %v530 = vpop.f32.mrb[0].mxu0
  %v531 = vpop.f32.mrb[0].mxu0
  %v532 = vadd.f32 %v444, %v531
  %v533 = vpop.f32.mrb[0].mxu0
  %534 = vmatprep.mubr.bf16.mxu0 %v379
  %535 = vmatmul.mubr.bf16.gmra.mrb[0].mxu0 %v183
  %v536 = vpop.f32.mrb[0].mxu0
  %v537 = vadd.f32 %v449, %v536
  %v538 = vpop.f32.mrb[0].mxu0
  %v539 = vpop.f32.mrb[0].mxu0
  %v540 = vadd.f32 %v452, %v539
  %v541 = vpop.f32.mrb[0].mxu0
  %542 = vmatprep.mubr.bf16.mxu0 %v382
  %543 = vmatmul.mubr.bf16.gmra.mrb[0].mxu0 %v187
  %v544 = vpop.f32.mrb[0].mxu0
  %v545 = vadd.f32 %v457, %v544
  %v546 = vpop.f32.mrb[0].mxu0
  %v547 = vpop.f32.mrb[0].mxu0
  %v548 = vadd.f32 %v460, %v547
  %v549 = vpop.f32.mrb[0].mxu0
  %550 = vmatprep.mubr.bf16.mxu0 %v385
  %551 = vmatmul.mubr.bf16.gmra.mrb[0].mxu0 %v191
  %v552 = vpop.f32.mrb[0].mxu0
  %v553 = vadd.f32 %v465, %v552
  %v554 = vpop.f32.mrb[0].mxu0
  %v555 = vpop.f32.mrb[0].mxu0
  %v556 = vadd.f32 %v468, %v555
  %v557 = vpop.f32.mrb[0].mxu0
  %558 = vmatprep.mubr.bf16.mxu0 %v388
  %559 = vmatmul.mubr.bf16.gmra.mrb[0].mxu0 %v195
  %v560 = vpop.f32.mrb[0].mxu0
  %v561 = vadd.f32 %v473, %v560
  %v562 = vpop.f32.mrb[0].mxu0
  %v563 = vpop.f32.mrb[0].mxu0
  %v564 = vpop.f32.mrb[0].mxu0
  %565 = vdwg.mxu0
  %s566 = scalar_lea.vmem %s0, 208
  %v567 = vld [vmem:[%s566] sm:$0xff]
  %v568 = vld [vmem:[%s566 + $0x8] sm:$0xff]
  %v569 = vld [vmem:[%s566 + $0x10] sm:$0xff]
  %v570 = vld [vmem:[%s566 + $0x18] sm:$0xff]
  %v571 = vld [vmem:[%s566 + $0x20] sm:$0xff]
  %v572 = vld [vmem:[%s566 + $0x28] sm:$0xff]
  %v573 = vld [vmem:[%s566 + $0x30] sm:$0xff]
  %v574 = vld [vmem:[%s566 + $0x38] sm:$0xff]
  %v575 = vld [vmem:[%s566 + $0x40] sm:$0xff]
  %v576 = vld [vmem:[%s566 + $0x48] sm:$0xff]
  %v577 = vld [vmem:[%s566 + $0x50] sm:$0xff]
  %v578 = vld [vmem:[%s566 + $0x58] sm:$0xff]
  %v579 = vld [vmem:[%s566 + $0x60] sm:$0xff]
  %v580 = vld [vmem:[%s566 + $0x68] sm:$0xff]
  %v581 = vld [vmem:[%s566 + $0x70] sm:$0xff]
  %v582 = vld [vmem:[%s566 + $0x78] sm:$0xff]
  %v583 = vld [vmem:[%s566 + $0x80] sm:$0xff]
  %v584 = vld [vmem:[%s566 + $0x88] sm:$0xff]
  %v585 = vld [vmem:[%s566 + $0x90] sm:$0xff]
  %v586 = vld [vmem:[%s566 + $0x98] sm:$0xff]
  %v587 = vld [vmem:[%s566 + $0xa0] sm:$0xff]
  %v588 = vld [vmem:[%s566 + $0xa8] sm:$0xff]
  %v589 = vld [vmem:[%s566 + $0xb0] sm:$0xff]
  %v590 = vld [vmem:[%s566 + $0xb8] sm:$0xff]
  %v591 = vld [vmem:[%s566 + $0xc0] sm:$0xff]
  %v592 = vld [vmem:[%s566 + $0xc8] sm:$0xff]
  %v619 = vunpack.c.l.b16 %v567
  %v620 = vunpack.c.h.b16 %v567
  %v621 = vunpack.c.l.b16 %v568
  %v622 = vunpack.c.h.b16 %v568
  %v623 = vunpack.c.l.b16 %v569
  %v624 = vunpack.c.h.b16 %v569
  %v625 = vunpack.c.l.b16 %v570
  %v626 = vunpack.c.h.b16 %v570
  %v627 = vunpack.c.l.b16 %v571
  %v628 = vunpack.c.h.b16 %v571
  %v629 = vunpack.c.l.b16 %v572
  %v630 = vunpack.c.h.b16 %v572
  %v631 = vunpack.c.l.b16 %v573
  %v632 = vunpack.c.h.b16 %v573
  %v633 = vunpack.c.l.b16 %v574
  %v634 = vunpack.c.h.b16 %v574
  %v635 = vunpack.c.l.b16 %v575
  %v636 = vunpack.c.h.b16 %v575
  %v637 = vunpack.c.l.b16 %v576
  %v638 = vunpack.c.h.b16 %v576
  %v639 = vunpack.c.l.b16 %v577
  %v640 = vunpack.c.h.b16 %v577
  %v641 = vunpack.c.l.b16 %v578
  %v642 = vunpack.c.h.b16 %v578
  %v643 = vunpack.c.l.b16 %v579
  %v644 = vunpack.c.h.b16 %v579
  %v645 = vunpack.c.l.b16 %v580
  %v646 = vunpack.c.h.b16 %v580
  %v647 = vunpack.c.l.b16 %v581
  %v648 = vunpack.c.h.b16 %v581
  %v649 = vunpack.c.l.b16 %v582
  %v650 = vunpack.c.h.b16 %v582
  %v651 = vunpack.c.l.b16 %v583
  %v652 = vunpack.c.h.b16 %v583
  %v653 = vunpack.c.l.b16 %v584
  %v654 = vunpack.c.h.b16 %v584
  %v655 = vunpack.c.l.b16 %v585
  %v656 = vunpack.c.h.b16 %v585
  %v657 = vunpack.c.l.b16 %v586
  %v658 = vunpack.c.h.b16 %v586
  %v659 = vunpack.c.l.b16 %v587
  %v660 = vunpack.c.h.b16 %v587
  %v661 = vunpack.c.l.b16 %v588
  %v662 = vunpack.c.h.b16 %v588
  %v663 = vunpack.c.l.b16 %v589
  %v664 = vunpack.c.h.b16 %v589
  %v665 = vunpack.c.l.b16 %v590
  %v666 = vunpack.c.h.b16 %v590
  %v667 = vunpack.c.l.b16 %v591
  %v668 = vunpack.c.h.b16 %v591
  %v669 = vunpack.c.l.b16 %v592
  %v670 = vunpack.c.h.b16 %v592
  %v671 = vpack.c.b16 %v623, %v619
  %v672 = vpack.c.b16 %v624, %v620
  %v673 = vpack.c.b16 %v625, %v621
  %v674 = vpack.c.b16 %v626, %v622
  %v675 = vpack.c.b16 %v631, %v627
  %v676 = vpack.c.b16 %v632, %v628
  %v677 = vpack.c.b16 %v633, %v629
  %v678 = vpack.c.b16 %v634, %v630
  %v679 = vpack.c.b16 %v639, %v635
  %v680 = vpack.c.b16 %v640, %v636
  %v681 = vpack.c.b16 %v641, %v637
  %v682 = vpack.c.b16 %v642, %v638
  %v683 = vpack.c.b16 %v647, %v643
  %v684 = vpack.c.b16 %v648, %v644
  %v685 = vpack.c.b16 %v649, %v645
  %v686 = vpack.c.b16 %v650, %v646
  %v687 = vpack.c.b16 %v655, %v651
  %v688 = vpack.c.b16 %v656, %v652
  %v689 = vpack.c.b16 %v657, %v653
  %v690 = vpack.c.b16 %v658, %v654
  %v691 = vpack.c.b16 %v663, %v659
  %v692 = vpack.c.b16 %v664, %v660
  %v693 = vpack.c.b16 %v665, %v661
  %v694 = vpack.c.b16 %v666, %v662
  %v695 = vpack.c.b16 %v667, %v667
  %v696 = vpack.c.b16 %v668, %v668
  %v697 = vpack.c.b16 %v669, %v669
  %v698 = vpack.c.b16 %v670, %v670
  %v721 = vsel %vm368, %v674, 0
  %v724 = vsel %vm368, %v678, 0
  %v727 = vsel %vm368, %v682, 0
  %v730 = vsel %vm368, %v686, 0
  %v733 = vsel %vm368, %v690, 0
  %v736 = vsel %vm368, %v694, 0
  %v739 = vsel %vm368, %v698, 0
  %741 = vmatprep.subr.bf16.mxu0 0
  %742 = vmatpush1.bf16.msra.mxu0 %v318
  %743 = vmatprep.subr.bf16.mxu0 0
  %744 = vmatpush1.bf16.msra.mxu0 %v319
  %745 = vmatprep.subr.bf16.mxu0 0
  %746 = vmatpush1.bf16.msra.mxu0 %v320
  %747 = vmatprep.subr.bf16.mxu0 0
  %748 = vmatpush1.bf16.msra.mxu0 %v321
  %749 = vmatprep.subr.bf16.mxu0 0
  %750 = vmatpush1.bf16.msra.mxu0 %v322
  %751 = vmatprep.subr.bf16.mxu0 0
  %752 = vmatpush1.bf16.msra.mxu0 %v323
  %753 = vmatprep.subr.bf16.mxu0 0
  %754 = vmatpush1.bf16.msra.mxu0 %v324
  %755 = vmatprep.subr.bf16.mxu0 0
  %756 = vmatpush1.bf16.msra.mxu0 %v325
  %757 = vmatprep.subr.bf16.mxu0 0
  %758 = vmatpush1.bf16.msra.mxu0 %v326
  %759 = vmatprep.subr.bf16.mxu0 0
  %760 = vmatpush1.bf16.msra.mxu0 %v327
  %761 = vmatprep.subr.bf16.mxu0 0
  %762 = vmatpush1.bf16.msra.mxu0 %v328
  %763 = vmatprep.subr.bf16.mxu0 0
  %764 = vmatpush1.bf16.msra.mxu0 %v329
  %765 = vmatprep.subr.bf16.mxu0 0
  %766 = vmatpush1.bf16.msra.mxu0 %v330
  %767 = vmatprep.subr.bf16.mxu0 0
  %768 = vmatpush1.bf16.msra.mxu0 %v331
  %769 = vmatprep.subr.bf16.mxu0 0
  %770 = vmatpush1.bf16.msra.mxu0 %v332
  %771 = vmatprep.subr.bf16.mxu0 0
  %772 = vmatpush1.bf16.msra.mxu0 %v333
  %773 = vmatprep.mubr.bf16.mxu0 %v672
  %774 = vmatmul.mubr.bf16.gmra.mrb[0].mxu0 %v671
  %v775 = vpop.f32.mrb[0].mxu0
  %v776 = vadd.f32 0.0, %v775
  %v777 = vpop.f32.mrb[0].mxu0
  %v778 = vpop.f32.mrb[0].mxu0
  %v779 = vadd.f32 0.0, %v778
  %v780 = vpop.f32.mrb[0].mxu0
  %781 = vmatprep.mubr.bf16.mxu0 %v676
  %782 = vmatmul.mubr.bf16.gmra.mrb[0].mxu0 %v675
  %v783 = vpop.f32.mrb[0].mxu0
  %v784 = vadd.f32 0.0, %v783
  %v785 = vpop.f32.mrb[0].mxu0
  %v786 = vpop.f32.mrb[0].mxu0
  %v787 = vadd.f32 0.0, %v786
  %v788 = vpop.f32.mrb[0].mxu0
  %789 = vmatprep.mubr.bf16.mxu0 %v680
  %790 = vmatmul.mubr.bf16.gmra.mrb[0].mxu0 %v679
  %v791 = vpop.f32.mrb[0].mxu0
  %v792 = vadd.f32 0.0, %v791
  %v793 = vpop.f32.mrb[0].mxu0
  %v794 = vpop.f32.mrb[0].mxu0
  %v795 = vadd.f32 0.0, %v794
  %v796 = vpop.f32.mrb[0].mxu0
  %797 = vmatprep.mubr.bf16.mxu0 %v684
  %798 = vmatmul.mubr.bf16.gmra.mrb[0].mxu0 %v683
  %v799 = vpop.f32.mrb[0].mxu0
  %v800 = vadd.f32 0.0, %v799
  %v801 = vpop.f32.mrb[0].mxu0
  %v802 = vpop.f32.mrb[0].mxu0
  %v803 = vadd.f32 0.0, %v802
  %v804 = vpop.f32.mrb[0].mxu0
  %805 = vmatprep.mubr.bf16.mxu0 %v688
  %806 = vmatmul.mubr.bf16.gmra.mrb[0].mxu0 %v687
  %v807 = vpop.f32.mrb[0].mxu0
  %v808 = vadd.f32 0.0, %v807
  %v809 = vpop.f32.mrb[0].mxu0
  %v810 = vpop.f32.mrb[0].mxu0
  %v811 = vadd.f32 0.0, %v810
  %v812 = vpop.f32.mrb[0].mxu0
  %813 = vmatprep.mubr.bf16.mxu0 %v692
  %814 = vmatmul.mubr.bf16.gmra.mrb[0].mxu0 %v691
  %v815 = vpop.f32.mrb[0].mxu0
  %v816 = vadd.f32 0.0, %v815
  %v817 = vpop.f32.mrb[0].mxu0
  %v818 = vpop.f32.mrb[0].mxu0
  %v819 = vadd.f32 0.0, %v818
  %v820 = vpop.f32.mrb[0].mxu0
  %821 = vmatprep.mubr.bf16.mxu0 %v696
  %822 = vmatmul.mubr.bf16.gmra.mrb[0].mxu0 %v695
  %v823 = vpop.f32.mrb[0].mxu0
  %v824 = vadd.f32 0.0, %v823
  %v825 = vpop.f32.mrb[0].mxu0
  %v826 = vpop.f32.mrb[0].mxu0
  %v827 = vpop.f32.mrb[0].mxu0
  %828 = vdwg.mxu0
  %829 = vmatprep.subr.bf16.mxu0 0
  %830 = vmatpush1.bf16.msra.mxu0 %v334
  %831 = vmatprep.subr.bf16.mxu0 0
  %832 = vmatpush1.bf16.msra.mxu0 %v335
  %833 = vmatprep.subr.bf16.mxu0 0
  %834 = vmatpush1.bf16.msra.mxu0 %v336
  %835 = vmatprep.subr.bf16.mxu0 0
  %836 = vmatpush1.bf16.msra.mxu0 %v337
  %837 = vmatprep.subr.bf16.mxu0 0
  %838 = vmatpush1.bf16.msra.mxu0 %v338
  %839 = vmatprep.subr.bf16.mxu0 0
  %840 = vmatpush1.bf16.msra.mxu0 %v339
  %841 = vmatprep.subr.bf16.mxu0 0
  %842 = vmatpush1.bf16.msra.mxu0 %v340
  %843 = vmatprep.subr.bf16.mxu0 0
  %844 = vmatpush1.bf16.msra.mxu0 %v341
  %845 = vmatprep.subr.bf16.mxu0 0
  %846 = vmatpush1.bf16.msra.mxu0 %v342
  %847 = vmatprep.subr.bf16.mxu0 0
  %848 = vmatpush1.bf16.msra.mxu0 0
  %849 = vmatprep.subr.bf16.mxu0 0
  %850 = vmatpush1.bf16.msra.mxu0 0
  %851 = vmatprep.subr.bf16.mxu0 0
  %852 = vmatpush1.bf16.msra.mxu0 0
  %853 = vmatprep.subr.bf16.mxu0 0
  %854 = vmatpush1.bf16.msra.mxu0 0
  %855 = vmatprep.subr.bf16.mxu0 0
  %856 = vmatpush1.bf16.msra.mxu0 0
  %857 = vmatprep.subr.bf16.mxu0 0
  %858 = vmatpush1.bf16.msra.mxu0 0
  %859 = vmatprep.subr.bf16.mxu0 0
  %860 = vmatpush1.bf16.msra.mxu0 0
  %861 = vmatprep.mubr.bf16.mxu0 %v721
  %862 = vmatmul.mubr.bf16.gmra.mrb[0].mxu0 %v673
  %v863 = vpop.f32.mrb[0].mxu0
  %v864 = vadd.f32 %v776, %v863
  %v865 = vpop.f32.mrb[0].mxu0
  %v866 = vpop.f32.mrb[0].mxu0
  %v867 = vadd.f32 %v779, %v866
  %v868 = vpop.f32.mrb[0].mxu0
  %869 = vmatprep.mubr.bf16.mxu0 %v724
  %870 = vmatmul.mubr.bf16.gmra.mrb[0].mxu0 %v677
  %v871 = vpop.f32.mrb[0].mxu0
  %v872 = vadd.f32 %v784, %v871
  %v873 = vpop.f32.mrb[0].mxu0
  %v874 = vpop.f32.mrb[0].mxu0
  %v875 = vadd.f32 %v787, %v874
  %v876 = vpop.f32.mrb[0].mxu0
  %877 = vmatprep.mubr.bf16.mxu0 %v727
  %878 = vmatmul.mubr.bf16.gmra.mrb[0].mxu0 %v681
  %v879 = vpop.f32.mrb[0].mxu0
  %v880 = vadd.f32 %v792, %v879
  %v881 = vpop.f32.mrb[0].mxu0
  %v882 = vpop.f32.mrb[0].mxu0
  %v883 = vadd.f32 %v795, %v882
  %v884 = vpop.f32.mrb[0].mxu0
  %885 = vmatprep.mubr.bf16.mxu0 %v730
  %886 = vmatmul.mubr.bf16.gmra.mrb[0].mxu0 %v685
  %v887 = vpop.f32.mrb[0].mxu0
  %v888 = vadd.f32 %v800, %v887
  %v889 = vpop.f32.mrb[0].mxu0
  %v890 = vpop.f32.mrb[0].mxu0
  %v891 = vadd.f32 %v803, %v890
  %v892 = vpop.f32.mrb[0].mxu0
  %893 = vmatprep.mubr.bf16.mxu0 %v733
  %894 = vmatmul.mubr.bf16.gmra.mrb[0].mxu0 %v689
  %v895 = vpop.f32.mrb[0].mxu0
  %v896 = vadd.f32 %v808, %v895
  %v897 = vpop.f32.mrb[0].mxu0
  %v898 = vpop.f32.mrb[0].mxu0
  %v899 = vadd.f32 %v811, %v898
  %v900 = vpop.f32.mrb[0].mxu0
  %901 = vmatprep.mubr.bf16.mxu0 %v736
  %902 = vmatmul.mubr.bf16.gmra.mrb[0].mxu0 %v693
  %v903 = vpop.f32.mrb[0].mxu0
  %v904 = vadd.f32 %v816, %v903
  %v905 = vpop.f32.mrb[0].mxu0
  %v906 = vpop.f32.mrb[0].mxu0
  %v907 = vadd.f32 %v819, %v906
  %v908 = vpop.f32.mrb[0].mxu0
  %909 = vmatprep.mubr.bf16.mxu0 %v739
  %910 = vmatmul.mubr.bf16.gmra.mrb[0].mxu0 %v697
  %v911 = vpop.f32.mrb[0].mxu0
  %v912 = vadd.f32 %v824, %v911
  %v913 = vpop.f32.mrb[0].mxu0
  %v914 = vpop.f32.mrb[0].mxu0
  %v915 = vpop.f32.mrb[0].mxu0
  %916 = vdwg.mxu0
  %v917 = vmax.f32 %v513, %v864
  %v918 = vmax.f32 %v516, %v867
  %v919 = vmax.f32 %v521, %v872
  %v920 = vmax.f32 %v524, %v875
  %v921 = vmax.f32 %v529, %v880
  %v922 = vmax.f32 %v532, %v883
  %v923 = vmax.f32 %v537, %v888
  %v924 = vmax.f32 %v540, %v891
  %v925 = vmax.f32 %v545, %v896
  %v926 = vmax.f32 %v548, %v899
  %v927 = vmax.f32 %v553, %v904
  %v928 = vmax.f32 %v556, %v907
  %v929 = vmax.f32 %v561, %v912
  %s930 = scalar_lea.vmem %s0, 416
  %v931 = vld [vmem:[%s930] sm:$0xff]
  %v932 = vld [vmem:[%s930 + $0x8] sm:$0xff]
  %v933 = vld [vmem:[%s930 + $0x10] sm:$0xff]
  %v934 = vld [vmem:[%s930 + $0x18] sm:$0xff]
  %v935 = vld [vmem:[%s930 + $0x20] sm:$0xff]
  %v936 = vld [vmem:[%s930 + $0x28] sm:$0xff]
  %v937 = vld [vmem:[%s930 + $0x30] sm:$0xff]
  %v938 = vld [vmem:[%s930 + $0x38] sm:$0xff]
  %v939 = vld [vmem:[%s930 + $0x40] sm:$0xff]
  %v940 = vld [vmem:[%s930 + $0x48] sm:$0xff]
  %v941 = vld [vmem:[%s930 + $0x50] sm:$0xff]
  %v942 = vld [vmem:[%s930 + $0x58] sm:$0xff]
  %v943 = vld [vmem:[%s930 + $0x60] sm:$0xff]
  %v944 = vld [vmem:[%s930 + $0x68] sm:$0xff]
  %v945 = vld [vmem:[%s930 + $0x70] sm:$0xff]
  %v946 = vld [vmem:[%s930 + $0x78] sm:$0xff]
  %v947 = vld [vmem:[%s930 + $0x80] sm:$0xff]
  %v948 = vld [vmem:[%s930 + $0x88] sm:$0xff]
  %v949 = vld [vmem:[%s930 + $0x90] sm:$0xff]
  %v950 = vld [vmem:[%s930 + $0x98] sm:$0xff]
  %v951 = vld [vmem:[%s930 + $0xa0] sm:$0xff]
  %v952 = vld [vmem:[%s930 + $0xa8] sm:$0xff]
  %v953 = vld [vmem:[%s930 + $0xb0] sm:$0xff]
  %v954 = vld [vmem:[%s930 + $0xb8] sm:$0xff]
  %v955 = vld [vmem:[%s930 + $0xc0] sm:$0xff]
  %v956 = vld [vmem:[%s930 + $0xc8] sm:$0xff]
  %v983 = vunpack.c.l.b16 %v931
  %v984 = vunpack.c.h.b16 %v931
  %v985 = vunpack.c.l.b16 %v932
  %v986 = vunpack.c.h.b16 %v932
  %v987 = vunpack.c.l.b16 %v933
  %v988 = vunpack.c.h.b16 %v933
  %v989 = vunpack.c.l.b16 %v934
  %v990 = vunpack.c.h.b16 %v934
  %v991 = vunpack.c.l.b16 %v935
  %v992 = vunpack.c.h.b16 %v935
  %v993 = vunpack.c.l.b16 %v936
  %v994 = vunpack.c.h.b16 %v936
  %v995 = vunpack.c.l.b16 %v937
  %v996 = vunpack.c.h.b16 %v937
  %v997 = vunpack.c.l.b16 %v938
  %v998 = vunpack.c.h.b16 %v938
  %v999 = vunpack.c.l.b16 %v939
  %v1000 = vunpack.c.h.b16 %v939
  %v1001 = vunpack.c.l.b16 %v940
  %v1002 = vunpack.c.h.b16 %v940
  %v1003 = vunpack.c.l.b16 %v941
  %v1004 = vunpack.c.h.b16 %v941
  %v1005 = vunpack.c.l.b16 %v942
  %v1006 = vunpack.c.h.b16 %v942
  %v1007 = vunpack.c.l.b16 %v943
  %v1008 = vunpack.c.h.b16 %v943
  %v1009 = vunpack.c.l.b16 %v944
  %v1010 = vunpack.c.h.b16 %v944
  %v1011 = vunpack.c.l.b16 %v945
  %v1012 = vunpack.c.h.b16 %v945
  %v1013 = vunpack.c.l.b16 %v946
  %v1014 = vunpack.c.h.b16 %v946
  %v1015 = vunpack.c.l.b16 %v947
  %v1016 = vunpack.c.h.b16 %v947
  %v1017 = vunpack.c.l.b16 %v948
  %v1018 = vunpack.c.h.b16 %v948
  %v1019 = vunpack.c.l.b16 %v949
  %v1020 = vunpack.c.h.b16 %v949
  %v1021 = vunpack.c.l.b16 %v950
  %v1022 = vunpack.c.h.b16 %v950
  %v1023 = vunpack.c.l.b16 %v951
  %v1024 = vunpack.c.h.b16 %v951
  %v1025 = vunpack.c.l.b16 %v952
  %v1026 = vunpack.c.h.b16 %v952
  %v1027 = vunpack.c.l.b16 %v953
  %v1028 = vunpack.c.h.b16 %v953
  %v1029 = vunpack.c.l.b16 %v954
  %v1030 = vunpack.c.h.b16 %v954
  %v1031 = vunpack.c.l.b16 %v955
  %v1032 = vunpack.c.h.b16 %v955
  %v1033 = vunpack.c.l.b16 %v956
  %v1034 = vunpack.c.h.b16 %v956
  %v1035 = vpack.c.b16 %v987, %v983
  %v1036 = vpack.c.b16 %v988, %v984
  %v1037 = vpack.c.b16 %v989, %v985
  %v1038 = vpack.c.b16 %v990, %v986
  %v1039 = vpack.c.b16 %v995, %v991
  %v1040 = vpack.c.b16 %v996, %v992
  %v1041 = vpack.c.b16 %v997, %v993
  %v1042 = vpack.c.b16 %v998, %v994
  %v1043 = vpack.c.b16 %v1003, %v999
  %v1044 = vpack.c.b16 %v1004, %v1000
  %v1045 = vpack.c.b16 %v1005, %v1001
  %v1046 = vpack.c.b16 %v1006, %v1002
  %v1047 = vpack.c.b16 %v1011, %v1007
  %v1048 = vpack.c.b16 %v1012, %v1008
  %v1049 = vpack.c.b16 %v1013, %v1009
  %v1050 = vpack.c.b16 %v1014, %v1010
  %v1051 = vpack.c.b16 %v1019, %v1015
  %v1052 = vpack.c.b16 %v1020, %v1016
  %v1053 = vpack.c.b16 %v1021, %v1017
  %v1054 = vpack.c.b16 %v1022, %v1018
  %v1055 = vpack.c.b16 %v1027, %v1023
  %v1056 = vpack.c.b16 %v1028, %v1024
  %v1057 = vpack.c.b16 %v1029, %v1025
  %v1058 = vpack.c.b16 %v1030, %v1026
  %v1059 = vpack.c.b16 %v1031, %v1031
  %v1060 = vpack.c.b16 %v1032, %v1032
  %v1061 = vpack.c.b16 %v1033, %v1033
  %v1062 = vpack.c.b16 %v1034, %v1034
  %v1085 = vsel %vm368, %v1038, 0
  %v1088 = vsel %vm368, %v1042, 0
  %v1091 = vsel %vm368, %v1046, 0
  %v1094 = vsel %vm368, %v1050, 0
  %v1097 = vsel %vm368, %v1054, 0
  %v1100 = vsel %vm368, %v1058, 0
  %v1103 = vsel %vm368, %v1062, 0
  %1105 = vmatprep.subr.bf16.mxu0 0
  %1106 = vmatpush1.bf16.msra.mxu0 %v318
  %1107 = vmatprep.subr.bf16.mxu0 0
  %1108 = vmatpush1.bf16.msra.mxu0 %v319
  %1109 = vmatprep.subr.bf16.mxu0 0
  %1110 = vmatpush1.bf16.msra.mxu0 %v320
  %1111 = vmatprep.subr.bf16.mxu0 0
  %1112 = vmatpush1.bf16.msra.mxu0 %v321
  %1113 = vmatprep.subr.bf16.mxu0 0
  %1114 = vmatpush1.bf16.msra.mxu0 %v322
  %1115 = vmatprep.subr.bf16.mxu0 0
  %1116 = vmatpush1.bf16.msra.mxu0 %v323
  %1117 = vmatprep.subr.bf16.mxu0 0
  %1118 = vmatpush1.bf16.msra.mxu0 %v324
  %1119 = vmatprep.subr.bf16.mxu0 0
  %1120 = vmatpush1.bf16.msra.mxu0 %v325
  %1121 = vmatprep.subr.bf16.mxu0 0
  %1122 = vmatpush1.bf16.msra.mxu0 %v326
  %1123 = vmatprep.subr.bf16.mxu0 0
  %1124 = vmatpush1.bf16.msra.mxu0 %v327
  %1125 = vmatprep.subr.bf16.mxu0 0
  %1126 = vmatpush1.bf16.msra.mxu0 %v328
  %1127 = vmatprep.subr.bf16.mxu0 0
  %1128 = vmatpush1.bf16.msra.mxu0 %v329
  %1129 = vmatprep.subr.bf16.mxu0 0
  %1130 = vmatpush1.bf16.msra.mxu0 %v330
  %1131 = vmatprep.subr.bf16.mxu0 0
  %1132 = vmatpush1.bf16.msra.mxu0 %v331
  %1133 = vmatprep.subr.bf16.mxu0 0
  %1134 = vmatpush1.bf16.msra.mxu0 %v332
  %1135 = vmatprep.subr.bf16.mxu0 0
  %1136 = vmatpush1.bf16.msra.mxu0 %v333
  %1137 = vmatprep.mubr.bf16.mxu0 %v1036
  %1138 = vmatmul.mubr.bf16.gmra.mrb[0].mxu0 %v1035
  %v1139 = vpop.f32.mrb[0].mxu0
  %v1140 = vadd.f32 0.0, %v1139
  %v1141 = vpop.f32.mrb[0].mxu0
  %v1142 = vpop.f32.mrb[0].mxu0
  %v1143 = vadd.f32 0.0, %v1142
  %v1144 = vpop.f32.mrb[0].mxu0
  %1145 = vmatprep.mubr.bf16.mxu0 %v1040
  %1146 = vmatmul.mubr.bf16.gmra.mrb[0].mxu0 %v1039
  %v1147 = vpop.f32.mrb[0].mxu0
  %v1148 = vadd.f32 0.0, %v1147
  %v1149 = vpop.f32.mrb[0].mxu0
  %v1150 = vpop.f32.mrb[0].mxu0
  %v1151 = vadd.f32 0.0, %v1150
  %v1152 = vpop.f32.mrb[0].mxu0
  %1153 = vmatprep.mubr.bf16.mxu0 %v1044
  %1154 = vmatmul.mubr.bf16.gmra.mrb[0].mxu0 %v1043
  %v1155 = vpop.f32.mrb[0].mxu0
  %v1156 = vadd.f32 0.0, %v1155
  %v1157 = vpop.f32.mrb[0].mxu0
  %v1158 = vpop.f32.mrb[0].mxu0
  %v1159 = vadd.f32 0.0, %v1158
  %v1160 = vpop.f32.mrb[0].mxu0
  %1161 = vmatprep.mubr.bf16.mxu0 %v1048
  %1162 = vmatmul.mubr.bf16.gmra.mrb[0].mxu0 %v1047
  %v1163 = vpop.f32.mrb[0].mxu0
  %v1164 = vadd.f32 0.0, %v1163
  %v1165 = vpop.f32.mrb[0].mxu0
  %v1166 = vpop.f32.mrb[0].mxu0
  %v1167 = vadd.f32 0.0, %v1166
  %v1168 = vpop.f32.mrb[0].mxu0
  %1169 = vmatprep.mubr.bf16.mxu0 %v1052
  %1170 = vmatmul.mubr.bf16.gmra.mrb[0].mxu0 %v1051
  %v1171 = vpop.f32.mrb[0].mxu0
  %v1172 = vadd.f32 0.0, %v1171
  %v1173 = vpop.f32.mrb[0].mxu0
  %v1174 = vpop.f32.mrb[0].mxu0
  %v1175 = vadd.f32 0.0, %v1174
  %v1176 = vpop.f32.mrb[0].mxu0
  %1177 = vmatprep.mubr.bf16.mxu0 %v1056
  %1178 = vmatmul.mubr.bf16.gmra.mrb[0].mxu0 %v1055
  %v1179 = vpop.f32.mrb[0].mxu0
  %v1180 = vadd.f32 0.0, %v1179
  %v1181 = vpop.f32.mrb[0].mxu0
  %v1182 = vpop.f32.mrb[0].mxu0
  %v1183 = vadd.f32 0.0, %v1182
  %v1184 = vpop.f32.mrb[0].mxu0
  %1185 = vmatprep.mubr.bf16.mxu0 %v1060
  %1186 = vmatmul.mubr.bf16.gmra.mrb[0].mxu0 %v1059
  %v1187 = vpop.f32.mrb[0].mxu0
  %v1188 = vadd.f32 0.0, %v1187
  %v1189 = vpop.f32.mrb[0].mxu0
  %v1190 = vpop.f32.mrb[0].mxu0
  %v1191 = vpop.f32.mrb[0].mxu0
  %1192 = vdwg.mxu0
  %1193 = vmatprep.subr.bf16.mxu0 0
  %1194 = vmatpush1.bf16.msra.mxu0 %v334
  %1195 = vmatprep.subr.bf16.mxu0 0
  %1196 = vmatpush1.bf16.msra.mxu0 %v335
  %1197 = vmatprep.subr.bf16.mxu0 0
  %1198 = vmatpush1.bf16.msra.mxu0 %v336
  %1199 = vmatprep.subr.bf16.mxu0 0
  %1200 = vmatpush1.bf16.msra.mxu0 %v337
  %1201 = vmatprep.subr.bf16.mxu0 0
  %1202 = vmatpush1.bf16.msra.mxu0 %v338
  %1203 = vmatprep.subr.bf16.mxu0 0
  %1204 = vmatpush1.bf16.msra.mxu0 %v339
  %1205 = vmatprep.subr.bf16.mxu0 0
  %1206 = vmatpush1.bf16.msra.mxu0 %v340
  %1207 = vmatprep.subr.bf16.mxu0 0
  %1208 = vmatpush1.bf16.msra.mxu0 %v341
  %1209 = vmatprep.subr.bf16.mxu0 0
  %1210 = vmatpush1.bf16.msra.mxu0 %v342
  %1211 = vmatprep.subr.bf16.mxu0 0
  %1212 = vmatpush1.bf16.msra.mxu0 0
  %1213 = vmatprep.subr.bf16.mxu0 0
  %1214 = vmatpush1.bf16.msra.mxu0 0
  %1215 = vmatprep.subr.bf16.mxu0 0
  %1216 = vmatpush1.bf16.msra.mxu0 0
  %1217 = vmatprep.subr.bf16.mxu0 0
  %1218 = vmatpush1.bf16.msra.mxu0 0
  %1219 = vmatprep.subr.bf16.mxu0 0
  %1220 = vmatpush1.bf16.msra.mxu0 0
  %1221 = vmatprep.subr.bf16.mxu0 0
  %1222 = vmatpush1.bf16.msra.mxu0 0
  %1223 = vmatprep.subr.bf16.mxu0 0
  %1224 = vmatpush1.bf16.msra.mxu0 0
  %1225 = vmatprep.mubr.bf16.mxu0 %v1085
  %1226 = vmatmul.mubr.bf16.gmra.mrb[0].mxu0 %v1037
  %v1227 = vpop.f32.mrb[0].mxu0
  %v1228 = vadd.f32 %v1140, %v1227
  %v1229 = vpop.f32.mrb[0].mxu0
  %v1230 = vpop.f32.mrb[0].mxu0
  %v1231 = vadd.f32 %v1143, %v1230
  %v1232 = vpop.f32.mrb[0].mxu0
  %1233 = vmatprep.mubr.bf16.mxu0 %v1088
  %1234 = vmatmul.mubr.bf16.gmra.mrb[0].mxu0 %v1041
  %v1235 = vpop.f32.mrb[0].mxu0
  %v1236 = vadd.f32 %v1148, %v1235
  %v1237 = vpop.f32.mrb[0].mxu0
  %v1238 = vpop.f32.mrb[0].mxu0
  %v1239 = vadd.f32 %v1151, %v1238
  %v1240 = vpop.f32.mrb[0].mxu0
  %1241 = vmatprep.mubr.bf16.mxu0 %v1091
  %1242 = vmatmul.mubr.bf16.gmra.mrb[0].mxu0 %v1045
  %v1243 = vpop.f32.mrb[0].mxu0
  %v1244 = vadd.f32 %v1156, %v1243
  %v1245 = vpop.f32.mrb[0].mxu0
  %v1246 = vpop.f32.mrb[0].mxu0
  %v1247 = vadd.f32 %v1159, %v1246
  %v1248 = vpop.f32.mrb[0].mxu0
  %1249 = vmatprep.mubr.bf16.mxu0 %v1094
  %1250 = vmatmul.mubr.bf16.gmra.mrb[0].mxu0 %v1049
  %v1251 = vpop.f32.mrb[0].mxu0
  %v1252 = vadd.f32 %v1164, %v1251
  %v1253 = vpop.f32.mrb[0].mxu0
  %v1254 = vpop.f32.mrb[0].mxu0
  %v1255 = vadd.f32 %v1167, %v1254
  %v1256 = vpop.f32.mrb[0].mxu0
  %1257 = vmatprep.mubr.bf16.mxu0 %v1097
  %1258 = vmatmul.mubr.bf16.gmra.mrb[0].mxu0 %v1053
  %v1259 = vpop.f32.mrb[0].mxu0
  %v1260 = vadd.f32 %v1172, %v1259
  %v1261 = vpop.f32.mrb[0].mxu0
  %v1262 = vpop.f32.mrb[0].mxu0
  %v1263 = vadd.f32 %v1175, %v1262
  %v1264 = vpop.f32.mrb[0].mxu0
  %1265 = vmatprep.mubr.bf16.mxu0 %v1100
  %1266 = vmatmul.mubr.bf16.gmra.mrb[0].mxu0 %v1057
  %v1267 = vpop.f32.mrb[0].mxu0
  %v1268 = vadd.f32 %v1180, %v1267
  %v1269 = vpop.f32.mrb[0].mxu0
  %v1270 = vpop.f32.mrb[0].mxu0
  %v1271 = vadd.f32 %v1183, %v1270
  %v1272 = vpop.f32.mrb[0].mxu0
  %1273 = vmatprep.mubr.bf16.mxu0 %v1103
  %1274 = vmatmul.mubr.bf16.gmra.mrb[0].mxu0 %v1061
  %v1275 = vpop.f32.mrb[0].mxu0
  %v1276 = vadd.f32 %v1188, %v1275
  %v1277 = vpop.f32.mrb[0].mxu0
  %v1278 = vpop.f32.mrb[0].mxu0
  %v1279 = vpop.f32.mrb[0].mxu0
  %1280 = vdwg.mxu0
  %v1281 = vmax.f32 %v917, %v1228
  %v1282 = vmax.f32 %v918, %v1231
  %v1283 = vmax.f32 %v919, %v1236
  %v1284 = vmax.f32 %v920, %v1239
  %v1285 = vmax.f32 %v921, %v1244
  %v1286 = vmax.f32 %v922, %v1247
  %v1287 = vmax.f32 %v923, %v1252
  %v1288 = vmax.f32 %v924, %v1255
  %v1289 = vmax.f32 %v925, %v1260
  %v1290 = vmax.f32 %v926, %v1263
  %v1291 = vmax.f32 %v927, %v1268
  %v1292 = vmax.f32 %v928, %v1271
  %v1293 = vmax.f32 %v929, %v1276
  %s1294 = scalar_lea.vmem %s0, 624
  %v1295 = vld [vmem:[%s1294] sm:$0xff]
  %v1296 = vld [vmem:[%s1294 + $0x8] sm:$0xff]
  %v1297 = vld [vmem:[%s1294 + $0x10] sm:$0xff]
  %v1298 = vld [vmem:[%s1294 + $0x18] sm:$0xff]
  %v1299 = vld [vmem:[%s1294 + $0x20] sm:$0xff]
  %v1300 = vld [vmem:[%s1294 + $0x28] sm:$0xff]
  %v1301 = vld [vmem:[%s1294 + $0x30] sm:$0xff]
  %v1302 = vld [vmem:[%s1294 + $0x38] sm:$0xff]
  %v1303 = vld [vmem:[%s1294 + $0x40] sm:$0xff]
  %v1304 = vld [vmem:[%s1294 + $0x48] sm:$0xff]
  %v1305 = vld [vmem:[%s1294 + $0x50] sm:$0xff]
  %v1306 = vld [vmem:[%s1294 + $0x58] sm:$0xff]
  %v1307 = vld [vmem:[%s1294 + $0x60] sm:$0xff]
  %v1308 = vld [vmem:[%s1294 + $0x68] sm:$0xff]
  %v1309 = vld [vmem:[%s1294 + $0x70] sm:$0xff]
  %v1310 = vld [vmem:[%s1294 + $0x78] sm:$0xff]
  %v1311 = vld [vmem:[%s1294 + $0x80] sm:$0xff]
  %v1312 = vld [vmem:[%s1294 + $0x88] sm:$0xff]
  %v1313 = vld [vmem:[%s1294 + $0x90] sm:$0xff]
  %v1314 = vld [vmem:[%s1294 + $0x98] sm:$0xff]
  %v1315 = vld [vmem:[%s1294 + $0xa0] sm:$0xff]
  %v1316 = vld [vmem:[%s1294 + $0xa8] sm:$0xff]
  %v1317 = vld [vmem:[%s1294 + $0xb0] sm:$0xff]
  %v1318 = vld [vmem:[%s1294 + $0xb8] sm:$0xff]
  %v1319 = vld [vmem:[%s1294 + $0xc0] sm:$0xff]
  %v1320 = vld [vmem:[%s1294 + $0xc8] sm:$0xff]
  %v1347 = vunpack.c.l.b16 %v1295
  %v1348 = vunpack.c.h.b16 %v1295
  %v1349 = vunpack.c.l.b16 %v1296
  %v1350 = vunpack.c.h.b16 %v1296
  %v1351 = vunpack.c.l.b16 %v1297
  %v1352 = vunpack.c.h.b16 %v1297
  %v1353 = vunpack.c.l.b16 %v1298
  %v1354 = vunpack.c.h.b16 %v1298
  %v1355 = vunpack.c.l.b16 %v1299
  %v1356 = vunpack.c.h.b16 %v1299
  %v1357 = vunpack.c.l.b16 %v1300
  %v1358 = vunpack.c.h.b16 %v1300
  %v1359 = vunpack.c.l.b16 %v1301
  %v1360 = vunpack.c.h.b16 %v1301
  %v1361 = vunpack.c.l.b16 %v1302
  %v1362 = vunpack.c.h.b16 %v1302
  %v1363 = vunpack.c.l.b16 %v1303
  %v1364 = vunpack.c.h.b16 %v1303
  %v1365 = vunpack.c.l.b16 %v1304
  %v1366 = vunpack.c.h.b16 %v1304
  %v1367 = vunpack.c.l.b16 %v1305
  %v1368 = vunpack.c.h.b16 %v1305
  %v1369 = vunpack.c.l.b16 %v1306
  %v1370 = vunpack.c.h.b16 %v1306
  %v1371 = vunpack.c.l.b16 %v1307
  %v1372 = vunpack.c.h.b16 %v1307
  %v1373 = vunpack.c.l.b16 %v1308
  %v1374 = vunpack.c.h.b16 %v1308
  %v1375 = vunpack.c.l.b16 %v1309
  %v1376 = vunpack.c.h.b16 %v1309
  %v1377 = vunpack.c.l.b16 %v1310
  %v1378 = vunpack.c.h.b16 %v1310
  %v1379 = vunpack.c.l.b16 %v1311
  %v1380 = vunpack.c.h.b16 %v1311
  %v1381 = vunpack.c.l.b16 %v1312
  %v1382 = vunpack.c.h.b16 %v1312
  %v1383 = vunpack.c.l.b16 %v1313
  %v1384 = vunpack.c.h.b16 %v1313
  %v1385 = vunpack.c.l.b16 %v1314
  %v1386 = vunpack.c.h.b16 %v1314
  %v1387 = vunpack.c.l.b16 %v1315
  %v1388 = vunpack.c.h.b16 %v1315
  %v1389 = vunpack.c.l.b16 %v1316
  %v1390 = vunpack.c.h.b16 %v1316
  %v1391 = vunpack.c.l.b16 %v1317
  %v1392 = vunpack.c.h.b16 %v1317
  %v1393 = vunpack.c.l.b16 %v1318
  %v1394 = vunpack.c.h.b16 %v1318
  %v1395 = vunpack.c.l.b16 %v1319
  %v1396 = vunpack.c.h.b16 %v1319
  %v1397 = vunpack.c.l.b16 %v1320
  %v1398 = vunpack.c.h.b16 %v1320
  %v1399 = vpack.c.b16 %v1351, %v1347
  %v1400 = vpack.c.b16 %v1352, %v1348
  %v1401 = vpack.c.b16 %v1353, %v1349
  %v1402 = vpack.c.b16 %v1354, %v1350
  %v1403 = vpack.c.b16 %v1359, %v1355
  %v1404 = vpack.c.b16 %v1360, %v1356
  %v1405 = vpack.c.b16 %v1361, %v1357
  %v1406 = vpack.c.b16 %v1362, %v1358
  %v1407 = vpack.c.b16 %v1367, %v1363
  %v1408 = vpack.c.b16 %v1368, %v1364
  %v1409 = vpack.c.b16 %v1369, %v1365
  %v1410 = vpack.c.b16 %v1370, %v1366
  %v1411 = vpack.c.b16 %v1375, %v1371
  %v1412 = vpack.c.b16 %v1376, %v1372
  %v1413 = vpack.c.b16 %v1377, %v1373
  %v1414 = vpack.c.b16 %v1378, %v1374
  %v1415 = vpack.c.b16 %v1383, %v1379
  %v1416 = vpack.c.b16 %v1384, %v1380
  %v1417 = vpack.c.b16 %v1385, %v1381
  %v1418 = vpack.c.b16 %v1386, %v1382
  %v1419 = vpack.c.b16 %v1391, %v1387
  %v1420 = vpack.c.b16 %v1392, %v1388
  %v1421 = vpack.c.b16 %v1393, %v1389
  %v1422 = vpack.c.b16 %v1394, %v1390
  %v1423 = vpack.c.b16 %v1395, %v1395
  %v1424 = vpack.c.b16 %v1396, %v1396
  %v1425 = vpack.c.b16 %v1397, %v1397
  %v1426 = vpack.c.b16 %v1398, %v1398
  %v1449 = vsel %vm368, %v1402, 0
  %v1452 = vsel %vm368, %v1406, 0
  %v1455 = vsel %vm368, %v1410, 0
  %v1458 = vsel %vm368, %v1414, 0
  %v1461 = vsel %vm368, %v1418, 0
  %v1464 = vsel %vm368, %v1422, 0
  %v1467 = vsel %vm368, %v1426, 0
  %1469 = vmatprep.subr.bf16.mxu0 0
  %1470 = vmatpush1.bf16.msra.mxu0 %v318
  %1471 = vmatprep.subr.bf16.mxu0 0
  %1472 = vmatpush1.bf16.msra.mxu0 %v319
  %1473 = vmatprep.subr.bf16.mxu0 0
  %1474 = vmatpush1.bf16.msra.mxu0 %v320
  %1475 = vmatprep.subr.bf16.mxu0 0
  %1476 = vmatpush1.bf16.msra.mxu0 %v321
  %1477 = vmatprep.subr.bf16.mxu0 0
  %1478 = vmatpush1.bf16.msra.mxu0 %v322
  %1479 = vmatprep.subr.bf16.mxu0 0
  %1480 = vmatpush1.bf16.msra.mxu0 %v323
  %1481 = vmatprep.subr.bf16.mxu0 0
  %1482 = vmatpush1.bf16.msra.mxu0 %v324
  %1483 = vmatprep.subr.bf16.mxu0 0
  %1484 = vmatpush1.bf16.msra.mxu0 %v325
  %1485 = vmatprep.subr.bf16.mxu0 0
  %1486 = vmatpush1.bf16.msra.mxu0 %v326
  %1487 = vmatprep.subr.bf16.mxu0 0
  %1488 = vmatpush1.bf16.msra.mxu0 %v327
  %1489 = vmatprep.subr.bf16.mxu0 0
  %1490 = vmatpush1.bf16.msra.mxu0 %v328
  %1491 = vmatprep.subr.bf16.mxu0 0
  %1492 = vmatpush1.bf16.msra.mxu0 %v329
  %1493 = vmatprep.subr.bf16.mxu0 0
  %1494 = vmatpush1.bf16.msra.mxu0 %v330
  %1495 = vmatprep.subr.bf16.mxu0 0
  %1496 = vmatpush1.bf16.msra.mxu0 %v331
  %1497 = vmatprep.subr.bf16.mxu0 0
  %1498 = vmatpush1.bf16.msra.mxu0 %v332
  %1499 = vmatprep.subr.bf16.mxu0 0
  %1500 = vmatpush1.bf16.msra.mxu0 %v333
  %1501 = vmatprep.mubr.bf16.mxu0 %v1400
  %1502 = vmatmul.mubr.bf16.gmra.mrb[0].mxu0 %v1399
  %v1503 = vpop.f32.mrb[0].mxu0
  %v1504 = vadd.f32 0.0, %v1503
  %v1505 = vpop.f32.mrb[0].mxu0
  %v1506 = vpop.f32.mrb[0].mxu0
  %v1507 = vadd.f32 0.0, %v1506
  %v1508 = vpop.f32.mrb[0].mxu0
  %1509 = vmatprep.mubr.bf16.mxu0 %v1404
  %1510 = vmatmul.mubr.bf16.gmra.mrb[0].mxu0 %v1403
  %v1511 = vpop.f32.mrb[0].mxu0
  %v1512 = vadd.f32 0.0, %v1511
  %v1513 = vpop.f32.mrb[0].mxu0
  %v1514 = vpop.f32.mrb[0].mxu0
  %v1515 = vadd.f32 0.0, %v1514
  %v1516 = vpop.f32.mrb[0].mxu0
  %1517 = vmatprep.mubr.bf16.mxu0 %v1408
  %1518 = vmatmul.mubr.bf16.gmra.mrb[0].mxu0 %v1407
  %v1519 = vpop.f32.mrb[0].mxu0
  %v1520 = vadd.f32 0.0, %v1519
  %v1521 = vpop.f32.mrb[0].mxu0
  %v1522 = vpop.f32.mrb[0].mxu0
  %v1523 = vadd.f32 0.0, %v1522
  %v1524 = vpop.f32.mrb[0].mxu0
  %1525 = vmatprep.mubr.bf16.mxu0 %v1412
  %1526 = vmatmul.mubr.bf16.gmra.mrb[0].mxu0 %v1411
  %v1527 = vpop.f32.mrb[0].mxu0
  %v1528 = vadd.f32 0.0, %v1527
  %v1529 = vpop.f32.mrb[0].mxu0
  %v1530 = vpop.f32.mrb[0].mxu0
  %v1531 = vadd.f32 0.0, %v1530
  %v1532 = vpop.f32.mrb[0].mxu0
  %1533 = vmatprep.mubr.bf16.mxu0 %v1416
  %1534 = vmatmul.mubr.bf16.gmra.mrb[0].mxu0 %v1415
  %v1535 = vpop.f32.mrb[0].mxu0
  %v1536 = vadd.f32 0.0, %v1535
  %v1537 = vpop.f32.mrb[0].mxu0
  %v1538 = vpop.f32.mrb[0].mxu0
  %v1539 = vadd.f32 0.0, %v1538
  %v1540 = vpop.f32.mrb[0].mxu0
  %1541 = vmatprep.mubr.bf16.mxu0 %v1420
  %1542 = vmatmul.mubr.bf16.gmra.mrb[0].mxu0 %v1419
  %v1543 = vpop.f32.mrb[0].mxu0
  %v1544 = vadd.f32 0.0, %v1543
  %v1545 = vpop.f32.mrb[0].mxu0
  %v1546 = vpop.f32.mrb[0].mxu0
  %v1547 = vadd.f32 0.0, %v1546
  %v1548 = vpop.f32.mrb[0].mxu0
  %1549 = vmatprep.mubr.bf16.mxu0 %v1424
  %1550 = vmatmul.mubr.bf16.gmra.mrb[0].mxu0 %v1423
  %v1551 = vpop.f32.mrb[0].mxu0
  %v1552 = vadd.f32 0.0, %v1551
  %v1553 = vpop.f32.mrb[0].mxu0
  %v1554 = vpop.f32.mrb[0].mxu0
  %v1555 = vpop.f32.mrb[0].mxu0
  %1556 = vdwg.mxu0
  %1557 = vmatprep.subr.bf16.mxu0 0
  %1558 = vmatpush1.bf16.msra.mxu0 %v334
  %1559 = vmatprep.subr.bf16.mxu0 0
  %1560 = vmatpush1.bf16.msra.mxu0 %v335
  %1561 = vmatprep.subr.bf16.mxu0 0
  %1562 = vmatpush1.bf16.msra.mxu0 %v336
  %1563 = vmatprep.subr.bf16.mxu0 0
  %1564 = vmatpush1.bf16.msra.mxu0 %v337
  %1565 = vmatprep.subr.bf16.mxu0 0
  %1566 = vmatpush1.bf16.msra.mxu0 %v338
  %1567 = vmatprep.subr.bf16.mxu0 0
  %1568 = vmatpush1.bf16.msra.mxu0 %v339
  %1569 = vmatprep.subr.bf16.mxu0 0
  %1570 = vmatpush1.bf16.msra.mxu0 %v340
  %1571 = vmatprep.subr.bf16.mxu0 0
  %1572 = vmatpush1.bf16.msra.mxu0 %v341
  %1573 = vmatprep.subr.bf16.mxu0 0
  %1574 = vmatpush1.bf16.msra.mxu0 %v342
  %1575 = vmatprep.subr.bf16.mxu0 0
  %1576 = vmatpush1.bf16.msra.mxu0 0
  %1577 = vmatprep.subr.bf16.mxu0 0
  %1578 = vmatpush1.bf16.msra.mxu0 0
  %1579 = vmatprep.subr.bf16.mxu0 0
  %1580 = vmatpush1.bf16.msra.mxu0 0
  %1581 = vmatprep.subr.bf16.mxu0 0
  %1582 = vmatpush1.bf16.msra.mxu0 0
  %1583 = vmatprep.subr.bf16.mxu0 0
  %1584 = vmatpush1.bf16.msra.mxu0 0
  %1585 = vmatprep.subr.bf16.mxu0 0
  %1586 = vmatpush1.bf16.msra.mxu0 0
  %1587 = vmatprep.subr.bf16.mxu0 0
  %1588 = vmatpush1.bf16.msra.mxu0 0
  %1589 = vmatprep.mubr.bf16.mxu0 %v1449
  %1590 = vmatmul.mubr.bf16.gmra.mrb[0].mxu0 %v1401
  %v1591 = vpop.f32.mrb[0].mxu0
  %v1592 = vadd.f32 %v1504, %v1591
  %v1593 = vpop.f32.mrb[0].mxu0
  %v1594 = vpop.f32.mrb[0].mxu0
  %v1595 = vadd.f32 %v1507, %v1594
  %v1596 = vpop.f32.mrb[0].mxu0
  %1597 = vmatprep.mubr.bf16.mxu0 %v1452
  %1598 = vmatmul.mubr.bf16.gmra.mrb[0].mxu0 %v1405
  %v1599 = vpop.f32.mrb[0].mxu0
  %v1600 = vadd.f32 %v1512, %v1599
  %v1601 = vpop.f32.mrb[0].mxu0
  %v1602 = vpop.f32.mrb[0].mxu0
  %v1603 = vadd.f32 %v1515, %v1602
  %v1604 = vpop.f32.mrb[0].mxu0
  %1605 = vmatprep.mubr.bf16.mxu0 %v1455
  %1606 = vmatmul.mubr.bf16.gmra.mrb[0].mxu0 %v1409
  %v1607 = vpop.f32.mrb[0].mxu0
  %v1608 = vadd.f32 %v1520, %v1607
  %v1609 = vpop.f32.mrb[0].mxu0
  %v1610 = vpop.f32.mrb[0].mxu0
  %v1611 = vadd.f32 %v1523, %v1610
  %v1612 = vpop.f32.mrb[0].mxu0
  %1613 = vmatprep.mubr.bf16.mxu0 %v1458
  %1614 = vmatmul.mubr.bf16.gmra.mrb[0].mxu0 %v1413
  %v1615 = vpop.f32.mrb[0].mxu0
  %v1616 = vadd.f32 %v1528, %v1615
  %v1617 = vpop.f32.mrb[0].mxu0
  %v1618 = vpop.f32.mrb[0].mxu0
  %v1619 = vadd.f32 %v1531, %v1618
  %v1620 = vpop.f32.mrb[0].mxu0
  %1621 = vmatprep.mubr.bf16.mxu0 %v1461
  %1622 = vmatmul.mubr.bf16.gmra.mrb[0].mxu0 %v1417
  %v1623 = vpop.f32.mrb[0].mxu0
  %v1624 = vadd.f32 %v1536, %v1623
  %v1625 = vpop.f32.mrb[0].mxu0
  %v1626 = vpop.f32.mrb[0].mxu0
  %v1627 = vadd.f32 %v1539, %v1626
  %v1628 = vpop.f32.mrb[0].mxu0
  %1629 = vmatprep.mubr.bf16.mxu0 %v1464
  %1630 = vmatmul.mubr.bf16.gmra.mrb[0].mxu0 %v1421
  %v1631 = vpop.f32.mrb[0].mxu0
  %v1632 = vadd.f32 %v1544, %v1631
  %v1633 = vpop.f32.mrb[0].mxu0
  %v1634 = vpop.f32.mrb[0].mxu0
  %v1635 = vadd.f32 %v1547, %v1634
  %v1636 = vpop.f32.mrb[0].mxu0
  %1637 = vmatprep.mubr.bf16.mxu0 %v1467
  %1638 = vmatmul.mubr.bf16.gmra.mrb[0].mxu0 %v1425
  %v1639 = vpop.f32.mrb[0].mxu0
  %v1640 = vadd.f32 %v1552, %v1639
  %v1641 = vpop.f32.mrb[0].mxu0
  %v1642 = vpop.f32.mrb[0].mxu0
  %v1643 = vpop.f32.mrb[0].mxu0
  %1644 = vdwg.mxu0
  %v1645 = vmax.f32 %v1281, %v1592
  %v1646 = vmax.f32 %v1282, %v1595
  %v1647 = vmax.f32 %v1283, %v1600
  %v1648 = vmax.f32 %v1284, %v1603
  %v1649 = vmax.f32 %v1285, %v1608
  %v1650 = vmax.f32 %v1286, %v1611
  %v1651 = vmax.f32 %v1287, %v1616
  %v1652 = vmax.f32 %v1288, %v1619
  %v1653 = vmax.f32 %v1289, %v1624
  %v1654 = vmax.f32 %v1290, %v1627
  %v1655 = vmax.f32 %v1291, %v1632
  %v1656 = vmax.f32 %v1292, %v1635
  %v1657 = vmax.f32 %v1293, %v1640
  %v1658 = vld [vmem:[%s2] sm:$0x1]
  %v1660 = vlaneseq
  %v1661 = vshrl.u32 %v1660, 7
  %v1662 = vsub.s32 0, %v1661
  %v1663 = vrot.slane %v1658, %v1662
  %v1665 = vadd.f32 %v1645, %v1663
  %v1666 = vadd.f32 %v1646, %v1663
  %v1667 = vadd.f32 %v1647, %v1663
  %v1668 = vadd.f32 %v1648, %v1663
  %v1669 = vadd.f32 %v1649, %v1663
  %v1670 = vadd.f32 %v1650, %v1663
  %v1671 = vadd.f32 %v1651, %v1663
  %v1672 = vadd.f32 %v1652, %v1663
  %v1673 = vadd.f32 %v1653, %v1663
  %v1674 = vadd.f32 %v1654, %v1663
  %v1675 = vadd.f32 %v1655, %v1663
  %v1676 = vadd.f32 %v1656, %v1663
  %v1677 = vadd.f32 %v1657, %v1663
  %v1678 = vmax.f32 %v1665, 0.0
  %v1679 = vmax.f32 %v1666, 0.0
  %v1680 = vmax.f32 %v1667, 0.0
  %v1681 = vmax.f32 %v1668, 0.0
  %v1682 = vmax.f32 %v1669, 0.0
  %v1683 = vmax.f32 %v1670, 0.0
  %v1684 = vmax.f32 %v1671, 0.0
  %v1685 = vmax.f32 %v1672, 0.0
  %v1686 = vmax.f32 %v1673, 0.0
  %v1687 = vmax.f32 %v1674, 0.0
  %v1688 = vmax.f32 %v1675, 0.0
  %v1689 = vmax.f32 %v1676, 0.0
  %v1690 = vmax.f32 %v1677, 0.0
  %vm1691 = vcmask 523264
  %1692 = vst.msk [vmem:[%s3] sm:$0xff] %vm1691, %v1678
  %1693 = vst.msk [vmem:[%s3 + $0x8] sm:$0xff] %vm1691, %v1679
  %1694 = vst.msk [vmem:[%s3 + $0x10] sm:$0xff] %vm1691, %v1680
  %1695 = vst.msk [vmem:[%s3 + $0x18] sm:$0xff] %vm1691, %v1681
  %1696 = vst.msk [vmem:[%s3 + $0x20] sm:$0xff] %vm1691, %v1682
  %1697 = vst.msk [vmem:[%s3 + $0x28] sm:$0xff] %vm1691, %v1683
  %1698 = vst.msk [vmem:[%s3 + $0x30] sm:$0xff] %vm1691, %v1684
  %1699 = vst.msk [vmem:[%s3 + $0x38] sm:$0xff] %vm1691, %v1685
  %1700 = vst.msk [vmem:[%s3 + $0x40] sm:$0xff] %vm1691, %v1686
  %1701 = vst.msk [vmem:[%s3 + $0x48] sm:$0xff] %vm1691, %v1687
  %1702 = vst.msk [vmem:[%s3 + $0x50] sm:$0xff] %vm1691, %v1688
  %1703 = vst.msk [vmem:[%s3 + $0x58] sm:$0xff] %vm1691, %v1689
  %1704 = vst.msk [vmem:[%s3 + $0x60] sm:$0xff] %vm1691, %v1690
  // Predicated region
  $region14: #{cnn_forward.4} parent=0 // pred_check
    _
  $region15: #{cnn_forward.4} parent=0 // pred_check_branch
    %1706 = sbr.rel (0) target = $region17
  $region16: #{cnn_forward.4} parent=0 // pred_region
    _
  $region17: #{cnn_forward.4} parent=0 // pred_fallthru
    _
  // Predicated region
  $region18: #{cnn_forward.4} parent=0 // pred_check
    _
  $region19: #{cnn_forward.4} parent=0 // pred_check_branch
    %1708 = sbr.rel (0) target = $region21
  $region20: #{cnn_forward.4} parent=0 // pred_region
    _
  $region21: #{cnn_forward.4} parent=0 // pred_fallthru
    _

// kernel: cnn_forward.5
$region0: #{cnn_forward.5}
  #allocation0 [shape = 'u32[]', space=smem, size = 0x4, offset = 0x4, fixed_abs, tag = 'smem constant byte address 0x4 - core index']
  #allocation1 [shape = 'u32[144,128]{1,0:T(1,128)}', space=vmem, size = 0x12000, scoped, tag = 'internal scratch']
  %s0 = inlined_call_operand.vmem [shape: bf16[2,3136], index: 0, kind: input, shape index: {}]
  %s1 = inlined_call_operand.vmem [shape: bf16[3136,128], index: 1, kind: input, shape index: {}]
  %s2 = inlined_call_operand.vmem [shape: f32[1,128], index: 2, kind: input, shape index: {}]
  %s3 = inlined_call_operand.vmem [shape: bf16[128,128], index: 3, kind: input, shape index: {}]
  %s4 = inlined_call_operand.vmem [shape: f32[1,128], index: 4, kind: input, shape index: {}]
  %s5 = inlined_call_operand.hbm [shape: f32[2,128], index: 5, kind: output, shape index: {}]
  %s6 = sld [smem:[#allocation0]]
  $region30: #{cnn_forward.5} parent=0
    _
  %s8 = ssub.s32 1, %s6
  %s9 = scalar_select 0, %s8, %s6
  $region1: #{cnn_forward.5} parent=0
    #allocation2 [shape = 'u8[1024]{0}', space=vmem, size = 0x400, scoped, tag = 'output window, operand 0, single buffered']
    #allocation3 [shape = 's32[1]{0}', space=sflag, size = 0x4, scoped, tag = 'scoped memory for cnn_forward.5']
    %10 = vsyncpa [#allocation3], 0
    // Predicated region
    $region2: #{cnn_forward.5} parent=1 // pred_check
      _
    $region3: #{cnn_forward.5} parent=1 // pred_check_branch
      %12 = sbr.rel (0) target = $region5
    $region4: #{cnn_forward.5} parent=1 // pred_region
      _
    $region5: #{cnn_forward.5} parent=1 // pred_fallthru
      _
    // Predicated region
    $region6: #{cnn_forward.5} parent=1 // pred_check
      _
    $region7: #{cnn_forward.5} parent=1 // pred_check_branch
      %14 = sbr.rel (0) target = $region9
    $region8: #{cnn_forward.5} parent=1 // pred_region
      _
    $region9: #{cnn_forward.5} parent=1 // pred_fallthru
      _
    // Predicated region
    $region10: #{cnn_forward.5} parent=1 // pred_check
      _
    $region11: #{cnn_forward.5} parent=1 // pred_check_branch
      %16 = sbr.rel (0) target = $region13
    $region12: #{cnn_forward.5} parent=1 // pred_region
      _
    $region13: #{cnn_forward.5} parent=1 // pred_fallthru
      _
    // Predicated region
    $region14: #{cnn_forward.5} parent=1 // pred_check
      _
    $region15: #{cnn_forward.5} parent=1 // pred_check_branch
      %18 = sbr.rel (0) target = $region17
    $region16: #{cnn_forward.5} parent=1 // pred_region
      _
    $region17: #{cnn_forward.5} parent=1 // pred_fallthru
      _
    // Predicated region
    $region18: #{cnn_forward.5} parent=1 // pred_check
      _
    $region19: #{cnn_forward.5} parent=1 // pred_check_branch
      %20 = sbr.rel (0) target = $region21
    $region20: #{cnn_forward.5} parent=1 // pred_region
      _
    $region21: #{cnn_forward.5} parent=1 // pred_fallthru
      _
    %v22 = vld [vmem:[%s0] sm:$0xff]
    %v23 = vld [vmem:[%s0 + $0x8] sm:$0xff]
    %v24 = vld [vmem:[%s0 + $0x10] sm:$0xff]
    %v25 = vld [vmem:[%s0 + $0x18] sm:$0x1]
    %v26 = vld [vmem:[%s1] sm:$0xf]
    %v27 = vld [vmem:[%s1 + $0x4] sm:$0xf]
    %v28 = vld [vmem:[%s1 + $0x8] sm:$0xf]
    %v29 = vld [vmem:[%s1 + $0xc] sm:$0xf]
    %v30 = vld [vmem:[%s1 + $0x10] sm:$0xf]
    %v31 = vld [vmem:[%s1 + $0x14] sm:$0xf]
    %v32 = vld [vmem:[%s1 + $0x18] sm:$0xf]
    %v33 = vld [vmem:[%s1 + $0x1c] sm:$0xf]
    %v34 = vld [vmem:[%s1 + $0x20] sm:$0xf]
    %v35 = vld [vmem:[%s1 + $0x24] sm:$0xf]
    %v36 = vld [vmem:[%s1 + $0x28] sm:$0xf]
    %v37 = vld [vmem:[%s1 + $0x2c] sm:$0xf]
    %v38 = vld [vmem:[%s1 + $0x30] sm:$0xf]
    %v39 = vld [vmem:[%s1 + $0x34] sm:$0xf]
    %v40 = vld [vmem:[%s1 + $0x38] sm:$0xf]
    %v41 = vld [vmem:[%s1 + $0x3c] sm:$0xf]
    %v42 = vld [vmem:[%s1 + $0x40] sm:$0xf]
    %v43 = vld [vmem:[%s1 + $0x44] sm:$0xf]
    %v44 = vld [vmem:[%s1 + $0x48] sm:$0xf]
    %v45 = vld [vmem:[%s1 + $0x4c] sm:$0xf]
    %v46 = vld [vmem:[%s1 + $0x50] sm:$0xf]
    %v47 = vld [vmem:[%s1 + $0x54] sm:$0xf]
    %v48 = vld [vmem:[%s1 + $0x58] sm:$0xf]
    %v49 = vld [vmem:[%s1 + $0x5c] sm:$0xf]
    %v50 = vld [vmem:[%s1 + $0x60] sm:$0xf]
    %v51 = vld [vmem:[%s1 + $0x64] sm:$0xf]
    %v52 = vld [vmem:[%s1 + $0x68] sm:$0xf]
    %v53 = vld [vmem:[%s1 + $0x6c] sm:$0xf]
    %v54 = vld [vmem:[%s1 + $0x70] sm:$0xf]
    %v55 = vld [vmem:[%s1 + $0x74] sm:$0xf]
    %v56 = vld [vmem:[%s1 + $0x78] sm:$0xf]
    %v57 = vld [vmem:[%s1 + $0x7c] sm:$0xf]
    %v58 = vld [vmem:[%s1 + $0x80] sm:$0xf]
    %v59 = vld [vmem:[%s1 + $0x84] sm:$0xf]
    %v60 = vld [vmem:[%s1 + $0x88] sm:$0xf]
    %v61 = vld [vmem:[%s1 + $0x8c] sm:$0xf]
    %v62 = vld [vmem:[%s1 + $0x90] sm:$0xf]
    %v63 = vld [vmem:[%s1 + $0x94] sm:$0xf]
    %v64 = vld [vmem:[%s1 + $0x98] sm:$0xf]
    %v65 = vld [vmem:[%s1 + $0x9c] sm:$0xf]
    %v66 = vld [vmem:[%s1 + $0xa0] sm:$0xf]
    %v67 = vld [vmem:[%s1 + $0xa4] sm:$0xf]
    %v68 = vld [vmem:[%s1 + $0xa8] sm:$0xf]
    %v69 = vld [vmem:[%s1 + $0xac] sm:$0xf]
    %v70 = vld [vmem:[%s1 + $0xb0] sm:$0xf]
    %v71 = vld [vmem:[%s1 + $0xb4] sm:$0xf]
    %v72 = vld [vmem:[%s1 + $0xb8] sm:$0xf]
    %v73 = vld [vmem:[%s1 + $0xbc] sm:$0xf]
    %v74 = vld [vmem:[%s1 + $0xc0] sm:$0xf]
    %v75 = vld [vmem:[%s1 + $0xc4] sm:$0xf]
    %v76 = vld [vmem:[%s1 + $0xc8] sm:$0xf]
    %v77 = vld [vmem:[%s1 + $0xcc] sm:$0xf]
    %v78 = vld [vmem:[%s1 + $0xd0] sm:$0xf]
    %v79 = vld [vmem:[%s1 + $0xd4] sm:$0xf]
    %v80 = vld [vmem:[%s1 + $0xd8] sm:$0xf]
    %v81 = vld [vmem:[%s1 + $0xdc] sm:$0xf]
    %v82 = vld [vmem:[%s1 + $0xe0] sm:$0xf]
    %v83 = vld [vmem:[%s1 + $0xe4] sm:$0xf]
    %v84 = vld [vmem:[%s1 + $0xe8] sm:$0xf]
    %v85 = vld [vmem:[%s1 + $0xec] sm:$0xf]
    %v86 = vld [vmem:[%s1 + $0xf0] sm:$0xf]
    %v87 = vld [vmem:[%s1 + $0xf4] sm:$0xf]
    %v88 = vld [vmem:[%s1 + $0xf8] sm:$0xf]
    %v89 = vld [vmem:[%s1 + $0xfc] sm:$0xf]
    %v90 = vld [vmem:[%s1 + $0x100] sm:$0xf]
    %v91 = vld [vmem:[%s1 + $0x104] sm:$0xf]
    %v92 = vld [vmem:[%s1 + $0x108] sm:$0xf]
    %v93 = vld [vmem:[%s1 + $0x10c] sm:$0xf]
    %v94 = vld [vmem:[%s1 + $0x110] sm:$0xf]
    %v95 = vld [vmem:[%s1 + $0x114] sm:$0xf]
    %v96 = vld [vmem:[%s1 + $0x118] sm:$0xf]
    %v97 = vld [vmem:[%s1 + $0x11c] sm:$0xf]
    %v98 = vld [vmem:[%s1 + $0x120] sm:$0xf]
    %v99 = vld [vmem:[%s1 + $0x124] sm:$0xf]
    %v100 = vld [vmem:[%s1 + $0x128] sm:$0xf]
    %v101 = vld [vmem:[%s1 + $0x12c] sm:$0xf]
    %v102 = vld [vmem:[%s1 + $0x130] sm:$0xf]
    %v103 = vld [vmem:[%s1 + $0x134] sm:$0xf]
    %v104 = vld [vmem:[%s1 + $0x138] sm:$0xf]
    %v105 = vld [vmem:[%s1 + $0x13c] sm:$0xf]
    %v106 = vld [vmem:[%s1 + $0x140] sm:$0xf]
    %v107 = vld [vmem:[%s1 + $0x144] sm:$0xf]
    %v108 = vld [vmem:[%s1 + $0x148] sm:$0xf]
    %v109 = vld [vmem:[%s1 + $0x14c] sm:$0xf]
    %v110 = vld [vmem:[%s1 + $0x150] sm:$0xf]
    %v111 = vld [vmem:[%s1 + $0x154] sm:$0xf]
    %v112 = vld [vmem:[%s1 + $0x158] sm:$0xf]
    %v113 = vld [vmem:[%s1 + $0x15c] sm:$0xf]
    %v114 = vld [vmem:[%s1 + $0x160] sm:$0xf]
    %v115 = vld [vmem:[%s1 + $0x164] sm:$0xf]
    %v116 = vld [vmem:[%s1 + $0x168] sm:$0xf]
    %v117 = vld [vmem:[%s1 + $0x16c] sm:$0xf]
    %v118 = vld [vmem:[%s1 + $0x170] sm:$0xf]
    %v119 = vld [vmem:[%s1 + $0x174] sm:$0xf]
    %v120 = vld [vmem:[%s1 + $0x178] sm:$0xf]
    %v121 = vld [vmem:[%s1 + $0x17c] sm:$0xf]
    %v122 = vld [vmem:[%s1 + $0x180] sm:$0xf]
    %v123 = vld [vmem:[%s1 + $0x184] sm:$0xf]
    %v124 = vld [vmem:[%s1 + $0x188] sm:$0xf]
    %v125 = vld [vmem:[%s1 + $0x18c] sm:$0xf]
    %v126 = vld [vmem:[%s1 + $0x190] sm:$0xf]
    %v127 = vld [vmem:[%s1 + $0x194] sm:$0xf]
    %v128 = vld [vmem:[%s1 + $0x198] sm:$0xf]
    %v129 = vld [vmem:[%s1 + $0x19c] sm:$0xf]
    %v130 = vld [vmem:[%s1 + $0x1a0] sm:$0xf]
    %v131 = vld [vmem:[%s1 + $0x1a4] sm:$0xf]
    %v132 = vld [vmem:[%s1 + $0x1a8] sm:$0xf]
    %v133 = vld [vmem:[%s1 + $0x1ac] sm:$0xf]
    %v134 = vld [vmem:[%s1 + $0x1b0] sm:$0xf]
    %v135 = vld [vmem:[%s1 + $0x1b4] sm:$0xf]
    %v136 = vld [vmem:[%s1 + $0x1b8] sm:$0xf]
    %v137 = vld [vmem:[%s1 + $0x1bc] sm:$0xf]
    %v138 = vld [vmem:[%s1 + $0x1c0] sm:$0xf]
    %v139 = vld [vmem:[%s1 + $0x1c4] sm:$0xf]
    %v140 = vld [vmem:[%s1 + $0x1c8] sm:$0xf]
    %v141 = vld [vmem:[%s1 + $0x1cc] sm:$0xf]
    %v142 = vld [vmem:[%s1 + $0x1d0] sm:$0xf]
    %v143 = vld [vmem:[%s1 + $0x1d4] sm:$0xf]
    %v144 = vld [vmem:[%s1 + $0x1d8] sm:$0xf]
    %v145 = vld [vmem:[%s1 + $0x1dc] sm:$0xf]
    %v146 = vld [vmem:[%s1 + $0x1e0] sm:$0xf]
    %v147 = vld [vmem:[%s1 + $0x1e4] sm:$0xf]
    %v148 = vld [vmem:[%s1 + $0x1e8] sm:$0xf]
    %v149 = vld [vmem:[%s1 + $0x1ec] sm:$0xf]
    %v150 = vld [vmem:[%s1 + $0x1f0] sm:$0xf]
    %v151 = vld [vmem:[%s1 + $0x1f4] sm:$0xf]
    %v152 = vld [vmem:[%s1 + $0x1f8] sm:$0xf]
    %v153 = vld [vmem:[%s1 + $0x1fc] sm:$0xf]
    %v154 = vld [vmem:[%s1 + $0x200] sm:$0xf]
    %v155 = vld [vmem:[%s1 + $0x204] sm:$0xf]
    %v156 = vld [vmem:[%s1 + $0x208] sm:$0xf]
    %v157 = vld [vmem:[%s1 + $0x20c] sm:$0xf]
    %v158 = vld [vmem:[%s1 + $0x210] sm:$0xf]
    %v159 = vld [vmem:[%s1 + $0x214] sm:$0xf]
    %v160 = vld [vmem:[%s1 + $0x218] sm:$0xf]
    %v161 = vld [vmem:[%s1 + $0x21c] sm:$0xf]
    %v162 = vld [vmem:[%s1 + $0x220] sm:$0xf]
    %v163 = vld [vmem:[%s1 + $0x224] sm:$0xf]
    %v164 = vld [vmem:[%s1 + $0x228] sm:$0xf]
    %v165 = vld [vmem:[%s1 + $0x22c] sm:$0xf]
    %v166 = vld [vmem:[%s1 + $0x230] sm:$0xf]
    %v167 = vld [vmem:[%s1 + $0x234] sm:$0xf]
    %v168 = vld [vmem:[%s1 + $0x238] sm:$0xf]
    %v169 = vld [vmem:[%s1 + $0x23c] sm:$0xf]
    %v170 = vld [vmem:[%s1 + $0x240] sm:$0xf]
    %v171 = vld [vmem:[%s1 + $0x244] sm:$0xf]
    %v172 = vld [vmem:[%s1 + $0x248] sm:$0xf]
    %v173 = vld [vmem:[%s1 + $0x24c] sm:$0xf]
    %v174 = vld [vmem:[%s1 + $0x250] sm:$0xf]
    %v175 = vld [vmem:[%s1 + $0x254] sm:$0xf]
    %v176 = vld [vmem:[%s1 + $0x258] sm:$0xf]
    %v177 = vld [vmem:[%s1 + $0x25c] sm:$0xf]
    %v178 = vld [vmem:[%s1 + $0x260] sm:$0xf]
    %v179 = vld [vmem:[%s1 + $0x264] sm:$0xf]
    %v180 = vld [vmem:[%s1 + $0x268] sm:$0xf]
    %v181 = vld [vmem:[%s1 + $0x26c] sm:$0xf]
    %v182 = vld [vmem:[%s1 + $0x270] sm:$0xf]
    %v183 = vld [vmem:[%s1 + $0x274] sm:$0xf]
    %v184 = vld [vmem:[%s1 + $0x278] sm:$0xf]
    %v185 = vld [vmem:[%s1 + $0x27c] sm:$0xf]
    %v186 = vld [vmem:[%s1 + $0x280] sm:$0xf]
    %v187 = vld [vmem:[%s1 + $0x284] sm:$0xf]
    %v188 = vld [vmem:[%s1 + $0x288] sm:$0xf]
    %v189 = vld [vmem:[%s1 + $0x28c] sm:$0xf]
    %v190 = vld [vmem:[%s1 + $0x290] sm:$0xf]
    %v191 = vld [vmem:[%s1 + $0x294] sm:$0xf]
    %v192 = vld [vmem:[%s1 + $0x298] sm:$0xf]
    %v193 = vld [vmem:[%s1 + $0x29c] sm:$0xf]
    %v194 = vld [vmem:[%s1 + $0x2a0] sm:$0xf]
    %v195 = vld [vmem:[%s1 + $0x2a4] sm:$0xf]
    %v196 = vld [vmem:[%s1 + $0x2a8] sm:$0xf]
    %v197 = vld [vmem:[%s1 + $0x2ac] sm:$0xf]
    %v198 = vld [vmem:[%s1 + $0x2b0] sm:$0xf]
    %v199 = vld [vmem:[%s1 + $0x2b4] sm:$0xf]
    %v200 = vld [vmem:[%s1 + $0x2b8] sm:$0xf]
    %v201 = vld [vmem:[%s1 + $0x2bc] sm:$0xf]
    %v202 = vld [vmem:[%s1 + $0x2c0] sm:$0xf]
    %v203 = vld [vmem:[%s1 + $0x2c4] sm:$0xf]
    %v204 = vld [vmem:[%s1 + $0x2c8] sm:$0xf]
    %v205 = vld [vmem:[%s1 + $0x2cc] sm:$0xf]
    %v206 = vld [vmem:[%s1 + $0x2d0] sm:$0xf]
    %v207 = vld [vmem:[%s1 + $0x2d4] sm:$0xf]
    %v208 = vld [vmem:[%s1 + $0x2d8] sm:$0xf]
    %v209 = vld [vmem:[%s1 + $0x2dc] sm:$0xf]
    %v210 = vld [vmem:[%s1 + $0x2e0] sm:$0xf]
    %v211 = vld [vmem:[%s1 + $0x2e4] sm:$0xf]
    %v212 = vld [vmem:[%s1 + $0x2e8] sm:$0xf]
    %v213 = vld [vmem:[%s1 + $0x2ec] sm:$0xf]
    %v214 = vld [vmem:[%s1 + $0x2f0] sm:$0xf]
    %v215 = vld [vmem:[%s1 + $0x2f4] sm:$0xf]
    %v216 = vld [vmem:[%s1 + $0x2f8] sm:$0xf]
    %v217 = vld [vmem:[%s1 + $0x2fc] sm:$0xf]
    %v218 = vld [vmem:[%s1 + $0x300] sm:$0xf]
    %v219 = vld [vmem:[%s1 + $0x304] sm:$0xf]
    %v220 = vld [vmem:[%s1 + $0x308] sm:$0xf]
    %v221 = vld [vmem:[%s1 + $0x30c] sm:$0xf]
    %v222 = vld [vmem:[%s1 + $0x310] sm:$0xf]
    %v223 = vld [vmem:[%s1 + $0x314] sm:$0xf]
    %v224 = vld [vmem:[%s1 + $0x318] sm:$0xf]
    %v225 = vld [vmem:[%s1 + $0x31c] sm:$0xf]
    %v226 = vld [vmem:[%s1 + $0x320] sm:$0xf]
    %v227 = vld [vmem:[%s1 + $0x324] sm:$0xf]
    %v228 = vld [vmem:[%s1 + $0x328] sm:$0xf]
    %v229 = vld [vmem:[%s1 + $0x32c] sm:$0xf]
    %v230 = vld [vmem:[%s1 + $0x330] sm:$0xf]
    %v231 = vld [vmem:[%s1 + $0x334] sm:$0xf]
    %v232 = vld [vmem:[%s1 + $0x338] sm:$0xf]
    %v233 = vld [vmem:[%s1 + $0x33c] sm:$0xf]
    %v234 = vld [vmem:[%s1 + $0x340] sm:$0xf]
    %v235 = vld [vmem:[%s1 + $0x344] sm:$0xf]
    %v236 = vld [vmem:[%s1 + $0x348] sm:$0xf]
    %v237 = vld [vmem:[%s1 + $0x34c] sm:$0xf]
    %v238 = vld [vmem:[%s1 + $0x350] sm:$0xf]
    %v239 = vld [vmem:[%s1 + $0x354] sm:$0xf]
    %v240 = vld [vmem:[%s1 + $0x358] sm:$0xf]
    %v241 = vld [vmem:[%s1 + $0x35c] sm:$0xf]
    %v242 = vld [vmem:[%s1 + $0x360] sm:$0xf]
    %v243 = vld [vmem:[%s1 + $0x364] sm:$0xf]
    %v244 = vld [vmem:[%s1 + $0x368] sm:$0xf]
    %v245 = vld [vmem:[%s1 + $0x36c] sm:$0xf]
    %v246 = vld [vmem:[%s1 + $0x370] sm:$0xf]
    %v247 = vld [vmem:[%s1 + $0x374] sm:$0xf]
    %v248 = vld [vmem:[%s1 + $0x378] sm:$0xf]
    %v249 = vld [vmem:[%s1 + $0x37c] sm:$0xf]
    %v250 = vld [vmem:[%s1 + $0x380] sm:$0xf]
    %v251 = vld [vmem:[%s1 + $0x384] sm:$0xf]
    %v252 = vld [vmem:[%s1 + $0x388] sm:$0xf]
    %v253 = vld [vmem:[%s1 + $0x38c] sm:$0xf]
    %v254 = vld [vmem:[%s1 + $0x390] sm:$0xf]
    %v255 = vld [vmem:[%s1 + $0x394] sm:$0xf]
    %v256 = vld [vmem:[%s1 + $0x398] sm:$0xf]
    %v257 = vld [vmem:[%s1 + $0x39c] sm:$0xf]
    %v258 = vld [vmem:[%s1 + $0x3a0] sm:$0xf]
    %v259 = vld [vmem:[%s1 + $0x3a4] sm:$0xf]
    %v260 = vld [vmem:[%s1 + $0x3a8] sm:$0xf]
    %v261 = vld [vmem:[%s1 + $0x3ac] sm:$0xf]
    %v262 = vld [vmem:[%s1 + $0x3b0] sm:$0xf]
    %v263 = vld [vmem:[%s1 + $0x3b4] sm:$0xf]
    %v264 = vld [vmem:[%s1 + $0x3b8] sm:$0xf]
    %v265 = vld [vmem:[%s1 + $0x3bc] sm:$0xf]
    %v266 = vld [vmem:[%s1 + $0x3c0] sm:$0xf]
    %v267 = vld [vmem:[%s1 + $0x3c4] sm:$0xf]
    %v268 = vld [vmem:[%s1 + $0x3c8] sm:$0xf]
    %v269 = vld [vmem:[%s1 + $0x3cc] sm:$0xf]
    %v270 = vld [vmem:[%s1 + $0x3d0] sm:$0xf]
    %v271 = vld [vmem:[%s1 + $0x3d4] sm:$0xf]
    %v272 = vld [vmem:[%s1 + $0x3d8] sm:$0xf]
    %v273 = vld [vmem:[%s1 + $0x3dc] sm:$0xf]
    %v274 = vld [vmem:[%s1 + $0x3e0] sm:$0xf]
    %v275 = vld [vmem:[%s1 + $0x3e4] sm:$0xf]
    %v276 = vld [vmem:[%s1 + $0x3e8] sm:$0xf]
    %v277 = vld [vmem:[%s1 + $0x3ec] sm:$0xf]
    %v278 = vld [vmem:[%s1 + $0x3f0] sm:$0xf]
    %v279 = vld [vmem:[%s1 + $0x3f4] sm:$0xf]
    %v280 = vld [vmem:[%s1 + $0x3f8] sm:$0xf]
    %v281 = vld [vmem:[%s1 + $0x3fc] sm:$0xf]
    %v282 = vld [vmem:[%s1 + $0x400] sm:$0xf]
    %v283 = vld [vmem:[%s1 + $0x404] sm:$0xf]
    %v284 = vld [vmem:[%s1 + $0x408] sm:$0xf]
    %v285 = vld [vmem:[%s1 + $0x40c] sm:$0xf]
    %v286 = vld [vmem:[%s1 + $0x410] sm:$0xf]
    %v287 = vld [vmem:[%s1 + $0x414] sm:$0xf]
    %v288 = vld [vmem:[%s1 + $0x418] sm:$0xf]
    %v289 = vld [vmem:[%s1 + $0x41c] sm:$0xf]
    %v290 = vld [vmem:[%s1 + $0x420] sm:$0xf]
    %v291 = vld [vmem:[%s1 + $0x424] sm:$0xf]
    %v292 = vld [vmem:[%s1 + $0x428] sm:$0xf]
    %v293 = vld [vmem:[%s1 + $0x42c] sm:$0xf]
    %v294 = vld [vmem:[%s1 + $0x430] sm:$0xf]
    %v295 = vld [vmem:[%s1 + $0x434] sm:$0xf]
    %v296 = vld [vmem:[%s1 + $0x438] sm:$0xf]
    %v297 = vld [vmem:[%s1 + $0x43c] sm:$0xf]
    %v298 = vld [vmem:[%s1 + $0x440] sm:$0xf]
    %v299 = vld [vmem:[%s1 + $0x444] sm:$0xf]
    %v300 = vld [vmem:[%s1 + $0x448] sm:$0xf]
    %v301 = vld [vmem:[%s1 + $0x44c] sm:$0xf]
    %v302 = vld [vmem:[%s1 + $0x450] sm:$0xf]
    %v303 = vld [vmem:[%s1 + $0x454] sm:$0xf]
    %v304 = vld [vmem:[%s1 + $0x458] sm:$0xf]
    %v305 = vld [vmem:[%s1 + $0x45c] sm:$0xf]
    %v306 = vld [vmem:[%s1 + $0x460] sm:$0xf]
    %v307 = vld [vmem:[%s1 + $0x464] sm:$0xf]
    %v308 = vld [vmem:[%s1 + $0x468] sm:$0xf]
    %v309 = vld [vmem:[%s1 + $0x46c] sm:$0xf]
    %v310 = vld [vmem:[%s1 + $0x470] sm:$0xf]
    %v311 = vld [vmem:[%s1 + $0x474] sm:$0xf]
    %v312 = vld [vmem:[%s1 + $0x478] sm:$0xf]
    %v313 = vld [vmem:[%s1 + $0x47c] sm:$0xf]
    %v314 = vld [vmem:[%s1 + $0x480] sm:$0xf]
    %v315 = vld [vmem:[%s1 + $0x484] sm:$0xf]
    %v316 = vld [vmem:[%s1 + $0x488] sm:$0xf]
    %v317 = vld [vmem:[%s1 + $0x48c] sm:$0xf]
    %v318 = vld [vmem:[%s1 + $0x490] sm:$0xf]
    %v319 = vld [vmem:[%s1 + $0x494] sm:$0xf]
    %v320 = vld [vmem:[%s1 + $0x498] sm:$0xf]
    %v321 = vld [vmem:[%s1 + $0x49c] sm:$0xf]
    %v322 = vld [vmem:[%s1 + $0x4a0] sm:$0xf]
    %v323 = vld [vmem:[%s1 + $0x4a4] sm:$0xf]
    %v324 = vld [vmem:[%s1 + $0x4a8] sm:$0xf]
    %v325 = vld [vmem:[%s1 + $0x4ac] sm:$0xf]
    %v326 = vld [vmem:[%s1 + $0x4b0] sm:$0xf]
    %v327 = vld [vmem:[%s1 + $0x4b4] sm:$0xf]
    %v328 = vld [vmem:[%s1 + $0x4b8] sm:$0xf]
    %v329 = vld [vmem:[%s1 + $0x4bc] sm:$0xf]
    %v330 = vld [vmem:[%s1 + $0x4c0] sm:$0xf]
    %v331 = vld [vmem:[%s1 + $0x4c4] sm:$0xf]
    %v332 = vld [vmem:[%s1 + $0x4c8] sm:$0xf]
    %v333 = vld [vmem:[%s1 + $0x4cc] sm:$0xf]
    %v334 = vld [vmem:[%s1 + $0x4d0] sm:$0xf]
    %v335 = vld [vmem:[%s1 + $0x4d4] sm:$0xf]
    %v336 = vld [vmem:[%s1 + $0x4d8] sm:$0xf]
    %v337 = vld [vmem:[%s1 + $0x4dc] sm:$0xf]
    %v338 = vld [vmem:[%s1 + $0x4e0] sm:$0xf]
    %v339 = vld [vmem:[%s1 + $0x4e4] sm:$0xf]
    %v340 = vld [vmem:[%s1 + $0x4e8] sm:$0xf]
    %v341 = vld [vmem:[%s1 + $0x4ec] sm:$0xf]
    %v342 = vld [vmem:[%s1 + $0x4f0] sm:$0xf]
    %v343 = vld [vmem:[%s1 + $0x4f4] sm:$0xf]
    %v344 = vld [vmem:[%s1 + $0x4f8] sm:$0xf]
    %v345 = vld [vmem:[%s1 + $0x4fc] sm:$0xf]
    %v346 = vld [vmem:[%s1 + $0x500] sm:$0xf]
    %v347 = vld [vmem:[%s1 + $0x504] sm:$0xf]
    %v348 = vld [vmem:[%s1 + $0x508] sm:$0xf]
    %v349 = vld [vmem:[%s1 + $0x50c] sm:$0xf]
    %v350 = vld [vmem:[%s1 + $0x510] sm:$0xf]
    %v351 = vld [vmem:[%s1 + $0x514] sm:$0xf]
    %v352 = vld [vmem:[%s1 + $0x518] sm:$0xf]
    %v353 = vld [vmem:[%s1 + $0x51c] sm:$0xf]
    %v354 = vld [vmem:[%s1 + $0x520] sm:$0xf]
    %v355 = vld [vmem:[%s1 + $0x524] sm:$0xf]
    %v356 = vld [vmem:[%s1 + $0x528] sm:$0xf]
    %v357 = vld [vmem:[%s1 + $0x52c] sm:$0xf]
    %v358 = vld [vmem:[%s1 + $0x530] sm:$0xf]
    %v359 = vld [vmem:[%s1 + $0x534] sm:$0xf]
    %v360 = vld [vmem:[%s1 + $0x538] sm:$0xf]
    %v361 = vld [vmem:[%s1 + $0x53c] sm:$0xf]
    %v362 = vld [vmem:[%s1 + $0x540] sm:$0xf]
    %v363 = vld [vmem:[%s1 + $0x544] sm:$0xf]
    %v364 = vld [vmem:[%s1 + $0x548] sm:$0xf]
    %v365 = vld [vmem:[%s1 + $0x54c] sm:$0xf]
    %v366 = vld [vmem:[%s1 + $0x550] sm:$0xf]
    %v367 = vld [vmem:[%s1 + $0x554] sm:$0xf]
    %v368 = vld [vmem:[%s1 + $0x558] sm:$0xf]
    %v369 = vld [vmem:[%s1 + $0x55c] sm:$0xf]
    %v370 = vld [vmem:[%s1 + $0x560] sm:$0xf]
    %v371 = vld [vmem:[%s1 + $0x564] sm:$0xf]
    %v372 = vld [vmem:[%s1 + $0x568] sm:$0xf]
    %v373 = vld [vmem:[%s1 + $0x56c] sm:$0xf]
    %v374 = vld [vmem:[%s1 + $0x570] sm:$0xf]
    %v375 = vld [vmem:[%s1 + $0x574] sm:$0xf]
    %v376 = vld [vmem:[%s1 + $0x578] sm:$0xf]
    %v377 = vld [vmem:[%s1 + $0x57c] sm:$0xf]
    %v378 = vld [vmem:[%s1 + $0x580] sm:$0xf]
    %v379 = vld [vmem:[%s1 + $0x584] sm:$0xf]
    %v380 = vld [vmem:[%s1 + $0x588] sm:$0xf]
    %v381 = vld [vmem:[%s1 + $0x58c] sm:$0xf]
    %v382 = vld [vmem:[%s1 + $0x590] sm:$0xf]
    %v383 = vld [vmem:[%s1 + $0x594] sm:$0xf]
    %v384 = vld [vmem:[%s1 + $0x598] sm:$0xf]
    %v385 = vld [vmem:[%s1 + $0x59c] sm:$0xf]
    %v386 = vld [vmem:[%s1 + $0x5a0] sm:$0xf]
    %v387 = vld [vmem:[%s1 + $0x5a4] sm:$0xf]
    %v388 = vld [vmem:[%s1 + $0x5a8] sm:$0xf]
    %v389 = vld [vmem:[%s1 + $0x5ac] sm:$0xf]
    %v390 = vld [vmem:[%s1 + $0x5b0] sm:$0xf]
    %v391 = vld [vmem:[%s1 + $0x5b4] sm:$0xf]
    %v392 = vld [vmem:[%s1 + $0x5b8] sm:$0xf]
    %v393 = vld [vmem:[%s1 + $0x5bc] sm:$0xf]
    %v394 = vld [vmem:[%s1 + $0x5c0] sm:$0xf]
    %v395 = vld [vmem:[%s1 + $0x5c4] sm:$0xf]
    %v396 = vld [vmem:[%s1 + $0x5c8] sm:$0xf]
    %v397 = vld [vmem:[%s1 + $0x5cc] sm:$0xf]
    %v398 = vld [vmem:[%s1 + $0x5d0] sm:$0xf]
    %v399 = vld [vmem:[%s1 + $0x5d4] sm:$0xf]
    %v400 = vld [vmem:[%s1 + $0x5d8] sm:$0xf]
    %v401 = vld [vmem:[%s1 + $0x5dc] sm:$0xf]
    %v402 = vld [vmem:[%s1 + $0x5e0] sm:$0xf]
    %v403 = vld [vmem:[%s1 + $0x5e4] sm:$0xf]
    %v404 = vld [vmem:[%s1 + $0x5e8] sm:$0xf]
    %v405 = vld [vmem:[%s1 + $0x5ec] sm:$0xf]
    %v406 = vld [vmem:[%s1 + $0x5f0] sm:$0xf]
    %v407 = vld [vmem:[%s1 + $0x5f4] sm:$0xf]
    %v408 = vld [vmem:[%s1 + $0x5f8] sm:$0xf]
    %v409 = vld [vmem:[%s1 + $0x5fc] sm:$0xf]
    %v410 = vld [vmem:[%s1 + $0x600] sm:$0xf]
    %v411 = vld [vmem:[%s1 + $0x604] sm:$0xf]
    %v412 = vld [vmem:[%s1 + $0x608] sm:$0xf]
    %v413 = vld [vmem:[%s1 + $0x60c] sm:$0xf]
    %v414 = vld [vmem:[%s1 + $0x610] sm:$0xf]
    %v415 = vld [vmem:[%s1 + $0x614] sm:$0xf]
    %v416 = vld [vmem:[%s1 + $0x618] sm:$0xf]
    %v417 = vld [vmem:[%s1 + $0x61c] sm:$0xf]
    %v418 = vld [vmem:[%s2] sm:$0x1]
    %v420 = vlaneseq
    %v421 = vshrl.u32 %v420, 7
    %v422 = vsub.s32 0, %v421
    %v423 = vrot.slane %v418, %v422
    %v429 = vcombine.high %v22, %v22
    %v431 = vunpack.c.l.s4 1966171168
    %v432 = vunpack.c.0.s8 %v431
    %v433 = vlaneseq
    %v434 = vshrl.u32 %v433, 7
    %v435 = vsub.s32 %v432, %v434
    %v436 = vrot.slane %v22, %v435
    %v438 = vunpack.c.l.s4 1966171168
    %v439 = vunpack.c.0.s8 %v438
    %v440 = vlaneseq
    %v441 = vshrl.u32 %v440, 7
    %v442 = vsub.s32 %v439, %v441
    %v443 = vrot.slane %v429, %v442
    %v444 = vcombine.high %v436, %v436
    %v445 = vcombine.high %v443, %v443
    %v447 = vunpack.c.l.s4 1966171168
    %v448 = vunpack.c.0.s8 %v447
    %v449 = vlaneseq
    %v450 = vshrl.u32 %v449, 7
    %v451 = vsub.s32 %v448, %v450
    %v452 = vrot.slane %v436, %v451
    %v454 = vunpack.c.l.s4 1966171168
    %v455 = vunpack.c.0.s8 %v454
    %v456 = vlaneseq
    %v457 = vshrl.u32 %v456, 7
    %v458 = vsub.s32 %v455, %v457
    %v459 = vrot.slane %v443, %v458
    %v461 = vunpack.c.l.s4 1966171168
    %v462 = vunpack.c.0.s8 %v461
    %v463 = vlaneseq
    %v464 = vshrl.u32 %v463, 7
    %v465 = vsub.s32 %v462, %v464
    %v466 = vrot.slane %v444, %v465
    %v468 = vunpack.c.l.s4 1966171168
    %v469 = vunpack.c.0.s8 %v468
    %v470 = vlaneseq
    %v471 = vshrl.u32 %v470, 7
    %v472 = vsub.s32 %v469, %v471
    %v473 = vrot.slane %v445, %v472
    %v474 = vcombine.high %v452, %v452
    %v475 = vcombine.high %v459, %v459
    %v476 = vcombine.high %v466, %v466
    %v477 = vcombine.high %v473, %v473
    %v478 = vcombine.high %v23, %v23
    %v480 = vunpack.c.l.s4 1966171168
    %v481 = vunpack.c.0.s8 %v480
    %v482 = vlaneseq
    %v483 = vshrl.u32 %v482, 7
    %v484 = vsub.s32 %v481, %v483
    %v485 = vrot.slane %v23, %v484
    %v487 = vunpack.c.l.s4 1966171168
    %v488 = vunpack.c.0.s8 %v487
    %v489 = vlaneseq
    %v490 = vshrl.u32 %v489, 7
    %v491 = vsub.s32 %v488, %v490
    %v492 = vrot.slane %v478, %v491
    %v493 = vcombine.high %v485, %v485
    %v494 = vcombine.high %v492, %v492
    %v496 = vunpack.c.l.s4 1966171168
    %v497 = vunpack.c.0.s8 %v496
    %v498 = vlaneseq
    %v499 = vshrl.u32 %v498, 7
    %v500 = vsub.s32 %v497, %v499
    %v501 = vrot.slane %v485, %v500
    %v503 = vunpack.c.l.s4 1966171168
    %v504 = vunpack.c.0.s8 %v503
    %v505 = vlaneseq
    %v506 = vshrl.u32 %v505, 7
    %v507 = vsub.s32 %v504, %v506
    %v508 = vrot.slane %v492, %v507
    %v510 = vunpack.c.l.s4 1966171168
    %v511 = vunpack.c.0.s8 %v510
    %v512 = vlaneseq
    %v513 = vshrl.u32 %v512, 7
    %v514 = vsub.s32 %v511, %v513
    %v515 = vrot.slane %v493, %v514
    %v517 = vunpack.c.l.s4 1966171168
    %v518 = vunpack.c.0.s8 %v517
    %v519 = vlaneseq
    %v520 = vshrl.u32 %v519, 7
    %v521 = vsub.s32 %v518, %v520
    %v522 = vrot.slane %v494, %v521
    %v523 = vcombine.high %v501, %v501
    %v524 = vcombine.high %v508, %v508
    %v525 = vcombine.high %v515, %v515
    %v526 = vcombine.high %v522, %v522
    %v527 = vcombine.high %v24, %v24
    %v529 = vunpack.c.l.s4 1966171168
    %v530 = vunpack.c.0.s8 %v529
    %v531 = vlaneseq
    %v532 = vshrl.u32 %v531, 7
    %v533 = vsub.s32 %v530, %v532
    %v534 = vrot.slane %v24, %v533
    %v536 = vunpack.c.l.s4 1966171168
    %v537 = vunpack.c.0.s8 %v536
    %v538 = vlaneseq
    %v539 = vshrl.u32 %v538, 7
    %v540 = vsub.s32 %v537, %v539
    %v541 = vrot.slane %v527, %v540
    %v542 = vcombine.high %v534, %v534
    %v543 = vcombine.high %v541, %v541
    %v545 = vunpack.c.l.s4 1966171168
    %v546 = vunpack.c.0.s8 %v545
    %v547 = vlaneseq
    %v548 = vshrl.u32 %v547, 7
    %v549 = vsub.s32 %v546, %v548
    %v550 = vrot.slane %v534, %v549
    %v552 = vunpack.c.l.s4 1966171168
    %v553 = vunpack.c.0.s8 %v552
    %v554 = vlaneseq
    %v555 = vshrl.u32 %v554, 7
    %v556 = vsub.s32 %v553, %v555
    %v557 = vrot.slane %v541, %v556
    %v559 = vunpack.c.l.s4 1966171168
    %v560 = vunpack.c.0.s8 %v559
    %v561 = vlaneseq
    %v562 = vshrl.u32 %v561, 7
    %v563 = vsub.s32 %v560, %v562
    %v564 = vrot.slane %v542, %v563
    %v566 = vunpack.c.l.s4 1966171168
    %v567 = vunpack.c.0.s8 %v566
    %v568 = vlaneseq
    %v569 = vshrl.u32 %v568, 7
    %v570 = vsub.s32 %v567, %v569
    %v571 = vrot.slane %v543, %v570
    %v572 = vcombine.high %v550, %v550
    %v573 = vcombine.high %v557, %v557
    %v574 = vcombine.high %v564, %v564
    %v575 = vcombine.high %v571, %v571
    %v577 = vunpack.c.l.s4 1966171168
    %v578 = vunpack.c.0.s8 %v577
    %v579 = vlaneseq
    %v580 = vshrl.u32 %v579, 7
    %v581 = vsub.s32 %v578, %v580
    %v582 = vrot.slane %v25, %v581
    %v584 = vunpack.c.l.s4 1966171168
    %v585 = vunpack.c.0.s8 %v584
    %v586 = vlaneseq
    %v587 = vshrl.u32 %v586, 7
    %v588 = vsub.s32 %v585, %v587
    %v589 = vrot.slane %v582, %v588
    %v1006 = vunpack.c.l.b16 %v26
    %v1007 = vunpack.c.l.b16 %v27
    %v1008 = vunpack.c.l.b16 %v28
    %v1009 = vunpack.c.l.b16 %v29
    %v1010 = vunpack.c.l.b16 %v30
    %v1011 = vunpack.c.l.b16 %v31
    %v1012 = vunpack.c.l.b16 %v32
    %v1013 = vunpack.c.l.b16 %v33
    %v1014 = vunpack.c.l.b16 %v34
    %v1015 = vunpack.c.l.b16 %v35
    %v1016 = vunpack.c.l.b16 %v36
    %v1017 = vunpack.c.l.b16 %v37
    %v1018 = vunpack.c.l.b16 %v38
    %v1019 = vunpack.c.l.b16 %v39
    %v1020 = vunpack.c.l.b16 %v40
    %v1021 = vunpack.c.l.b16 %v41
    %v1022 = vunpack.c.l.b16 %v42
    %v1023 = vunpack.c.l.b16 %v43
    %v1024 = vunpack.c.l.b16 %v44
    %v1025 = vunpack.c.l.b16 %v45
    %v1026 = vunpack.c.l.b16 %v46
    %v1027 = vunpack.c.l.b16 %v47
    %v1028 = vunpack.c.l.b16 %v48
    %v1029 = vunpack.c.l.b16 %v49
    %v1030 = vunpack.c.l.b16 %v50
    %v1031 = vunpack.c.l.b16 %v51
    %v1032 = vunpack.c.l.b16 %v52
    %v1033 = vunpack.c.l.b16 %v53
    %v1034 = vunpack.c.l.b16 %v54
    %v1035 = vunpack.c.l.b16 %v55
    %v1036 = vunpack.c.l.b16 %v56
    %v1037 = vunpack.c.l.b16 %v57
    %v1038 = vunpack.c.l.b16 %v58
    %v1039 = vunpack.c.l.b16 %v59
    %v1040 = vunpack.c.l.b16 %v60
    %v1041 = vunpack.c.l.b16 %v61
    %v1042 = vunpack.c.l.b16 %v62
    %v1043 = vunpack.c.l.b16 %v63
    %v1044 = vunpack.c.l.b16 %v64
    %v1045 = vunpack.c.l.b16 %v65
    %v1046 = vunpack.c.l.b16 %v66
    %v1047 = vunpack.c.l.b16 %v67
    %v1048 = vunpack.c.l.b16 %v68
    %v1049 = vunpack.c.l.b16 %v69
    %v1050 = vunpack.c.l.b16 %v70
    %v1051 = vunpack.c.l.b16 %v71
    %v1052 = vunpack.c.l.b16 %v72
    %v1053 = vunpack.c.l.b16 %v73
    %v1054 = vunpack.c.l.b16 %v74
    %v1055 = vunpack.c.l.b16 %v75
    %v1056 = vunpack.c.l.b16 %v76
    %v1057 = vunpack.c.l.b16 %v77
    %v1058 = vunpack.c.l.b16 %v78
    %v1059 = vunpack.c.l.b16 %v79
    %v1060 = vunpack.c.l.b16 %v80
    %v1061 = vunpack.c.l.b16 %v81
    %v1062 = vunpack.c.l.b16 %v82
    %v1063 = vunpack.c.l.b16 %v83
    %v1064 = vunpack.c.l.b16 %v84
    %v1065 = vunpack.c.l.b16 %v85
    %v1066 = vunpack.c.l.b16 %v86
    %v1067 = vunpack.c.l.b16 %v87
    %v1068 = vunpack.c.l.b16 %v88
    %v1069 = vunpack.c.l.b16 %v89
    %v1070 = vunpack.c.l.b16 %v90
    %v1071 = vunpack.c.l.b16 %v91
    %v1072 = vunpack.c.l.b16 %v92
    %v1073 = vunpack.c.l.b16 %v93
    %v1074 = vunpack.c.l.b16 %v94
    %v1075 = vunpack.c.l.b16 %v95
    %v1076 = vunpack.c.l.b16 %v96
    %v1077 = vunpack.c.l.b16 %v97
    %v1078 = vunpack.c.l.b16 %v98
    %v1079 = vunpack.c.l.b16 %v99
    %v1080 = vunpack.c.l.b16 %v100
    %v1081 = vunpack.c.l.b16 %v101
    %v1082 = vunpack.c.l.b16 %v102
    %v1083 = vunpack.c.l.b16 %v103
    %v1084 = vunpack.c.l.b16 %v104
    %v1085 = vunpack.c.l.b16 %v105
    %v1086 = vunpack.c.l.b16 %v106
    %v1087 = vunpack.c.l.b16 %v107
    %v1088 = vunpack.c.l.b16 %v108
    %v1089 = vunpack.c.l.b16 %v109
    %v1090 = vunpack.c.l.b16 %v110
    %v1091 = vunpack.c.l.b16 %v111
    %v1092 = vunpack.c.l.b16 %v112
    %v1093 = vunpack.c.l.b16 %v113
    %v1094 = vunpack.c.l.b16 %v114
    %v1095 = vunpack.c.l.b16 %v115
    %v1096 = vunpack.c.l.b16 %v116
    %v1097 = vunpack.c.l.b16 %v117
    %v1098 = vunpack.c.l.b16 %v118
    %v1099 = vunpack.c.l.b16 %v119
    %v1100 = vunpack.c.l.b16 %v120
    %v1101 = vunpack.c.l.b16 %v121
    %v1102 = vunpack.c.l.b16 %v122
    %v1103 = vunpack.c.l.b16 %v123
    %v1104 = vunpack.c.l.b16 %v124
    %v1105 = vunpack.c.l.b16 %v125
    %v1106 = vunpack.c.l.b16 %v126
    %v1107 = vunpack.c.l.b16 %v127
    %v1108 = vunpack.c.l.b16 %v128
    %v1109 = vunpack.c.l.b16 %v129
    %v1110 = vunpack.c.l.b16 %v130
    %v1111 = vunpack.c.l.b16 %v131
    %v1112 = vunpack.c.l.b16 %v132
    %v1113 = vunpack.c.l.b16 %v133
    %v1114 = vunpack.c.l.b16 %v134
    %v1115 = vunpack.c.l.b16 %v135
    %v1116 = vunpack.c.l.b16 %v136
    %v1117 = vunpack.c.l.b16 %v137
    %v1118 = vunpack.c.l.b16 %v138
    %v1119 = vunpack.c.l.b16 %v139
    %v1120 = vunpack.c.l.b16 %v140
    %v1121 = vunpack.c.l.b16 %v141
    %v1122 = vunpack.c.l.b16 %v142
    %v1123 = vunpack.c.l.b16 %v143
    %v1124 = vunpack.c.l.b16 %v144
    %v1125 = vunpack.c.l.b16 %v145
    %v1126 = vunpack.c.l.b16 %v146
    %v1127 = vunpack.c.l.b16 %v147
    %v1128 = vunpack.c.l.b16 %v148
    %v1129 = vunpack.c.l.b16 %v149
    %v1130 = vunpack.c.l.b16 %v150
    %v1131 = vunpack.c.l.b16 %v151
    %v1132 = vunpack.c.l.b16 %v152
    %v1133 = vunpack.c.l.b16 %v153
    %v1134 = vunpack.c.l.b16 %v154
    %v1135 = vunpack.c.l.b16 %v155
    %v1136 = vunpack.c.l.b16 %v156
    %v1137 = vunpack.c.l.b16 %v157
    %v1138 = vunpack.c.l.b16 %v158
    %v1139 = vunpack.c.l.b16 %v159
    %v1140 = vunpack.c.l.b16 %v160
    %v1141 = vunpack.c.l.b16 %v161
    %v1142 = vunpack.c.l.b16 %v162
    %v1143 = vunpack.c.l.b16 %v163
    %v1144 = vunpack.c.l.b16 %v164
    %v1145 = vunpack.c.l.b16 %v165
    %v1146 = vunpack.c.l.b16 %v166
    %v1147 = vunpack.c.l.b16 %v167
    %v1148 = vunpack.c.l.b16 %v168
    %v1149 = vunpack.c.l.b16 %v169
    %v1150 = vunpack.c.l.b16 %v170
    %v1151 = vunpack.c.l.b16 %v171
    %v1152 = vunpack.c.l.b16 %v172
    %v1153 = vunpack.c.l.b16 %v173
    %v1154 = vunpack.c.l.b16 %v174
    %v1155 = vunpack.c.l.b16 %v175
    %v1156 = vunpack.c.l.b16 %v176
    %v1157 = vunpack.c.l.b16 %v177
    %v1158 = vunpack.c.l.b16 %v178
    %v1159 = vunpack.c.l.b16 %v179
    %v1160 = vunpack.c.l.b16 %v180
    %v1161 = vunpack.c.l.b16 %v181
    %v1162 = vunpack.c.l.b16 %v182
    %v1163 = vunpack.c.l.b16 %v183
    %v1164 = vunpack.c.l.b16 %v184
    %v1165 = vunpack.c.l.b16 %v185
    %v1166 = vunpack.c.l.b16 %v186
    %v1167 = vunpack.c.l.b16 %v187
    %v1168 = vunpack.c.l.b16 %v188
    %v1169 = vunpack.c.l.b16 %v189
    %v1170 = vunpack.c.l.b16 %v190
    %v1171 = vunpack.c.l.b16 %v191
    %v1172 = vunpack.c.l.b16 %v192
    %v1173 = vunpack.c.l.b16 %v193
    %v1174 = vunpack.c.l.b16 %v194
    %v1175 = vunpack.c.l.b16 %v195
    %v1176 = vunpack.c.l.b16 %v196
    %v1177 = vunpack.c.l.b16 %v197
    %v1178 = vunpack.c.l.b16 %v198
    %v1179 = vunpack.c.l.b16 %v199
    %v1180 = vunpack.c.l.b16 %v200
    %v1181 = vunpack.c.l.b16 %v201
    %v1182 = vunpack.c.l.b16 %v202
    %v1183 = vunpack.c.l.b16 %v203
    %v1184 = vunpack.c.l.b16 %v204
    %v1185 = vunpack.c.l.b16 %v205
    %v1186 = vunpack.c.l.b16 %v206
    %v1187 = vunpack.c.l.b16 %v207
    %v1188 = vunpack.c.l.b16 %v208
    %v1189 = vunpack.c.l.b16 %v209
    %v1190 = vunpack.c.l.b16 %v210
    %v1191 = vunpack.c.l.b16 %v211
    %v1192 = vunpack.c.l.b16 %v212
    %v1193 = vunpack.c.l.b16 %v213
    %v1194 = vunpack.c.l.b16 %v214
    %v1195 = vunpack.c.l.b16 %v215
    %v1196 = vunpack.c.l.b16 %v216
    %v1197 = vunpack.c.l.b16 %v217
    %v1198 = vunpack.c.l.b16 %v218
    %v1199 = vunpack.c.l.b16 %v219
    %v1200 = vunpack.c.l.b16 %v220
    %v1201 = vunpack.c.l.b16 %v221
    %v1202 = vunpack.c.l.b16 %v222
    %v1203 = vunpack.c.l.b16 %v223
    %v1204 = vunpack.c.l.b16 %v224
    %v1205 = vunpack.c.l.b16 %v225
    %v1206 = vunpack.c.l.b16 %v226
    %v1207 = vunpack.c.l.b16 %v227
    %v1208 = vunpack.c.l.b16 %v228
    %v1209 = vunpack.c.l.b16 %v229
    %v1210 = vunpack.c.l.b16 %v230
    %v1211 = vunpack.c.l.b16 %v231
    %v1212 = vunpack.c.l.b16 %v232
    %v1213 = vunpack.c.l.b16 %v233
    %v1214 = vunpack.c.l.b16 %v234
    %v1215 = vunpack.c.l.b16 %v235
    %v1216 = vunpack.c.l.b16 %v236
    %v1217 = vunpack.c.l.b16 %v237
    %v1218 = vunpack.c.l.b16 %v238
    %v1219 = vunpack.c.l.b16 %v239
    %v1220 = vunpack.c.l.b16 %v240
    %v1221 = vunpack.c.l.b16 %v241
    %v1222 = vunpack.c.l.b16 %v242
    %v1223 = vunpack.c.l.b16 %v243
    %v1224 = vunpack.c.l.b16 %v244
    %v1225 = vunpack.c.l.b16 %v245
    %v1226 = vunpack.c.l.b16 %v246
    %v1227 = vunpack.c.l.b16 %v247
    %v1228 = vunpack.c.l.b16 %v248
    %v1229 = vunpack.c.l.b16 %v249
    %v1230 = vunpack.c.l.b16 %v250
    %v1231 = vunpack.c.l.b16 %v251
    %v1232 = vunpack.c.l.b16 %v252
    %v1233 = vunpack.c.l.b16 %v253
    %v1234 = vunpack.c.l.b16 %v254
    %v1235 = vunpack.c.l.b16 %v255
    %v1236 = vunpack.c.l.b16 %v256
    %v1237 = vunpack.c.l.b16 %v257
    %v1238 = vunpack.c.l.b16 %v258
    %v1239 = vunpack.c.l.b16 %v259
    %v1240 = vunpack.c.l.b16 %v260
    %v1241 = vunpack.c.l.b16 %v261
    %v1242 = vunpack.c.l.b16 %v262
    %v1243 = vunpack.c.l.b16 %v263
    %v1244 = vunpack.c.l.b16 %v264
    %v1245 = vunpack.c.l.b16 %v265
    %v1246 = vunpack.c.l.b16 %v266
    %v1247 = vunpack.c.l.b16 %v267
    %v1248 = vunpack.c.l.b16 %v268
    %v1249 = vunpack.c.l.b16 %v269
    %v1250 = vunpack.c.l.b16 %v270
    %v1251 = vunpack.c.l.b16 %v271
    %v1252 = vunpack.c.l.b16 %v272
    %v1253 = vunpack.c.l.b16 %v273
    %v1254 = vunpack.c.l.b16 %v274
    %v1255 = vunpack.c.l.b16 %v275
    %v1256 = vunpack.c.l.b16 %v276
    %v1257 = vunpack.c.l.b16 %v277
    %v1258 = vunpack.c.l.b16 %v278
    %v1259 = vunpack.c.l.b16 %v279
    %v1260 = vunpack.c.l.b16 %v280
    %v1261 = vunpack.c.l.b16 %v281
    %v1262 = vunpack.c.l.b16 %v282
    %v1263 = vunpack.c.l.b16 %v283
    %v1264 = vunpack.c.l.b16 %v284
    %v1265 = vunpack.c.l.b16 %v285
    %v1266 = vunpack.c.l.b16 %v286
    %v1267 = vunpack.c.l.b16 %v287
    %v1268 = vunpack.c.l.b16 %v288
    %v1269 = vunpack.c.l.b16 %v289
    %v1270 = vunpack.c.l.b16 %v290
    %v1271 = vunpack.c.l.b16 %v291
    %v1272 = vunpack.c.l.b16 %v292
    %v1273 = vunpack.c.l.b16 %v293
    %v1274 = vunpack.c.l.b16 %v294
    %v1275 = vunpack.c.l.b16 %v295
    %v1276 = vunpack.c.l.b16 %v296
    %v1277 = vunpack.c.l.b16 %v297
    %v1278 = vunpack.c.l.b16 %v298
    %v1279 = vunpack.c.l.b16 %v299
    %v1280 = vunpack.c.l.b16 %v300
    %v1281 = vunpack.c.l.b16 %v301
    %v1282 = vunpack.c.l.b16 %v302
    %v1283 = vunpack.c.l.b16 %v303
    %v1284 = vunpack.c.l.b16 %v304
    %v1285 = vunpack.c.l.b16 %v305
    %v1286 = vunpack.c.l.b16 %v306
    %v1287 = vunpack.c.l.b16 %v307
    %v1288 = vunpack.c.l.b16 %v308
    %v1289 = vunpack.c.l.b16 %v309
    %v1290 = vunpack.c.l.b16 %v310
    %v1291 = vunpack.c.l.b16 %v311
    %v1292 = vunpack.c.l.b16 %v312
    %v1293 = vunpack.c.l.b16 %v313
    %v1294 = vunpack.c.l.b16 %v314
    %v1295 = vunpack.c.l.b16 %v315
    %v1296 = vunpack.c.l.b16 %v316
    %v1297 = vunpack.c.l.b16 %v317
    %v1298 = vunpack.c.l.b16 %v318
    %v1299 = vunpack.c.l.b16 %v319
    %v1300 = vunpack.c.l.b16 %v320
    %v1301 = vunpack.c.l.b16 %v321
    %v1302 = vunpack.c.l.b16 %v322
    %v1303 = vunpack.c.l.b16 %v323
    %v1304 = vunpack.c.l.b16 %v324
    %v1305 = vunpack.c.l.b16 %v325
    %v1306 = vunpack.c.l.b16 %v326
    %v1307 = vunpack.c.l.b16 %v327
    %v1308 = vunpack.c.l.b16 %v328
    %v1309 = vunpack.c.l.b16 %v329
    %v1310 = vunpack.c.l.b16 %v330
    %v1311 = vunpack.c.l.b16 %v331
    %v1312 = vunpack.c.l.b16 %v332
    %v1313 = vunpack.c.l.b16 %v333
    %v1314 = vunpack.c.l.b16 %v334
    %v1315 = vunpack.c.l.b16 %v335
    %v1316 = vunpack.c.l.b16 %v336
    %v1317 = vunpack.c.l.b16 %v337
    %v1318 = vunpack.c.l.b16 %v338
    %v1319 = vunpack.c.l.b16 %v339
    %v1320 = vunpack.c.l.b16 %v340
    %v1321 = vunpack.c.l.b16 %v341
    %v1322 = vunpack.c.l.b16 %v342
    %v1323 = vunpack.c.l.b16 %v343
    %v1324 = vunpack.c.l.b16 %v344
    %v1325 = vunpack.c.l.b16 %v345
    %v1326 = vunpack.c.l.b16 %v346
    %v1327 = vunpack.c.l.b16 %v347
    %v1328 = vunpack.c.l.b16 %v348
    %v1329 = vunpack.c.l.b16 %v349
    %v1330 = vunpack.c.l.b16 %v350
    %v1331 = vunpack.c.l.b16 %v351
    %v1332 = vunpack.c.l.b16 %v352
    %v1333 = vunpack.c.l.b16 %v353
    %v1334 = vunpack.c.l.b16 %v354
    %v1335 = vunpack.c.l.b16 %v355
    %v1336 = vunpack.c.l.b16 %v356
    %v1337 = vunpack.c.l.b16 %v357
    %v1338 = vunpack.c.l.b16 %v358
    %v1339 = vunpack.c.l.b16 %v359
    %v1340 = vunpack.c.l.b16 %v360
    %v1341 = vunpack.c.l.b16 %v361
    %v1342 = vunpack.c.l.b16 %v362
    %v1343 = vunpack.c.l.b16 %v363
    %v1344 = vunpack.c.l.b16 %v364
    %v1345 = vunpack.c.l.b16 %v365
    %v1346 = vunpack.c.l.b16 %v366
    %v1347 = vunpack.c.l.b16 %v367
    %v1348 = vunpack.c.l.b16 %v368
    %v1349 = vunpack.c.l.b16 %v369
    %v1350 = vunpack.c.l.b16 %v370
    %v1351 = vunpack.c.l.b16 %v371
    %v1352 = vunpack.c.l.b16 %v372
    %v1353 = vunpack.c.l.b16 %v373
    %v1354 = vunpack.c.l.b16 %v374
    %v1355 = vunpack.c.l.b16 %v375
    %v1356 = vunpack.c.l.b16 %v376
    %v1357 = vunpack.c.l.b16 %v377
    %v1358 = vunpack.c.l.b16 %v378
    %v1359 = vunpack.c.l.b16 %v379
    %v1360 = vunpack.c.l.b16 %v380
    %v1361 = vunpack.c.l.b16 %v381
    %v1362 = vunpack.c.l.b16 %v382
    %v1363 = vunpack.c.l.b16 %v383
    %v1364 = vunpack.c.l.b16 %v384
    %v1365 = vunpack.c.l.b16 %v385
    %v1366 = vunpack.c.l.b16 %v386
    %v1367 = vunpack.c.l.b16 %v387
    %v1368 = vunpack.c.l.b16 %v388
    %v1369 = vunpack.c.l.b16 %v389
    %v1370 = vunpack.c.l.b16 %v390
    %v1371 = vunpack.c.l.b16 %v391
    %v1372 = vunpack.c.l.b16 %v392
    %v1373 = vunpack.c.l.b16 %v393
    %v1374 = vunpack.c.l.b16 %v394
    %v1375 = vunpack.c.l.b16 %v395
    %v1376 = vunpack.c.l.b16 %v396
    %v1377 = vunpack.c.l.b16 %v397
    %v1378 = vunpack.c.l.b16 %v398
    %v1379 = vunpack.c.l.b16 %v399
    %v1380 = vunpack.c.l.b16 %v400
    %v1381 = vunpack.c.l.b16 %v401
    %v1382 = vunpack.c.l.b16 %v402
    %v1383 = vunpack.c.l.b16 %v403
    %v1384 = vunpack.c.l.b16 %v404
    %v1385 = vunpack.c.l.b16 %v405
    %v1386 = vunpack.c.l.b16 %v406
    %v1387 = vunpack.c.l.b16 %v407
    %v1388 = vunpack.c.l.b16 %v408
    %v1389 = vunpack.c.l.b16 %v409
    %v1390 = vunpack.c.l.b16 %v410
    %v1391 = vunpack.c.l.b16 %v411
    %v1392 = vunpack.c.l.b16 %v412
    %v1393 = vunpack.c.l.b16 %v413
    %v1394 = vunpack.c.l.b16 %v414
    %v1395 = vunpack.c.l.b16 %v415
    %v1396 = vunpack.c.l.b16 %v416
    %v1397 = vunpack.c.l.b16 %v417
    %v1398 = vpack.c.b16 %v1007, %v1006
    %v1399 = vpack.c.b16 %v1009, %v1008
    %v1400 = vpack.c.b16 %v1011, %v1010
    %v1401 = vpack.c.b16 %v1013, %v1012
    %v1402 = vpack.c.b16 %v1015, %v1014
    %v1403 = vpack.c.b16 %v1017, %v1016
    %v1404 = vpack.c.b16 %v1019, %v1018
    %v1405 = vpack.c.b16 %v1021, %v1020
    %v1406 = vpack.c.b16 %v1023, %v1022
    %v1407 = vpack.c.b16 %v1025, %v1024
    %v1408 = vpack.c.b16 %v1027, %v1026
    %v1409 = vpack.c.b16 %v1029, %v1028
    %v1410 = vpack.c.b16 %v1031, %v1030
    %v1411 = vpack.c.b16 %v1033, %v1032
    %v1412 = vpack.c.b16 %v1035, %v1034
    %v1413 = vpack.c.b16 %v1037, %v1036
    %v1414 = vpack.c.b16 %v1039, %v1038
    %v1415 = vpack.c.b16 %v1041, %v1040
    %v1416 = vpack.c.b16 %v1043, %v1042
    %v1417 = vpack.c.b16 %v1045, %v1044
    %v1418 = vpack.c.b16 %v1047, %v1046
    %v1419 = vpack.c.b16 %v1049, %v1048
    %v1420 = vpack.c.b16 %v1051, %v1050
    %v1421 = vpack.c.b16 %v1053, %v1052
    %v1422 = vpack.c.b16 %v1055, %v1054
    %v1423 = vpack.c.b16 %v1057, %v1056
    %v1424 = vpack.c.b16 %v1059, %v1058
    %v1425 = vpack.c.b16 %v1061, %v1060
    %v1426 = vpack.c.b16 %v1063, %v1062
    %v1427 = vpack.c.b16 %v1065, %v1064
    %v1428 = vpack.c.b16 %v1067, %v1066
    %v1429 = vpack.c.b16 %v1069, %v1068
    %v1430 = vpack.c.b16 %v1071, %v1070
    %v1431 = vpack.c.b16 %v1073, %v1072
    %v1432 = vpack.c.b16 %v1075, %v1074
    %v1433 = vpack.c.b16 %v1077, %v1076
    %v1434 = vpack.c.b16 %v1079, %v1078
    %v1435 = vpack.c.b16 %v1081, %v1080
    %v1436 = vpack.c.b16 %v1083, %v1082
    %v1437 = vpack.c.b16 %v1085, %v1084
    %v1438 = vpack.c.b16 %v1087, %v1086
    %v1439 = vpack.c.b16 %v1089, %v1088
    %v1440 = vpack.c.b16 %v1091, %v1090
    %v1441 = vpack.c.b16 %v1093, %v1092
    %v1442 = vpack.c.b16 %v1095, %v1094
    %v1443 = vpack.c.b16 %v1097, %v1096
    %v1444 = vpack.c.b16 %v1099, %v1098
    %v1445 = vpack.c.b16 %v1101, %v1100
    %v1446 = vpack.c.b16 %v1103, %v1102
    %v1447 = vpack.c.b16 %v1105, %v1104
    %v1448 = vpack.c.b16 %v1107, %v1106
    %v1449 = vpack.c.b16 %v1109, %v1108
    %v1450 = vpack.c.b16 %v1111, %v1110
    %v1451 = vpack.c.b16 %v1113, %v1112
    %v1452 = vpack.c.b16 %v1115, %v1114
    %v1453 = vpack.c.b16 %v1117, %v1116
    %v1454 = vpack.c.b16 %v1119, %v1118
    %v1455 = vpack.c.b16 %v1121, %v1120
    %v1456 = vpack.c.b16 %v1123, %v1122
    %v1457 = vpack.c.b16 %v1125, %v1124
    %v1458 = vpack.c.b16 %v1127, %v1126
    %v1459 = vpack.c.b16 %v1129, %v1128
    %v1460 = vpack.c.b16 %v1131, %v1130
    %v1461 = vpack.c.b16 %v1133, %v1132
    %v1462 = vpack.c.b16 %v1135, %v1134
    %v1463 = vpack.c.b16 %v1137, %v1136
    %v1464 = vpack.c.b16 %v1139, %v1138
    %v1465 = vpack.c.b16 %v1141, %v1140
    %v1466 = vpack.c.b16 %v1143, %v1142
    %v1467 = vpack.c.b16 %v1145, %v1144
    %v1468 = vpack.c.b16 %v1147, %v1146
    %v1469 = vpack.c.b16 %v1149, %v1148
    %v1470 = vpack.c.b16 %v1151, %v1150
    %v1471 = vpack.c.b16 %v1153, %v1152
    %v1472 = vpack.c.b16 %v1155, %v1154
    %v1473 = vpack.c.b16 %v1157, %v1156
    %v1474 = vpack.c.b16 %v1159, %v1158
    %v1475 = vpack.c.b16 %v1161, %v1160
    %v1476 = vpack.c.b16 %v1163, %v1162
    %v1477 = vpack.c.b16 %v1165, %v1164
    %v1478 = vpack.c.b16 %v1167, %v1166
    %v1479 = vpack.c.b16 %v1169, %v1168
    %v1480 = vpack.c.b16 %v1171, %v1170
    %v1481 = vpack.c.b16 %v1173, %v1172
    %v1482 = vpack.c.b16 %v1175, %v1174
    %v1483 = vpack.c.b16 %v1177, %v1176
    %v1484 = vpack.c.b16 %v1179, %v1178
    %v1485 = vpack.c.b16 %v1181, %v1180
    %v1486 = vpack.c.b16 %v1183, %v1182
    %v1487 = vpack.c.b16 %v1185, %v1184
    %v1488 = vpack.c.b16 %v1187, %v1186
    %v1489 = vpack.c.b16 %v1189, %v1188
    %v1490 = vpack.c.b16 %v1191, %v1190
    %v1491 = vpack.c.b16 %v1193, %v1192
    %v1492 = vpack.c.b16 %v1195, %v1194
    %v1493 = vpack.c.b16 %v1197, %v1196
    %v1494 = vpack.c.b16 %v1199, %v1198
    %v1495 = vpack.c.b16 %v1201, %v1200
    %v1496 = vpack.c.b16 %v1203, %v1202
    %v1497 = vpack.c.b16 %v1205, %v1204
    %v1498 = vpack.c.b16 %v1207, %v1206
    %v1499 = vpack.c.b16 %v1209, %v1208
    %v1500 = vpack.c.b16 %v1211, %v1210
    %v1501 = vpack.c.b16 %v1213, %v1212
    %v1502 = vpack.c.b16 %v1215, %v1214
    %v1503 = vpack.c.b16 %v1217, %v1216
    %v1504 = vpack.c.b16 %v1219, %v1218
    %v1505 = vpack.c.b16 %v1221, %v1220
    %v1506 = vpack.c.b16 %v1223, %v1222
    %v1507 = vpack.c.b16 %v1225, %v1224
    %v1508 = vpack.c.b16 %v1227, %v1226
    %v1509 = vpack.c.b16 %v1229, %v1228
    %v1510 = vpack.c.b16 %v1231, %v1230
    %v1511 = vpack.c.b16 %v1233, %v1232
    %v1512 = vpack.c.b16 %v1235, %v1234
    %v1513 = vpack.c.b16 %v1237, %v1236
    %v1514 = vpack.c.b16 %v1239, %v1238
    %v1515 = vpack.c.b16 %v1241, %v1240
    %v1516 = vpack.c.b16 %v1243, %v1242
    %v1517 = vpack.c.b16 %v1245, %v1244
    %v1518 = vpack.c.b16 %v1247, %v1246
    %v1519 = vpack.c.b16 %v1249, %v1248
    %v1520 = vpack.c.b16 %v1251, %v1250
    %v1521 = vpack.c.b16 %v1253, %v1252
    %v1522 = vpack.c.b16 %v1255, %v1254
    %v1523 = vpack.c.b16 %v1257, %v1256
    %v1524 = vpack.c.b16 %v1259, %v1258
    %v1525 = vpack.c.b16 %v1261, %v1260
    %v1526 = vpack.c.b16 %v1263, %v1262
    %v1527 = vpack.c.b16 %v1265, %v1264
    %v1528 = vpack.c.b16 %v1267, %v1266
    %v1529 = vpack.c.b16 %v1269, %v1268
    %v1530 = vpack.c.b16 %v1271, %v1270
    %v1531 = vpack.c.b16 %v1273, %v1272
    %v1532 = vpack.c.b16 %v1275, %v1274
    %v1533 = vpack.c.b16 %v1277, %v1276
    %v1534 = vpack.c.b16 %v1279, %v1278
    %v1535 = vpack.c.b16 %v1281, %v1280
    %v1536 = vpack.c.b16 %v1283, %v1282
    %v1537 = vpack.c.b16 %v1285, %v1284
    %v1538 = vpack.c.b16 %v1287, %v1286
    %v1539 = vpack.c.b16 %v1289, %v1288
    %v1540 = vpack.c.b16 %v1291, %v1290
    %v1541 = vpack.c.b16 %v1293, %v1292
    %v1542 = vpack.c.b16 %v1295, %v1294
    %v1543 = vpack.c.b16 %v1297, %v1296
    %v1544 = vpack.c.b16 %v1299, %v1298
    %v1545 = vpack.c.b16 %v1301, %v1300
    %v1546 = vpack.c.b16 %v1303, %v1302
    %v1547 = vpack.c.b16 %v1305, %v1304
    %v1548 = vpack.c.b16 %v1307, %v1306
    %v1549 = vpack.c.b16 %v1309, %v1308
    %v1550 = vpack.c.b16 %v1311, %v1310
    %v1551 = vpack.c.b16 %v1313, %v1312
    %v1552 = vpack.c.b16 %v1315, %v1314
    %v1553 = vpack.c.b16 %v1317, %v1316
    %v1554 = vpack.c.b16 %v1319, %v1318
    %v1555 = vpack.c.b16 %v1321, %v1320
    %v1556 = vpack.c.b16 %v1323, %v1322
    %v1557 = vpack.c.b16 %v1325, %v1324
    %v1558 = vpack.c.b16 %v1327, %v1326
    %v1559 = vpack.c.b16 %v1329, %v1328
    %v1560 = vpack.c.b16 %v1331, %v1330
    %v1561 = vpack.c.b16 %v1333, %v1332
    %v1562 = vpack.c.b16 %v1335, %v1334
    %v1563 = vpack.c.b16 %v1337, %v1336
    %v1564 = vpack.c.b16 %v1339, %v1338
    %v1565 = vpack.c.b16 %v1341, %v1340
    %v1566 = vpack.c.b16 %v1343, %v1342
    %v1567 = vpack.c.b16 %v1345, %v1344
    %v1568 = vpack.c.b16 %v1347, %v1346
    %v1569 = vpack.c.b16 %v1349, %v1348
    %v1570 = vpack.c.b16 %v1351, %v1350
    %v1571 = vpack.c.b16 %v1353, %v1352
    %v1572 = vpack.c.b16 %v1355, %v1354
    %v1573 = vpack.c.b16 %v1357, %v1356
    %v1574 = vpack.c.b16 %v1359, %v1358
    %v1575 = vpack.c.b16 %v1361, %v1360
    %v1576 = vpack.c.b16 %v1363, %v1362
    %v1577 = vpack.c.b16 %v1365, %v1364
    %v1578 = vpack.c.b16 %v1367, %v1366
    %v1579 = vpack.c.b16 %v1369, %v1368
    %v1580 = vpack.c.b16 %v1371, %v1370
    %v1581 = vpack.c.b16 %v1373, %v1372
    %v1582 = vpack.c.b16 %v1375, %v1374
    %v1583 = vpack.c.b16 %v1377, %v1376
    %v1584 = vpack.c.b16 %v1379, %v1378
    %v1585 = vpack.c.b16 %v1381, %v1380
    %v1586 = vpack.c.b16 %v1383, %v1382
    %v1587 = vpack.c.b16 %v1385, %v1384
    %v1588 = vpack.c.b16 %v1387, %v1386
    %v1589 = vpack.c.b16 %v1389, %v1388
    %v1590 = vpack.c.b16 %v1391, %v1390
    %v1591 = vpack.c.b16 %v1393, %v1392
    %v1592 = vpack.c.b16 %v1395, %v1394
    %v1593 = vpack.c.b16 %v1397, %v1396
    %vm1790 = vcmask 523264
    %v1792 = vsel %vm1790, %v589, 0
    %1794 = vmatprep.subr.bf16.mxu0 0
    %1795 = vmatpush1.bf16.msra.mxu0 %v1398
    %1796 = vmatprep.subr.bf16.mxu0 0
    %1797 = vmatpush1.bf16.msra.mxu0 %v1399
    %1798 = vmatprep.subr.bf16.mxu0 0
    %1799 = vmatpush1.bf16.msra.mxu0 %v1400
    %1800 = vmatprep.subr.bf16.mxu0 0
    %1801 = vmatpush1.bf16.msra.mxu0 %v1401
    %1802 = vmatprep.subr.bf16.mxu0 0
    %1803 = vmatpush1.bf16.msra.mxu0 %v1402
    %1804 = vmatprep.subr.bf16.mxu0 0
    %1805 = vmatpush1.bf16.msra.mxu0 %v1403
    %1806 = vmatprep.subr.bf16.mxu0 0
    %1807 = vmatpush1.bf16.msra.mxu0 %v1404
    %1808 = vmatprep.subr.bf16.mxu0 0
    %1809 = vmatpush1.bf16.msra.mxu0 %v1405
    %1810 = vmatprep.subr.bf16.mxu0 0
    %1811 = vmatpush1.bf16.msra.mxu0 %v1406
    %1812 = vmatprep.subr.bf16.mxu0 0
    %1813 = vmatpush1.bf16.msra.mxu0 %v1407
    %1814 = vmatprep.subr.bf16.mxu0 0
    %1815 = vmatpush1.bf16.msra.mxu0 %v1408
    %1816 = vmatprep.subr.bf16.mxu0 0
    %1817 = vmatpush1.bf16.msra.mxu0 %v1409
    %1818 = vmatprep.subr.bf16.mxu0 0
    %1819 = vmatpush1.bf16.msra.mxu0 %v1410
    %1820 = vmatprep.subr.bf16.mxu0 0
    %1821 = vmatpush1.bf16.msra.mxu0 %v1411
    %1822 = vmatprep.subr.bf16.mxu0 0
    %1823 = vmatpush1.bf16.msra.mxu0 %v1412
    %1824 = vmatprep.subr.bf16.mxu0 0
    %1825 = vmatpush1.bf16.msra.mxu0 %v1413
    %1826 = vmatprep.mubr.bf16.mxu0 %v466
    %1827 = vmatmul.mubr.bf16.gmra.mrb[0].mxu0 %v452
    %v1828 = vpop.f32.mrb[0].mxu0
    %v1829 = vadd.f32 %v423, %v1828
    %v1830 = vpop.f32.mrb[0].mxu0
    %v1831 = vpop.f32.mrb[0].mxu0
    %v1832 = vpop.f32.mrb[0].mxu0
    %1833 = vdwg.mxu0
    %1834 = vmatprep.subr.bf16.mxu0 0
    %1835 = vmatpush1.bf16.msra.mxu0 %v1414
    %1836 = vmatprep.subr.bf16.mxu0 0
    %1837 = vmatpush1.bf16.msra.mxu0 %v1415
    %1838 = vmatprep.subr.bf16.mxu0 0
    %1839 = vmatpush1.bf16.msra.mxu0 %v1416
    %1840 = vmatprep.subr.bf16.mxu0 0
    %1841 = vmatpush1.bf16.msra.mxu0 %v1417
    %1842 = vmatprep.subr.bf16.mxu0 0
    %1843 = vmatpush1.bf16.msra.mxu0 %v1418
    %1844 = vmatprep.subr.bf16.mxu0 0
    %1845 = vmatpush1.bf16.msra.mxu0 %v1419
    %1846 = vmatprep.subr.bf16.mxu0 0
    %1847 = vmatpush1.bf16.msra.mxu0 %v1420
    %1848 = vmatprep.subr.bf16.mxu0 0
    %1849 = vmatpush1.bf16.msra.mxu0 %v1421
    %1850 = vmatprep.subr.bf16.mxu0 0
    %1851 = vmatpush1.bf16.msra.mxu0 %v1422
    %1852 = vmatprep.subr.bf16.mxu0 0
    %1853 = vmatpush1.bf16.msra.mxu0 %v1423
    %1854 = vmatprep.subr.bf16.mxu0 0
    %1855 = vmatpush1.bf16.msra.mxu0 %v1424
    %1856 = vmatprep.subr.bf16.mxu0 0
    %1857 = vmatpush1.bf16.msra.mxu0 %v1425
    %1858 = vmatprep.subr.bf16.mxu0 0
    %1859 = vmatpush1.bf16.msra.mxu0 %v1426
    %1860 = vmatprep.subr.bf16.mxu0 0
    %1861 = vmatpush1.bf16.msra.mxu0 %v1427
    %1862 = vmatprep.subr.bf16.mxu0 0
    %1863 = vmatpush1.bf16.msra.mxu0 %v1428
    %1864 = vmatprep.subr.bf16.mxu0 0
    %1865 = vmatpush1.bf16.msra.mxu0 %v1429
    %1866 = vmatprep.mubr.bf16.mxu0 %v476
    %1867 = vmatmul.mubr.bf16.gmra.mrb[0].mxu0 %v474
    %v1868 = vpop.f32.mrb[0].mxu0
    %v1869 = vadd.f32 %v1829, %v1868
    %v1870 = vpop.f32.mrb[0].mxu0
    %v1871 = vpop.f32.mrb[0].mxu0
    %v1872 = vpop.f32.mrb[0].mxu0
    %1873 = vdwg.mxu0
    %1874 = vmatprep.subr.bf16.mxu0 0
    %1875 = vmatpush1.bf16.msra.mxu0 %v1430
    %1876 = vmatprep.subr.bf16.mxu0 0
    %1877 = vmatpush1.bf16.msra.mxu0 %v1431
    %1878 = vmatprep.subr.bf16.mxu0 0
    %1879 = vmatpush1.bf16.msra.mxu0 %v1432
    %1880 = vmatprep.subr.bf16.mxu0 0
    %1881 = vmatpush1.bf16.msra.mxu0 %v1433
    %1882 = vmatprep.subr.bf16.mxu0 0
    %1883 = vmatpush1.bf16.msra.mxu0 %v1434
    %1884 = vmatprep.subr.bf16.mxu0 0
    %1885 = vmatpush1.bf16.msra.mxu0 %v1435
    %1886 = vmatprep.subr.bf16.mxu0 0
    %1887 = vmatpush1.bf16.msra.mxu0 %v1436
    %1888 = vmatprep.subr.bf16.mxu0 0
    %1889 = vmatpush1.bf16.msra.mxu0 %v1437
    %1890 = vmatprep.subr.bf16.mxu0 0
    %1891 = vmatpush1.bf16.msra.mxu0 %v1438
    %1892 = vmatprep.subr.bf16.mxu0 0
    %1893 = vmatpush1.bf16.msra.mxu0 %v1439
    %1894 = vmatprep.subr.bf16.mxu0 0
    %1895 = vmatpush1.bf16.msra.mxu0 %v1440
    %1896 = vmatprep.subr.bf16.mxu0 0
    %1897 = vmatpush1.bf16.msra.mxu0 %v1441
    %1898 = vmatprep.subr.bf16.mxu0 0
    %1899 = vmatpush1.bf16.msra.mxu0 %v1442
    %1900 = vmatprep.subr.bf16.mxu0 0
    %1901 = vmatpush1.bf16.msra.mxu0 %v1443
    %1902 = vmatprep.subr.bf16.mxu0 0
    %1903 = vmatpush1.bf16.msra.mxu0 %v1444
    %1904 = vmatprep.subr.bf16.mxu0 0
    %1905 = vmatpush1.bf16.msra.mxu0 %v1445
    %1906 = vmatprep.mubr.bf16.mxu0 %v473
    %1907 = vmatmul.mubr.bf16.gmra.mrb[0].mxu0 %v459
    %v1908 = vpop.f32.mrb[0].mxu0
    %v1909 = vadd.f32 %v1869, %v1908
    %v1910 = vpop.f32.mrb[0].mxu0
    %v1911 = vpop.f32.mrb[0].mxu0
    %v1912 = vpop.f32.mrb[0].mxu0
    %1913 = vdwg.mxu0
    %1914 = vmatprep.subr.bf16.mxu0 0
    %1915 = vmatpush1.bf16.msra.mxu0 %v1446
    %1916 = vmatprep.subr.bf16.mxu0 0
    %1917 = vmatpush1.bf16.msra.mxu0 %v1447
    %1918 = vmatprep.subr.bf16.mxu0 0
    %1919 = vmatpush1.bf16.msra.mxu0 %v1448
    %1920 = vmatprep.subr.bf16.mxu0 0
    %1921 = vmatpush1.bf16.msra.mxu0 %v1449
    %1922 = vmatprep.subr.bf16.mxu0 0
    %1923 = vmatpush1.bf16.msra.mxu0 %v1450
    %1924 = vmatprep.subr.bf16.mxu0 0
    %1925 = vmatpush1.bf16.msra.mxu0 %v1451
    %1926 = vmatprep.subr.bf16.mxu0 0
    %1927 = vmatpush1.bf16.msra.mxu0 %v1452
    %1928 = vmatprep.subr.bf16.mxu0 0
    %1929 = vmatpush1.bf16.msra.mxu0 %v1453
    %1930 = vmatprep.subr.bf16.mxu0 0
    %1931 = vmatpush1.bf16.msra.mxu0 %v1454
    %1932 = vmatprep.subr.bf16.mxu0 0
    %1933 = vmatpush1.bf16.msra.mxu0 %v1455
    %1934 = vmatprep.subr.bf16.mxu0 0
    %1935 = vmatpush1.bf16.msra.mxu0 %v1456
    %1936 = vmatprep.subr.bf16.mxu0 0
    %1937 = vmatpush1.bf16.msra.mxu0 %v1457
    %1938 = vmatprep.subr.bf16.mxu0 0
    %1939 = vmatpush1.bf16.msra.mxu0 %v1458
    %1940 = vmatprep.subr.bf16.mxu0 0
    %1941 = vmatpush1.bf16.msra.mxu0 %v1459
    %1942 = vmatprep.subr.bf16.mxu0 0
    %1943 = vmatpush1.bf16.msra.mxu0 %v1460
    %1944 = vmatprep.subr.bf16.mxu0 0
    %1945 = vmatpush1.bf16.msra.mxu0 %v1461
    %1946 = vmatprep.mubr.bf16.mxu0 %v477
    %1947 = vmatmul.mubr.bf16.gmra.mrb[0].mxu0 %v475
    %v1948 = vpop.f32.mrb[0].mxu0
    %v1949 = vadd.f32 %v1909, %v1948
    %v1950 = vpop.f32.mrb[0].mxu0
    %v1951 = vpop.f32.mrb[0].mxu0
    %v1952 = vpop.f32.mrb[0].mxu0
    %1953 = vdwg.mxu0
    %1954 = vmatprep.subr.bf16.mxu0 0
    %1955 = vmatpush1.bf16.msra.mxu0 %v1462
    %1956 = vmatprep.subr.bf16.mxu0 0
    %1957 = vmatpush1.bf16.msra.mxu0 %v1463
    %1958 = vmatprep.subr.bf16.mxu0 0
    %1959 = vmatpush1.bf16.msra.mxu0 %v1464
    %1960 = vmatprep.subr.bf16.mxu0 0
    %1961 = vmatpush1.bf16.msra.mxu0 %v1465
    %1962 = vmatprep.subr.bf16.mxu0 0
    %1963 = vmatpush1.bf16.msra.mxu0 %v1466
    %1964 = vmatprep.subr.bf16.mxu0 0
    %1965 = vmatpush1.bf16.msra.mxu0 %v1467
    %1966 = vmatprep.subr.bf16.mxu0 0
    %1967 = vmatpush1.bf16.msra.mxu0 %v1468
    %1968 = vmatprep.subr.bf16.mxu0 0
    %1969 = vmatpush1.bf16.msra.mxu0 %v1469
    %1970 = vmatprep.subr.bf16.mxu0 0
    %1971 = vmatpush1.bf16.msra.mxu0 %v1470
    %1972 = vmatprep.subr.bf16.mxu0 0
    %1973 = vmatpush1.bf16.msra.mxu0 %v1471
    %1974 = vmatprep.subr.bf16.mxu0 0
    %1975 = vmatpush1.bf16.msra.mxu0 %v1472
    %1976 = vmatprep.subr.bf16.mxu0 0
    %1977 = vmatpush1.bf16.msra.mxu0 %v1473
    %1978 = vmatprep.subr.bf16.mxu0 0
    %1979 = vmatpush1.bf16.msra.mxu0 %v1474
    %1980 = vmatprep.subr.bf16.mxu0 0
    %1981 = vmatpush1.bf16.msra.mxu0 %v1475
    %1982 = vmatprep.subr.bf16.mxu0 0
    %1983 = vmatpush1.bf16.msra.mxu0 %v1476
    %1984 = vmatprep.subr.bf16.mxu0 0
    %1985 = vmatpush1.bf16.msra.mxu0 %v1477
    %1986 = vmatprep.mubr.bf16.mxu0 %v515
    %1987 = vmatmul.mubr.bf16.gmra.mrb[0].mxu0 %v501
    %v1988 = vpop.f32.mrb[0].mxu0
    %v1989 = vadd.f32 %v1949, %v1988
    %v1990 = vpop.f32.mrb[0].mxu0
    %v1991 = vpop.f32.mrb[0].mxu0
    %v1992 = vpop.f32.mrb[0].mxu0
    %1993 = vdwg.mxu0
    %1994 = vmatprep.subr.bf16.mxu0 0
    %1995 = vmatpush1.bf16.msra.mxu0 %v1478
    %1996 = vmatprep.subr.bf16.mxu0 0
    %1997 = vmatpush1.bf16.msra.mxu0 %v1479
    %1998 = vmatprep.subr.bf16.mxu0 0
    %1999 = vmatpush1.bf16.msra.mxu0 %v1480
    %2000 = vmatprep.subr.bf16.mxu0 0
    %2001 = vmatpush1.bf16.msra.mxu0 %v1481
    %2002 = vmatprep.subr.bf16.mxu0 0
    %2003 = vmatpush1.bf16.msra.mxu0 %v1482
    %2004 = vmatprep.subr.bf16.mxu0 0
    %2005 = vmatpush1.bf16.msra.mxu0 %v1483
    %2006 = vmatprep.subr.bf16.mxu0 0
    %2007 = vmatpush1.bf16.msra.mxu0 %v1484
    %2008 = vmatprep.subr.bf16.mxu0 0
    %2009 = vmatpush1.bf16.msra.mxu0 %v1485
    %2010 = vmatprep.subr.bf16.mxu0 0
    %2011 = vmatpush1.bf16.msra.mxu0 %v1486
    %2012 = vmatprep.subr.bf16.mxu0 0
    %2013 = vmatpush1.bf16.msra.mxu0 %v1487
    %2014 = vmatprep.subr.bf16.mxu0 0
    %2015 = vmatpush1.bf16.msra.mxu0 %v1488
    %2016 = vmatprep.subr.bf16.mxu0 0
    %2017 = vmatpush1.bf16.msra.mxu0 %v1489
    %2018 = vmatprep.subr.bf16.mxu0 0
    %2019 = vmatpush1.bf16.msra.mxu0 %v1490
    %2020 = vmatprep.subr.bf16.mxu0 0
    %2021 = vmatpush1.bf16.msra.mxu0 %v1491
    %2022 = vmatprep.subr.bf16.mxu0 0
    %2023 = vmatpush1.bf16.msra.mxu0 %v1492
    %2024 = vmatprep.subr.bf16.mxu0 0
    %2025 = vmatpush1.bf16.msra.mxu0 %v1493
    %2026 = vmatprep.mubr.bf16.mxu0 %v525
    %2027 = vmatmul.mubr.bf16.gmra.mrb[0].mxu0 %v523
    %v2028 = vpop.f32.mrb[0].mxu0
    %v2029 = vadd.f32 %v1989, %v2028
    %v2030 = vpop.f32.mrb[0].mxu0
    %v2031 = vpop.f32.mrb[0].mxu0
    %v2032 = vpop.f32.mrb[0].mxu0
    %2033 = vdwg.mxu0
    %2034 = vmatprep.subr.bf16.mxu0 0
    %2035 = vmatpush1.bf16.msra.mxu0 %v1494
    %2036 = vmatprep.subr.bf16.mxu0 0
    %2037 = vmatpush1.bf16.msra.mxu0 %v1495
    %2038 = vmatprep.subr.bf16.mxu0 0
    %2039 = vmatpush1.bf16.msra.mxu0 %v1496
    %2040 = vmatprep.subr.bf16.mxu0 0
    %2041 = vmatpush1.bf16.msra.mxu0 %v1497
    %2042 = vmatprep.subr.bf16.mxu0 0
    %2043 = vmatpush1.bf16.msra.mxu0 %v1498
    %2044 = vmatprep.subr.bf16.mxu0 0
    %2045 = vmatpush1.bf16.msra.mxu0 %v1499
    %2046 = vmatprep.subr.bf16.mxu0 0
    %2047 = vmatpush1.bf16.msra.mxu0 %v1500
    %2048 = vmatprep.subr.bf16.mxu0 0
    %2049 = vmatpush1.bf16.msra.mxu0 %v1501
    %2050 = vmatprep.subr.bf16.mxu0 0
    %2051 = vmatpush1.bf16.msra.mxu0 %v1502
    %2052 = vmatprep.subr.bf16.mxu0 0
    %2053 = vmatpush1.bf16.msra.mxu0 %v1503
    %2054 = vmatprep.subr.bf16.mxu0 0
    %2055 = vmatpush1.bf16.msra.mxu0 %v1504
    %2056 = vmatprep.subr.bf16.mxu0 0
    %2057 = vmatpush1.bf16.msra.mxu0 %v1505
    %2058 = vmatprep.subr.bf16.mxu0 0
    %2059 = vmatpush1.bf16.msra.mxu0 %v1506
    %2060 = vmatprep.subr.bf16.mxu0 0
    %2061 = vmatpush1.bf16.msra.mxu0 %v1507
    %2062 = vmatprep.subr.bf16.mxu0 0
    %2063 = vmatpush1.bf16.msra.mxu0 %v1508
    %2064 = vmatprep.subr.bf16.mxu0 0
    %2065 = vmatpush1.bf16.msra.mxu0 %v1509
    %2066 = vmatprep.mubr.bf16.mxu0 %v522
    %2067 = vmatmul.mubr.bf16.gmra.mrb[0].mxu0 %v508
    %v2068 = vpop.f32.mrb[0].mxu0
    %v2069 = vadd.f32 %v2029, %v2068
    %v2070 = vpop.f32.mrb[0].mxu0
    %v2071 = vpop.f32.mrb[0].mxu0
    %v2072 = vpop.f32.mrb[0].mxu0
    %2073 = vdwg.mxu0
    %2074 = vmatprep.subr.bf16.mxu0 0
    %2075 = vmatpush1.bf16.msra.mxu0 %v1510
    %2076 = vmatprep.subr.bf16.mxu0 0
    %2077 = vmatpush1.bf16.msra.mxu0 %v1511
    %2078 = vmatprep.subr.bf16.mxu0 0
    %2079 = vmatpush1.bf16.msra.mxu0 %v1512
    %2080 = vmatprep.subr.bf16.mxu0 0
    %2081 = vmatpush1.bf16.msra.mxu0 %v1513
    %2082 = vmatprep.subr.bf16.mxu0 0
    %2083 = vmatpush1.bf16.msra.mxu0 %v1514
    %2084 = vmatprep.subr.bf16.mxu0 0
    %2085 = vmatpush1.bf16.msra.mxu0 %v1515
    %2086 = vmatprep.subr.bf16.mxu0 0
    %2087 = vmatpush1.bf16.msra.mxu0 %v1516
    %2088 = vmatprep.subr.bf16.mxu0 0
    %2089 = vmatpush1.bf16.msra.mxu0 %v1517
    %2090 = vmatprep.subr.bf16.mxu0 0
    %2091 = vmatpush1.bf16.msra.mxu0 %v1518
    %2092 = vmatprep.subr.bf16.mxu0 0
    %2093 = vmatpush1.bf16.msra.mxu0 %v1519
    %2094 = vmatprep.subr.bf16.mxu0 0
    %2095 = vmatpush1.bf16.msra.mxu0 %v1520
    %2096 = vmatprep.subr.bf16.mxu0 0
    %2097 = vmatpush1.bf16.msra.mxu0 %v1521
    %2098 = vmatprep.subr.bf16.mxu0 0
    %2099 = vmatpush1.bf16.msra.mxu0 %v1522
    %2100 = vmatprep.subr.bf16.mxu0 0
    %2101 = vmatpush1.bf16.msra.mxu0 %v1523
    %2102 = vmatprep.subr.bf16.mxu0 0
    %2103 = vmatpush1.bf16.msra.mxu0 %v1524
    %2104 = vmatprep.subr.bf16.mxu0 0
    %2105 = vmatpush1.bf16.msra.mxu0 %v1525
    %2106 = vmatprep.mubr.bf16.mxu0 %v526
    %2107 = vmatmul.mubr.bf16.gmra.mrb[0].mxu0 %v524
    %v2108 = vpop.f32.mrb[0].mxu0
    %v2109 = vadd.f32 %v2069, %v2108
    %v2110 = vpop.f32.mrb[0].mxu0
    %v2111 = vpop.f32.mrb[0].mxu0
    %v2112 = vpop.f32.mrb[0].mxu0
    %2113 = vdwg.mxu0
    %2114 = vmatprep.subr.bf16.mxu0 0
    %2115 = vmatpush1.bf16.msra.mxu0 %v1526
    %2116 = vmatprep.subr.bf16.mxu0 0
    %2117 = vmatpush1.bf16.msra.mxu0 %v1527
    %2118 = vmatprep.subr.bf16.mxu0 0
    %2119 = vmatpush1.bf16.msra.mxu0 %v1528
    %2120 = vmatprep.subr.bf16.mxu0 0
    %2121 = vmatpush1.bf16.msra.mxu0 %v1529
    %2122 = vmatprep.subr.bf16.mxu0 0
    %2123 = vmatpush1.bf16.msra.mxu0 %v1530
    %2124 = vmatprep.subr.bf16.mxu0 0
    %2125 = vmatpush1.bf16.msra.mxu0 %v1531
    %2126 = vmatprep.subr.bf16.mxu0 0
    %2127 = vmatpush1.bf16.msra.mxu0 %v1532
    %2128 = vmatprep.subr.bf16.mxu0 0
    %2129 = vmatpush1.bf16.msra.mxu0 %v1533
    %2130 = vmatprep.subr.bf16.mxu0 0
    %2131 = vmatpush1.bf16.msra.mxu0 %v1534
    %2132 = vmatprep.subr.bf16.mxu0 0
    %2133 = vmatpush1.bf16.msra.mxu0 %v1535
    %2134 = vmatprep.subr.bf16.mxu0 0
    %2135 = vmatpush1.bf16.msra.mxu0 %v1536
    %2136 = vmatprep.subr.bf16.mxu0 0
    %2137 = vmatpush1.bf16.msra.mxu0 %v1537
    %2138 = vmatprep.subr.bf16.mxu0 0
    %2139 = vmatpush1.bf16.msra.mxu0 %v1538
    %2140 = vmatprep.subr.bf16.mxu0 0
    %2141 = vmatpush1.bf16.msra.mxu0 %v1539
    %2142 = vmatprep.subr.bf16.mxu0 0
    %2143 = vmatpush1.bf16.msra.mxu0 %v1540
    %2144 = vmatprep.subr.bf16.mxu0 0
    %2145 = vmatpush1.bf16.msra.mxu0 %v1541
    %2146 = vmatprep.mubr.bf16.mxu0 %v564
    %2147 = vmatmul.mubr.bf16.gmra.mrb[0].mxu0 %v550
    %v2148 = vpop.f32.mrb[0].mxu0
    %v2149 = vadd.f32 %v2109, %v2148
    %v2150 = vpop.f32.mrb[0].mxu0
    %v2151 = vpop.f32.mrb[0].mxu0
    %v2152 = vpop.f32.mrb[0].mxu0
    %2153 = vdwg.mxu0
    %2154 = vmatprep.subr.bf16.mxu0 0
    %2155 = vmatpush1.bf16.msra.mxu0 %v1542
    %2156 = vmatprep.subr.bf16.mxu0 0
    %2157 = vmatpush1.bf16.msra.mxu0 %v1543
    %2158 = vmatprep.subr.bf16.mxu0 0
    %2159 = vmatpush1.bf16.msra.mxu0 %v1544
    %2160 = vmatprep.subr.bf16.mxu0 0
    %2161 = vmatpush1.bf16.msra.mxu0 %v1545
    %2162 = vmatprep.subr.bf16.mxu0 0
    %2163 = vmatpush1.bf16.msra.mxu0 %v1546
    %2164 = vmatprep.subr.bf16.mxu0 0
    %2165 = vmatpush1.bf16.msra.mxu0 %v1547
    %2166 = vmatprep.subr.bf16.mxu0 0
    %2167 = vmatpush1.bf16.msra.mxu0 %v1548
    %2168 = vmatprep.subr.bf16.mxu0 0
    %2169 = vmatpush1.bf16.msra.mxu0 %v1549
    %2170 = vmatprep.subr.bf16.mxu0 0
    %2171 = vmatpush1.bf16.msra.mxu0 %v1550
    %2172 = vmatprep.subr.bf16.mxu0 0
    %2173 = vmatpush1.bf16.msra.mxu0 %v1551
    %2174 = vmatprep.subr.bf16.mxu0 0
    %2175 = vmatpush1.bf16.msra.mxu0 %v1552
    %2176 = vmatprep.subr.bf16.mxu0 0
    %2177 = vmatpush1.bf16.msra.mxu0 %v1553
    %2178 = vmatprep.subr.bf16.mxu0 0
    %2179 = vmatpush1.bf16.msra.mxu0 %v1554
    %2180 = vmatprep.subr.bf16.mxu0 0
    %2181 = vmatpush1.bf16.msra.mxu0 %v1555
    %2182 = vmatprep.subr.bf16.mxu0 0
    %2183 = vmatpush1.bf16.msra.mxu0 %v1556
    %2184 = vmatprep.subr.bf16.mxu0 0
    %2185 = vmatpush1.bf16.msra.mxu0 %v1557
    %2186 = vmatprep.mubr.bf16.mxu0 %v574
    %2187 = vmatmul.mubr.bf16.gmra.mrb[0].mxu0 %v572
    %v2188 = vpop.f32.mrb[0].mxu0
    %v2189 = vadd.f32 %v2149, %v2188
    %v2190 = vpop.f32.mrb[0].mxu0
    %v2191 = vpop.f32.mrb[0].mxu0
    %v2192 = vpop.f32.mrb[0].mxu0
    %2193 = vdwg.mxu0
    %2194 = vmatprep.subr.bf16.mxu0 0
    %2195 = vmatpush1.bf16.msra.mxu0 %v1558
    %2196 = vmatprep.subr.bf16.mxu0 0
    %2197 = vmatpush1.bf16.msra.mxu0 %v1559
    %2198 = vmatprep.subr.bf16.mxu0 0
    %2199 = vmatpush1.bf16.msra.mxu0 %v1560
    %2200 = vmatprep.subr.bf16.mxu0 0
    %2201 = vmatpush1.bf16.msra.mxu0 %v1561
    %2202 = vmatprep.subr.bf16.mxu0 0
    %2203 = vmatpush1.bf16.msra.mxu0 %v1562
    %2204 = vmatprep.subr.bf16.mxu0 0
    %2205 = vmatpush1.bf16.msra.mxu0 %v1563
    %2206 = vmatprep.subr.bf16.mxu0 0
    %2207 = vmatpush1.bf16.msra.mxu0 %v1564
    %2208 = vmatprep.subr.bf16.mxu0 0
    %2209 = vmatpush1.bf16.msra.mxu0 %v1565
    %2210 = vmatprep.subr.bf16.mxu0 0
    %2211 = vmatpush1.bf16.msra.mxu0 %v1566
    %2212 = vmatprep.subr.bf16.mxu0 0
    %2213 = vmatpush1.bf16.msra.mxu0 %v1567
    %2214 = vmatprep.subr.bf16.mxu0 0
    %2215 = vmatpush1.bf16.msra.mxu0 %v1568
    %2216 = vmatprep.subr.bf16.mxu0 0
    %2217 = vmatpush1.bf16.msra.mxu0 %v1569
    %2218 = vmatprep.subr.bf16.mxu0 0
    %2219 = vmatpush1.bf16.msra.mxu0 %v1570
    %2220 = vmatprep.subr.bf16.mxu0 0
    %2221 = vmatpush1.bf16.msra.mxu0 %v1571
    %2222 = vmatprep.subr.bf16.mxu0 0
    %2223 = vmatpush1.bf16.msra.mxu0 %v1572
    %2224 = vmatprep.subr.bf16.mxu0 0
    %2225 = vmatpush1.bf16.msra.mxu0 %v1573
    %2226 = vmatprep.mubr.bf16.mxu0 %v571
    %2227 = vmatmul.mubr.bf16.gmra.mrb[0].mxu0 %v557
    %v2228 = vpop.f32.mrb[0].mxu0
    %v2229 = vadd.f32 %v2189, %v2228
    %v2230 = vpop.f32.mrb[0].mxu0
    %v2231 = vpop.f32.mrb[0].mxu0
    %v2232 = vpop.f32.mrb[0].mxu0
    %2233 = vdwg.mxu0
    %2234 = vmatprep.subr.bf16.mxu0 0
    %2235 = vmatpush1.bf16.msra.mxu0 %v1574
    %2236 = vmatprep.subr.bf16.mxu0 0
    %2237 = vmatpush1.bf16.msra.mxu0 %v1575
    %2238 = vmatprep.subr.bf16.mxu0 0
    %2239 = vmatpush1.bf16.msra.mxu0 %v1576
    %2240 = vmatprep.subr.bf16.mxu0 0
    %2241 = vmatpush1.bf16.msra.mxu0 %v1577
    %2242 = vmatprep.subr.bf16.mxu0 0
    %2243 = vmatpush1.bf16.msra.mxu0 %v1578
    %2244 = vmatprep.subr.bf16.mxu0 0
    %2245 = vmatpush1.bf16.msra.mxu0 %v1579
    %2246 = vmatprep.subr.bf16.mxu0 0
    %2247 = vmatpush1.bf16.msra.mxu0 %v1580
    %2248 = vmatprep.subr.bf16.mxu0 0
    %2249 = vmatpush1.bf16.msra.mxu0 %v1581
    %2250 = vmatprep.subr.bf16.mxu0 0
    %2251 = vmatpush1.bf16.msra.mxu0 %v1582
    %2252 = vmatprep.subr.bf16.mxu0 0
    %2253 = vmatpush1.bf16.msra.mxu0 %v1583
    %2254 = vmatprep.subr.bf16.mxu0 0
    %2255 = vmatpush1.bf16.msra.mxu0 %v1584
    %2256 = vmatprep.subr.bf16.mxu0 0
    %2257 = vmatpush1.bf16.msra.mxu0 %v1585
    %2258 = vmatprep.subr.bf16.mxu0 0
    %2259 = vmatpush1.bf16.msra.mxu0 %v1586
    %2260 = vmatprep.subr.bf16.mxu0 0
    %2261 = vmatpush1.bf16.msra.mxu0 %v1587
    %2262 = vmatprep.subr.bf16.mxu0 0
    %2263 = vmatpush1.bf16.msra.mxu0 %v1588
    %2264 = vmatprep.subr.bf16.mxu0 0
    %2265 = vmatpush1.bf16.msra.mxu0 %v1589
    %2266 = vmatprep.mubr.bf16.mxu0 %v575
    %2267 = vmatmul.mubr.bf16.gmra.mrb[0].mxu0 %v573
    %v2268 = vpop.f32.mrb[0].mxu0
    %v2269 = vadd.f32 %v2229, %v2268
    %v2270 = vpop.f32.mrb[0].mxu0
    %v2271 = vpop.f32.mrb[0].mxu0
    %v2272 = vpop.f32.mrb[0].mxu0
    %2273 = vdwg.mxu0
    %2274 = vmatprep.subr.bf16.mxu0 0
    %2275 = vmatpush1.bf16.msra.mxu0 %v1590
    %2276 = vmatprep.subr.bf16.mxu0 0
    %2277 = vmatpush1.bf16.msra.mxu0 %v1591
    %2278 = vmatprep.subr.bf16.mxu0 0
    %2279 = vmatpush1.bf16.msra.mxu0 %v1592
    %2280 = vmatprep.subr.bf16.mxu0 0
    %2281 = vmatpush1.bf16.msra.mxu0 %v1593
    %2282 = vmatprep.subr.bf16.mxu0 0
    %2283 = vmatpush1.bf16.msra.mxu0 0
    %2284 = vmatprep.subr.bf16.mxu0 0
    %2285 = vmatpush1.bf16.msra.mxu0 0
    %2286 = vmatprep.subr.bf16.mxu0 0
    %2287 = vmatpush1.bf16.msra.mxu0 0
    %2288 = vmatprep.subr.bf16.mxu0 0
    %2289 = vmatpush1.bf16.msra.mxu0 0
    %2290 = vmatprep.subr.bf16.mxu0 0
    %2291 = vmatpush1.bf16.msra.mxu0 0
    %2292 = vmatprep.subr.bf16.mxu0 0
    %2293 = vmatpush1.bf16.msra.mxu0 0
    %2294 = vmatprep.subr.bf16.mxu0 0
    %2295 = vmatpush1.bf16.msra.mxu0 0
    %2296 = vmatprep.subr.bf16.mxu0 0
    %2297 = vmatpush1.bf16.msra.mxu0 0
    %2298 = vmatprep.subr.bf16.mxu0 0
    %2299 = vmatpush1.bf16.msra.mxu0 0
    %2300 = vmatprep.subr.bf16.mxu0 0
    %2301 = vmatpush1.bf16.msra.mxu0 0
    %2302 = vmatprep.subr.bf16.mxu0 0
    %2303 = vmatpush1.bf16.msra.mxu0 0
    %2304 = vmatprep.subr.bf16.mxu0 0
    %2305 = vmatpush1.bf16.msra.mxu0 0
    %2306 = vmatprep.mubr.bf16.mxu0 0
    %2307 = vmatmul.mubr.bf16.gmra.mrb[0].mxu0 %v1792
    %v2308 = vpop.f32.mrb[0].mxu0
    %v2309 = vadd.f32 %v2269, %v2308
    %v2310 = vpop.f32.mrb[0].mxu0
    %v2311 = vpop.f32.mrb[0].mxu0
    %v2312 = vpop.f32.mrb[0].mxu0
    %2313 = vdwg.mxu0
    %v2314 = vpack.c.bf16 %v2309, %v2309
    %v2315 = vld [vmem:[%s3] sm:$0xf]
    %v2316 = vld [vmem:[%s3 + $0x4] sm:$0xf]
    %v2317 = vld [vmem:[%s3 + $0x8] sm:$0xf]
    %v2318 = vld [vmem:[%s3 + $0xc] sm:$0xf]
    %v2319 = vld [vmem:[%s3 + $0x10] sm:$0xf]
    %v2320 = vld [vmem:[%s3 + $0x14] sm:$0xf]
    %v2321 = vld [vmem:[%s3 + $0x18] sm:$0xf]
    %v2322 = vld [vmem:[%s3 + $0x1c] sm:$0xf]
    %v2323 = vld [vmem:[%s3 + $0x20] sm:$0xf]
    %v2324 = vld [vmem:[%s3 + $0x24] sm:$0xf]
    %v2325 = vld [vmem:[%s3 + $0x28] sm:$0xf]
    %v2326 = vld [vmem:[%s3 + $0x2c] sm:$0xf]
    %v2327 = vld [vmem:[%s3 + $0x30] sm:$0xf]
    %v2328 = vld [vmem:[%s3 + $0x34] sm:$0xf]
    %v2329 = vld [vmem:[%s3 + $0x38] sm:$0xf]
    %v2330 = vld [vmem:[%s3 + $0x3c] sm:$0xf]
    %v2331 = vld [vmem:[%s4] sm:$0x1]
    %v2333 = vlaneseq
    %v2334 = vshrl.u32 %v2333, 7
    %v2335 = vsub.s32 0, %v2334
    %v2336 = vrot.slane %v2331, %v2335
    %v2354 = vunpack.c.l.b16 %v2315
    %v2355 = vunpack.c.l.b16 %v2316
    %v2356 = vunpack.c.l.b16 %v2317
    %v2357 = vunpack.c.l.b16 %v2318
    %v2358 = vunpack.c.l.b16 %v2319
    %v2359 = vunpack.c.l.b16 %v2320
    %v2360 = vunpack.c.l.b16 %v2321
    %v2361 = vunpack.c.l.b16 %v2322
    %v2362 = vunpack.c.l.b16 %v2323
    %v2363 = vunpack.c.l.b16 %v2324
    %v2364 = vunpack.c.l.b16 %v2325
    %v2365 = vunpack.c.l.b16 %v2326
    %v2366 = vunpack.c.l.b16 %v2327
    %v2367 = vunpack.c.l.b16 %v2328
    %v2368 = vunpack.c.l.b16 %v2329
    %v2369 = vunpack.c.l.b16 %v2330
    %v2370 = vpack.c.b16 %v2355, %v2354
    %v2371 = vpack.c.b16 %v2357, %v2356
    %v2372 = vpack.c.b16 %v2359, %v2358
    %v2373 = vpack.c.b16 %v2361, %v2360
    %v2374 = vpack.c.b16 %v2363, %v2362
    %v2375 = vpack.c.b16 %v2365, %v2364
    %v2376 = vpack.c.b16 %v2367, %v2366
    %v2377 = vpack.c.b16 %v2369, %v2368
    %2386 = vmatprep.subr.bf16.mxu0 0
    %2387 = vmatpush1.bf16.msra.mxu0 %v2370
    %2388 = vmatprep.subr.bf16.mxu0 0
    %2389 = vmatpush1.bf16.msra.mxu0 %v2371
    %2390 = vmatprep.subr.bf16.mxu0 0
    %2391 = vmatpush1.bf16.msra.mxu0 %v2372
    %2392 = vmatprep.subr.bf16.mxu0 0
    %2393 = vmatpush1.bf16.msra.mxu0 %v2373
    %2394 = vmatprep.subr.bf16.mxu0 0
    %2395 = vmatpush1.bf16.msra.mxu0 %v2374
    %2396 = vmatprep.subr.bf16.mxu0 0
    %2397 = vmatpush1.bf16.msra.mxu0 %v2375
    %2398 = vmatprep.subr.bf16.mxu0 0
    %2399 = vmatpush1.bf16.msra.mxu0 %v2376
    %2400 = vmatprep.subr.bf16.mxu0 0
    %2401 = vmatpush1.bf16.msra.mxu0 %v2377
    %2402 = vmatprep.subr.bf16.mxu0 0
    %2403 = vmatpush1.bf16.msra.mxu0 0
    %2404 = vmatprep.subr.bf16.mxu0 0
    %2405 = vmatpush1.bf16.msra.mxu0 0
    %2406 = vmatprep.subr.bf16.mxu0 0
    %2407 = vmatpush1.bf16.msra.mxu0 0
    %2408 = vmatprep.subr.bf16.mxu0 0
    %2409 = vmatpush1.bf16.msra.mxu0 0
    %2410 = vmatprep.subr.bf16.mxu0 0
    %2411 = vmatpush1.bf16.msra.mxu0 0
    %2412 = vmatprep.subr.bf16.mxu0 0
    %2413 = vmatpush1.bf16.msra.mxu0 0
    %2414 = vmatprep.subr.bf16.mxu0 0
    %2415 = vmatpush1.bf16.msra.mxu0 0
    %2416 = vmatprep.subr.bf16.mxu0 0
    %2417 = vmatpush1.bf16.msra.mxu0 0
    %2418 = vmatprep.mubr.bf16.mxu0 0
    %2419 = vmatmul.mubr.bf16.gmra.mrb[0].mxu0 %v2314
    %v2420 = vpop.f32.mrb[0].mxu0
    %v2421 = vadd.f32 %v2336, %v2420
    %v2422 = vpop.f32.mrb[0].mxu0
    %v2423 = vpop.f32.mrb[0].mxu0
    %v2424 = vpop.f32.mrb[0].mxu0
    %2425 = vdwg.mxu0
    %2426 = vst [vmem:[#allocation2] sm:$0x3] %v2421
    // Predicated region
    $region22: #{cnn_forward.5} parent=1 // pred_check
      _
    $region23: #{cnn_forward.5} parent=1 // pred_check_branch
      %2428 = sbr.rel (0) target = $region25
    $region24: #{cnn_forward.5} parent=1 // pred_region
      %s2430 = ssub.s32 32, 32
      %2431 = vsyncadd [#allocation3], %s2430
      %s2433 = sshll.u32 [#allocation2], 4
      %s2434 = int_to_ptr.vmem [resolvable:$true] %s2433
      %2436 = dma.vmem_to_hbm [thread:$0]  %s2434, 32, %s5, [#allocation3]
    $region25: #{cnn_forward.5} parent=1 // pred_fallthru
      _
    // Predicated region
    $region26: #{cnn_forward.5} parent=1 // pred_check
      _
    $region27: #{cnn_forward.5} parent=1 // pred_check_branch
      %2438 = sbr.rel (0) target = $region29
    $region28: #{cnn_forward.5} parent=1 // pred_region
      %2439 = dma.done [#allocation3], 32
    $region29: #{cnn_forward.5} parent=1 // pred_fallthru
      _
    %2440 = vsyncpa [#allocation3], 1

</llo_original>
